<compile_context>
chip_gen: v7x
topology: tpu7x:2x2x1
jax: 0.10.0
libtpu: 0.0.40
codegen_flags: <defaults>
</compile_context>

<pallas_src>
import functools

import jax
import jax.numpy as jnp
import numpy as np
from jax.experimental import pallas as pl
from jax.experimental.pallas import tpu as pltpu


# ----------------------------------------------------------------------------
# host-side parameter preparation
# ----------------------------------------------------------------------------
def _update_size(d, k, s):
    # matches Model._update_size (padding=0, dilation=1)
    return int(np.floor((d - (k - 1) - 1) / s + 1))


def init_torch_params(key, config, img_dim, in_channels=1, output_dim=10):
    """'torch-semantic' parameters: HWIO conv weights, fc weights [in, out]
    with fc1 rows in torch's NCHW flatten order (c, h, w)."""
    c1, k1, s1 = config['channels_1'], config['kernel_1'], config['stride_1']
    c2, k2, s2 = config['channels_2'], config['kernel_2'], config['stride_2']
    hidden = config['hidden']
    d1 = _update_size(img_dim, k1, s1)
    d2 = _update_size(d1, k2, s2)
    dp = _update_size(d2, 2, 1)          # maxpool kernel=2, stride=1
    flat = dp * dp * c2

    keys = jax.random.split(key, 8)
    return {
        'w1': 0.1 * jax.random.normal(keys[0], (k1, k1, in_channels, c1), jnp.float32),
        'b1': 0.1 * jax.random.normal(keys[1], (c1,), jnp.float32),
        'w2': 0.1 * jax.random.normal(keys[2], (k2, k2, c1, c2), jnp.float32),
        'b2': 0.1 * jax.random.normal(keys[3], (c2,), jnp.float32),
        'fw1': 0.05 * jax.random.normal(keys[4], (flat, hidden), jnp.float32),
        'fb1': 0.05 * jax.random.normal(keys[5], (hidden,), jnp.float32),
        'fw2': 0.05 * jax.random.normal(keys[6], (hidden, output_dim), jnp.float32),
        'fb2': 0.05 * jax.random.normal(keys[7], (output_dim,), jnp.float32),
    }


def _band_conv_weight(w_hwio, w_in, stride):
    """Banded (block-Toeplitz) matrices, one per kernel row.

    band[dy, wi*Cin + ci, wo*Cout + o] = w[dy, wi - wo*stride, ci, o]
    so that one matmul per kernel row performs the conv over the merged
    (width*channel) lane axis; horizontal taps + stride live in the weight.
    """
    kh, kw, cin, cout = (int(v) for v in w_hwio.shape)
    w_out = (w_in - kw) // stride + 1
    w = np.asarray(w_hwio, np.float32)
    band = np.zeros((kh, w_in * cin, w_out * cout), np.float32)
    for dy in range(kh):
        for wo in range(w_out):
            for dx in range(kw):
                wi = wo * stride + dx
                band[dy, wi * cin:(wi + 1) * cin,
                     wo * cout:(wo + 1) * cout] = w[dy, dx]
    return band


def prepare_kernel_params(params, config, img_dim, in_channels=1, output_dim=10):
    c1, k1, s1 = config['channels_1'], config['kernel_1'], config['stride_1']
    c2, k2, s2 = config['channels_2'], config['kernel_2'], config['stride_2']
    hidden = config['hidden']
    H = W = img_dim
    H1, W1 = _update_size(H, k1, s1), _update_size(W, k1, s1)
    H2, W2 = _update_size(H1, k2, s2), _update_size(W1, k2, s2)
    Hp, Wp = _update_size(H2, 2, 1), _update_size(W2, 2, 1)

    w1band = _band_conv_weight(params['w1'], W, s1)      # [k1, W*Cin,  W1*c1]
    w2band = _band_conv_weight(params['w2'], W1, s2)     # [k2, W1*c1, W2*c2]
    b1m = np.tile(np.asarray(params['b1'], np.float32), W1).reshape(1, 1, W1 * c1)
    b2m = np.tile(np.asarray(params['b2'], np.float32), W2).reshape(1, 1, W2 * c2)

    # fc1 weight: torch flatten order (c, h, w)  ->  kernel order [h, (w, c), o]
    fw1 = np.asarray(params['fw1'], np.float32).reshape(c2, Hp, Wp, hidden)
    fw1p = np.transpose(fw1, (1, 2, 0, 3)).reshape(Hp, Wp * c2, hidden)

    kparams = {
        'w1band': jnp.asarray(w1band), 'b1m': jnp.asarray(b1m),
        'w2band': jnp.asarray(w2band), 'b2m': jnp.asarray(b2m),
        'fw1p': jnp.asarray(fw1p),
        'fb1': jnp.asarray(params['fb1'], jnp.float32).reshape(1, hidden),
        'fw2': jnp.asarray(params['fw2'], jnp.float32),
        'fb2': jnp.asarray(params['fb2'], jnp.float32).reshape(1, output_dim),
    }
    dims = dict(H=H, W=W, Cin=in_channels, k1=k1, s1=s1, k2=k2, s2=s2,
                H1=H1, W1=W1, C1=c1, H2=H2, W2=W2, C2=c2, Hp=Hp, Wp=Wp,
                hidden=hidden, out=output_dim)
    return kparams, dims


# ----------------------------------------------------------------------------
# fused kernel (tb batch elements per grid step)
# ----------------------------------------------------------------------------
def _fused_forward_kernel(x_ref, w1_ref, b1_ref, w2_ref, b2_ref,
                          fw1_ref, fb1_ref, fw2_ref, fb2_ref, o_ref,
                          *, k1, s1, k2, s2, H1, H2, Hp, Wp, C2):
    f32 = jnp.float32
    x = x_ref[...]                                   # [tb, H, W*Cin]

    # ---- conv1 + bias + relu  ->  y1 [tb, H1, W1*C1] (lane-merged layout) ----
    acc = None
    for dy in range(k1):
        rows = x[:, dy: dy + (H1 - 1) * s1 + 1: s1, :]
        part = jnp.einsum('nhw,wf->nhf', rows, w1_ref[dy],
                          preferred_element_type=f32)
        acc = part if acc is None else acc + part
    y1 = jnp.maximum(acc + b1_ref[...], 0.0)
    # dropout: identity (eval-mode forward)

    # ---- conv2 + bias + relu  ->  y2 [tb, H2, W2*C2] ----
    acc = None
    for dy in range(k2):
        rows = y1[:, dy: dy + (H2 - 1) * s2 + 1: s2, :]
        part = jnp.einsum('nhw,wf->nhf', rows, w2_ref[dy],
                          preferred_element_type=f32)
        acc = part if acc is None else acc + part
    y2 = jnp.maximum(acc + b2_ref[...], 0.0)

    # ---- maxpool 2x2, stride 1 (on lane-dense merged rows) ----
    wc = Wp * C2
    pooled = jnp.maximum(
        jnp.maximum(y2[:, 0:Hp, 0:wc], y2[:, 0:Hp, C2:C2 + wc]),
        jnp.maximum(y2[:, 1:Hp + 1, 0:wc], y2[:, 1:Hp + 1, C2:C2 + wc]),
    )                                               # [tb, Hp, Wp*C2]
    # dropout: identity (eval-mode forward)

    # ---- flatten + fc1: one matmul per pooled row vs. permuted fc1 weight ----
    h = None
    for r in range(Hp):
        part = jnp.einsum('nf,fo->no', pooled[:, r, :], fw1_ref[r],
                          preferred_element_type=f32)
        h = part if h is None else h + part
    h = h + fb1_ref[...]

    # ---- fc2 + log_softmax ----
    logits = jnp.einsum('nh,ho->no', h, fw2_ref[...],
                        preferred_element_type=f32) + fb2_ref[...]
    m = jnp.max(logits, axis=-1, keepdims=True)
    z = logits - m
    lse = jnp.log(jnp.sum(jnp.exp(z), axis=-1, keepdims=True))
    o_ref[...] = z - lse                             # [tb, out]


def model_forward(x_nchw, kparams, dims, *, tb=8):
    N = x_nchw.shape[0]
    H, W, Cin = dims['H'], dims['W'], dims['Cin']
    out_dim = dims['out']

    # NCHW -> lane-merged [N, H, W*Cin]  (for Cin=1 this is just a squeeze)
    x_m = jnp.transpose(x_nchw.astype(jnp.float32), (0, 2, 3, 1)).reshape(
        N, H, W * Cin)

    # pad batch up to a multiple of the batch-block size
    n_pad = ((N + tb - 1) // tb) * tb
    if n_pad != N:
        x_m = jnp.pad(x_m, ((0, n_pad - N), (0, 0), (0, 0)))

    kernel = functools.partial(
        _fused_forward_kernel,
        k1=dims['k1'], s1=dims['s1'], k2=dims['k2'], s2=dims['s2'],
        H1=dims['H1'], H2=dims['H2'], Hp=dims['Hp'], Wp=dims['Wp'],
        C2=dims['C2'])

    def _const_spec(arr):
        nd = arr.ndim
        return pl.BlockSpec(arr.shape, lambda i, _nd=nd: (0,) * _nd)

    args = (x_m, kparams['w1band'], kparams['b1m'], kparams['w2band'],
            kparams['b2m'], kparams['fw1p'], kparams['fb1'],
            kparams['fw2'], kparams['fb2'])

    out = pl.pallas_call(
        kernel,
        out_shape=jax.ShapeDtypeStruct((n_pad, out_dim), jnp.float32),
        grid=(n_pad // tb,),
        in_specs=[pl.BlockSpec((tb, H, W * Cin), lambda i: (i, 0, 0))]
                 + [_const_spec(a) for a in args[1:]],
        out_specs=pl.BlockSpec((tb, out_dim), lambda i: (i, 0)),
        compiler_params=pltpu.CompilerParams(
            dimension_semantics=("parallel",)),
    )(*args)
    return out[:N]


# ----------------------------------------------------------------------------
# pure-JAX reference (torch semantics) for verification
# ----------------------------------------------------------------------------
def reference_forward(x_nchw, params, config):
    s1, s2 = config['stride_1'], config['stride_2']
    x = jnp.transpose(x_nchw.astype(jnp.float32), (0, 2, 3, 1))
    dn = ('NHWC', 'HWIO', 'NHWC')
    y = jax.lax.conv_general_dilated(x, params['w1'], (s1, s1), 'VALID',
                                     dimension_numbers=dn)
    y = jnp.maximum(y + params['b1'], 0.0)
    y = jax.lax.conv_general_dilated(y, params['w2'], (s2, s2), 'VALID',
                                     dimension_numbers=dn)
    y = jnp.maximum(y + params['b2'], 0.0)
    y = jax.lax.reduce_window(y, -jnp.inf, jax.lax.max,
                              (1, 2, 2, 1), (1, 1, 1, 1), 'VALID')
    y = jnp.transpose(y, (0, 3, 1, 2)).reshape(y.shape[0], -1)  # torch flatten
    h = y @ params['fw1'] + params['fb1']
    logits = h @ params['fw2'] + params['fb2']
    return jax.nn.log_softmax(logits, axis=-1)


# ----------------------------------------------------------------------------
if __name__ == "__main__":
    config = {
        'channels_1': 4, 'kernel_1': 3, 'stride_1': 1,
        'channels_2': 8, 'kernel_2': 3, 'stride_2': 1,
        'hidden': 32, 'dropout': 0.5,
    }
    img_dim = 16
    batch = 2

    key = jax.random.PRNGKey(0)
    kp, kx = jax.random.split(key)
    params = init_torch_params(kp, config, img_dim)
    kparams, dims = prepare_kernel_params(params, config, img_dim)
    x = jax.random.normal(kx, (batch, 1, img_dim, img_dim), jnp.float32)  # NCHW

    out = jax.block_until_ready(model_forward(x, kparams, dims))
    ref = jax.block_until_ready(reference_forward(x, params, config))
    np.testing.assert_allclose(np.asarray(out), np.asarray(ref),
                               rtol=1e-2, atol=1e-2)
    assert out.shape == (batch, 10)
    print("KERNEL_OK")
</pallas_src>

<mosaic_0001>
module attributes {stable_mosaic.version = 11 : i64} {
  func.func @_fused_forward_kernel(%arg0: i32, %arg1: memref<8x16x16xf32, #tpu.memory_space<vmem>>, %arg2: memref<3x16x56xf32, #tpu.memory_space<vmem>>, %arg3: memref<1x1x56xf32, #tpu.memory_space<vmem>>, %arg4: memref<3x56x96xf32, #tpu.memory_space<vmem>>, %arg5: memref<1x1x96xf32, #tpu.memory_space<vmem>>, %arg6: memref<11x88x32xf32, #tpu.memory_space<vmem>>, %arg7: memref<1x32xf32, #tpu.memory_space<vmem>>, %arg8: memref<32x10xf32, #tpu.memory_space<vmem>>, %arg9: memref<1x10xf32, #tpu.memory_space<vmem>>, %arg10: memref<8x10xf32, #tpu.memory_space<vmem>>) attributes {dimension_semantics = [#tpu.dimension_semantics<parallel>], iteration_bounds = array<i64: 1>, scalar_prefetch = 0 : i64, scratch_operands = 0 : i64, tpu.core_type = #tpu.core_type<tc>, window_params = [{transform_indices = @transform_0, window_bounds = array<i64: 8, 16, 16>}, {pipeline_mode = #tpu.pipeline_mode<synchronous>, transform_indices = @transform_1, window_bounds = array<i64: 3, 16, 56>}, {pipeline_mode = #tpu.pipeline_mode<synchronous>, transform_indices = @transform_2, window_bounds = array<i64: 1, 1, 56>}, {pipeline_mode = #tpu.pipeline_mode<synchronous>, transform_indices = @transform_3, window_bounds = array<i64: 3, 56, 96>}, {pipeline_mode = #tpu.pipeline_mode<synchronous>, transform_indices = @transform_4, window_bounds = array<i64: 1, 1, 96>}, {pipeline_mode = #tpu.pipeline_mode<synchronous>, transform_indices = @transform_5, window_bounds = array<i64: 11, 88, 32>}, {pipeline_mode = #tpu.pipeline_mode<synchronous>, transform_indices = @transform_6, window_bounds = array<i64: 1, 32>}, {pipeline_mode = #tpu.pipeline_mode<synchronous>, transform_indices = @transform_7, window_bounds = array<i64: 32, 10>}, {pipeline_mode = #tpu.pipeline_mode<synchronous>, transform_indices = @transform_8, window_bounds = array<i64: 1, 10>}, {transform_indices = @transform_9, window_bounds = array<i64: 8, 10>}]} {
    %c0 = arith.constant 0 : index
    %c0_0 = arith.constant 0 : index
    %c0_1 = arith.constant 0 : index
    %0 = vector.load %arg1[%c0, %c0_0, %c0_1] : memref<8x16x16xf32, #tpu.memory_space<vmem>>, vector<8x16x16xf32>
    %1 = vector.extract_strided_slice %0 {offsets = [0, 0, 0], sizes = [8, 14, 16], strides = [1, 1, 1]} : vector<8x16x16xf32> to vector<8x14x16xf32>
    %c0_2 = arith.constant 0 : index
    %c0_3 = arith.constant 0 : index
    %c0_4 = arith.constant 0 : index
    %2 = vector.load %arg2[%c0_2, %c0_3, %c0_4] : memref<3x16x56xf32, #tpu.memory_space<vmem>>, vector<1x16x56xf32>
    %3 = vector.shape_cast %2 : vector<1x16x56xf32> to vector<16x56xf32>
    "tpu.trace_start"() <{level = 10 : i32, message = "nhw,wf->nhf"}> : () -> ()
    %cst = arith.constant dense<0.000000e+00> : vector<8x14x56xf32>
    %4 = tpu.matmul %1, %3, %cst {dimension_numbers = #tpu.dot_dimension_numbers<[2], [0], [0, 1], [1], [0, 0, 0, 1, 1, 1], [], []>} : vector<8x14x16xf32>, vector<16x56xf32>, vector<8x14x56xf32> -> vector<8x14x56xf32>
    "tpu.trace_stop"() : () -> ()
    %5 = vector.extract_strided_slice %0 {offsets = [0, 1, 0], sizes = [8, 14, 16], strides = [1, 1, 1]} : vector<8x16x16xf32> to vector<8x14x16xf32>
    %c1 = arith.constant 1 : index
    %c0_5 = arith.constant 0 : index
    %c0_6 = arith.constant 0 : index
    %6 = vector.load %arg2[%c1, %c0_5, %c0_6] : memref<3x16x56xf32, #tpu.memory_space<vmem>>, vector<1x16x56xf32>
    %7 = vector.shape_cast %6 : vector<1x16x56xf32> to vector<16x56xf32>
    "tpu.trace_start"() <{level = 10 : i32, message = "nhw,wf->nhf"}> : () -> ()
    %cst_7 = arith.constant dense<0.000000e+00> : vector<8x14x56xf32>
    %8 = tpu.matmul %5, %7, %cst_7 {dimension_numbers = #tpu.dot_dimension_numbers<[2], [0], [0, 1], [1], [0, 0, 0, 1, 1, 1], [], []>} : vector<8x14x16xf32>, vector<16x56xf32>, vector<8x14x56xf32> -> vector<8x14x56xf32>
    "tpu.trace_stop"() : () -> ()
    %9 = arith.addf %4, %8 : vector<8x14x56xf32>
    %10 = vector.extract_strided_slice %0 {offsets = [0, 2, 0], sizes = [8, 14, 16], strides = [1, 1, 1]} : vector<8x16x16xf32> to vector<8x14x16xf32>
    %c2 = arith.constant 2 : index
    %c0_8 = arith.constant 0 : index
    %c0_9 = arith.constant 0 : index
    %11 = vector.load %arg2[%c2, %c0_8, %c0_9] : memref<3x16x56xf32, #tpu.memory_space<vmem>>, vector<1x16x56xf32>
    %12 = vector.shape_cast %11 : vector<1x16x56xf32> to vector<16x56xf32>
    "tpu.trace_start"() <{level = 10 : i32, message = "nhw,wf->nhf"}> : () -> ()
    %cst_10 = arith.constant dense<0.000000e+00> : vector<8x14x56xf32>
    %13 = tpu.matmul %10, %12, %cst_10 {dimension_numbers = #tpu.dot_dimension_numbers<[2], [0], [0, 1], [1], [0, 0, 0, 1, 1, 1], [], []>} : vector<8x14x16xf32>, vector<16x56xf32>, vector<8x14x56xf32> -> vector<8x14x56xf32>
    "tpu.trace_stop"() : () -> ()
    %14 = arith.addf %9, %13 : vector<8x14x56xf32>
    %c0_11 = arith.constant 0 : index
    %c0_12 = arith.constant 0 : index
    %c0_13 = arith.constant 0 : index
    %15 = vector.load %arg3[%c0_11, %c0_12, %c0_13] : memref<1x1x56xf32, #tpu.memory_space<vmem>>, vector<1x1x56xf32>
    %16 = vector.broadcast %15 : vector<1x1x56xf32> to vector<8x14x56xf32>
    %17 = arith.addf %14, %16 : vector<8x14x56xf32>
    %cst_14 = arith.constant 0.000000e+00 : f32
    %18 = vector.broadcast %cst_14 : f32 to vector<8x14x56xf32>
    %19 = arith.maximumf %17, %18 : vector<8x14x56xf32>
    %20 = vector.extract_strided_slice %19 {offsets = [0, 0, 0], sizes = [8, 12, 56], strides = [1, 1, 1]} : vector<8x14x56xf32> to vector<8x12x56xf32>
    %c0_15 = arith.constant 0 : index
    %c0_16 = arith.constant 0 : index
    %c0_17 = arith.constant 0 : index
    %21 = vector.load %arg4[%c0_15, %c0_16, %c0_17] : memref<3x56x96xf32, #tpu.memory_space<vmem>>, vector<1x56x96xf32>
    %22 = vector.shape_cast %21 : vector<1x56x96xf32> to vector<56x96xf32>
    "tpu.trace_start"() <{level = 10 : i32, message = "nhw,wf->nhf"}> : () -> ()
    %cst_18 = arith.constant dense<0.000000e+00> : vector<8x12x96xf32>
    %23 = tpu.matmul %20, %22, %cst_18 {dimension_numbers = #tpu.dot_dimension_numbers<[2], [0], [0, 1], [1], [0, 0, 0, 1, 1, 1], [], []>} : vector<8x12x56xf32>, vector<56x96xf32>, vector<8x12x96xf32> -> vector<8x12x96xf32>
    "tpu.trace_stop"() : () -> ()
    %24 = vector.extract_strided_slice %19 {offsets = [0, 1, 0], sizes = [8, 12, 56], strides = [1, 1, 1]} : vector<8x14x56xf32> to vector<8x12x56xf32>
    %c1_19 = arith.constant 1 : index
    %c0_20 = arith.constant 0 : index
    %c0_21 = arith.constant 0 : index
    %25 = vector.load %arg4[%c1_19, %c0_20, %c0_21] : memref<3x56x96xf32, #tpu.memory_space<vmem>>, vector<1x56x96xf32>
    %26 = vector.shape_cast %25 : vector<1x56x96xf32> to vector<56x96xf32>
    "tpu.trace_start"() <{level = 10 : i32, message = "nhw,wf->nhf"}> : () -> ()
    %cst_22 = arith.constant dense<0.000000e+00> : vector<8x12x96xf32>
    %27 = tpu.matmul %24, %26, %cst_22 {dimension_numbers = #tpu.dot_dimension_numbers<[2], [0], [0, 1], [1], [0, 0, 0, 1, 1, 1], [], []>} : vector<8x12x56xf32>, vector<56x96xf32>, vector<8x12x96xf32> -> vector<8x12x96xf32>
    "tpu.trace_stop"() : () -> ()
    %28 = arith.addf %23, %27 : vector<8x12x96xf32>
    %29 = vector.extract_strided_slice %19 {offsets = [0, 2, 0], sizes = [8, 12, 56], strides = [1, 1, 1]} : vector<8x14x56xf32> to vector<8x12x56xf32>
    %c2_23 = arith.constant 2 : index
    %c0_24 = arith.constant 0 : index
    %c0_25 = arith.constant 0 : index
    %30 = vector.load %arg4[%c2_23, %c0_24, %c0_25] : memref<3x56x96xf32, #tpu.memory_space<vmem>>, vector<1x56x96xf32>
    %31 = vector.shape_cast %30 : vector<1x56x96xf32> to vector<56x96xf32>
    "tpu.trace_start"() <{level = 10 : i32, message = "nhw,wf->nhf"}> : () -> ()
    %cst_26 = arith.constant dense<0.000000e+00> : vector<8x12x96xf32>
    %32 = tpu.matmul %29, %31, %cst_26 {dimension_numbers = #tpu.dot_dimension_numbers<[2], [0], [0, 1], [1], [0, 0, 0, 1, 1, 1], [], []>} : vector<8x12x56xf32>, vector<56x96xf32>, vector<8x12x96xf32> -> vector<8x12x96xf32>
    "tpu.trace_stop"() : () -> ()
    %33 = arith.addf %28, %32 : vector<8x12x96xf32>
    %c0_27 = arith.constant 0 : index
    %c0_28 = arith.constant 0 : index
    %c0_29 = arith.constant 0 : index
    %34 = vector.load %arg5[%c0_27, %c0_28, %c0_29] : memref<1x1x96xf32, #tpu.memory_space<vmem>>, vector<1x1x96xf32>
    %35 = vector.broadcast %34 : vector<1x1x96xf32> to vector<8x12x96xf32>
    %36 = arith.addf %33, %35 : vector<8x12x96xf32>
    %cst_30 = arith.constant 0.000000e+00 : f32
    %37 = vector.broadcast %cst_30 : f32 to vector<8x12x96xf32>
    %38 = arith.maximumf %36, %37 : vector<8x12x96xf32>
    %39 = vector.extract_strided_slice %38 {offsets = [0, 0, 0], sizes = [8, 11, 88], strides = [1, 1, 1]} : vector<8x12x96xf32> to vector<8x11x88xf32>
    %40 = vector.extract_strided_slice %38 {offsets = [0, 0, 8], sizes = [8, 11, 88], strides = [1, 1, 1]} : vector<8x12x96xf32> to vector<8x11x88xf32>
    %41 = arith.maximumf %39, %40 : vector<8x11x88xf32>
    %42 = vector.extract_strided_slice %38 {offsets = [0, 1, 0], sizes = [8, 11, 88], strides = [1, 1, 1]} : vector<8x12x96xf32> to vector<8x11x88xf32>
    %43 = vector.extract_strided_slice %38 {offsets = [0, 1, 8], sizes = [8, 11, 88], strides = [1, 1, 1]} : vector<8x12x96xf32> to vector<8x11x88xf32>
    %44 = arith.maximumf %42, %43 : vector<8x11x88xf32>
    %45 = arith.maximumf %41, %44 : vector<8x11x88xf32>
    %46 = vector.extract_strided_slice %45 {offsets = [0, 0, 0], sizes = [8, 1, 88], strides = [1, 1, 1]} : vector<8x11x88xf32> to vector<8x1x88xf32>
    %47 = vector.shape_cast %46 : vector<8x1x88xf32> to vector<8x88xf32>
    %c0_31 = arith.constant 0 : index
    %c0_32 = arith.constant 0 : index
    %c0_33 = arith.constant 0 : index
    %48 = vector.load %arg6[%c0_31, %c0_32, %c0_33] : memref<11x88x32xf32, #tpu.memory_space<vmem>>, vector<1x88x32xf32>
    %49 = vector.shape_cast %48 : vector<1x88x32xf32> to vector<88x32xf32>
    "tpu.trace_start"() <{level = 10 : i32, message = "nf,fo->no"}> : () -> ()
    %cst_34 = arith.constant dense<0.000000e+00> : vector<8x32xf32>
    %50 = tpu.matmul %47, %49, %cst_34 {dimension_numbers = #tpu.dot_dimension_numbers<[1], [0], [0], [1], [0, 0, 1, 1], [], []>} : vector<8x88xf32>, vector<88x32xf32>, vector<8x32xf32> -> vector<8x32xf32>
    "tpu.trace_stop"() : () -> ()
    %51 = vector.extract_strided_slice %45 {offsets = [0, 1, 0], sizes = [8, 1, 88], strides = [1, 1, 1]} : vector<8x11x88xf32> to vector<8x1x88xf32>
    %52 = vector.shape_cast %51 : vector<8x1x88xf32> to vector<8x88xf32>
    %c1_35 = arith.constant 1 : index
    %c0_36 = arith.constant 0 : index
    %c0_37 = arith.constant 0 : index
    %53 = vector.load %arg6[%c1_35, %c0_36, %c0_37] : memref<11x88x32xf32, #tpu.memory_space<vmem>>, vector<1x88x32xf32>
    %54 = vector.shape_cast %53 : vector<1x88x32xf32> to vector<88x32xf32>
    "tpu.trace_start"() <{level = 10 : i32, message = "nf,fo->no"}> : () -> ()
    %cst_38 = arith.constant dense<0.000000e+00> : vector<8x32xf32>
    %55 = tpu.matmul %52, %54, %cst_38 {dimension_numbers = #tpu.dot_dimension_numbers<[1], [0], [0], [1], [0, 0, 1, 1], [], []>} : vector<8x88xf32>, vector<88x32xf32>, vector<8x32xf32> -> vector<8x32xf32>
    "tpu.trace_stop"() : () -> ()
    %56 = arith.addf %50, %55 : vector<8x32xf32>
    %57 = vector.extract_strided_slice %45 {offsets = [0, 2, 0], sizes = [8, 1, 88], strides = [1, 1, 1]} : vector<8x11x88xf32> to vector<8x1x88xf32>
    %58 = vector.shape_cast %57 : vector<8x1x88xf32> to vector<8x88xf32>
    %c2_39 = arith.constant 2 : index
    %c0_40 = arith.constant 0 : index
    %c0_41 = arith.constant 0 : index
    %59 = vector.load %arg6[%c2_39, %c0_40, %c0_41] : memref<11x88x32xf32, #tpu.memory_space<vmem>>, vector<1x88x32xf32>
    %60 = vector.shape_cast %59 : vector<1x88x32xf32> to vector<88x32xf32>
    "tpu.trace_start"() <{level = 10 : i32, message = "nf,fo->no"}> : () -> ()
    %cst_42 = arith.constant dense<0.000000e+00> : vector<8x32xf32>
    %61 = tpu.matmul %58, %60, %cst_42 {dimension_numbers = #tpu.dot_dimension_numbers<[1], [0], [0], [1], [0, 0, 1, 1], [], []>} : vector<8x88xf32>, vector<88x32xf32>, vector<8x32xf32> -> vector<8x32xf32>
    "tpu.trace_stop"() : () -> ()
    %62 = arith.addf %56, %61 : vector<8x32xf32>
    %63 = vector.extract_strided_slice %45 {offsets = [0, 3, 0], sizes = [8, 1, 88], strides = [1, 1, 1]} : vector<8x11x88xf32> to vector<8x1x88xf32>
    %64 = vector.shape_cast %63 : vector<8x1x88xf32> to vector<8x88xf32>
    %c3 = arith.constant 3 : index
    %c0_43 = arith.constant 0 : index
    %c0_44 = arith.constant 0 : index
    %65 = vector.load %arg6[%c3, %c0_43, %c0_44] : memref<11x88x32xf32, #tpu.memory_space<vmem>>, vector<1x88x32xf32>
    %66 = vector.shape_cast %65 : vector<1x88x32xf32> to vector<88x32xf32>
    "tpu.trace_start"() <{level = 10 : i32, message = "nf,fo->no"}> : () -> ()
    %cst_45 = arith.constant dense<0.000000e+00> : vector<8x32xf32>
    %67 = tpu.matmul %64, %66, %cst_45 {dimension_numbers = #tpu.dot_dimension_numbers<[1], [0], [0], [1], [0, 0, 1, 1], [], []>} : vector<8x88xf32>, vector<88x32xf32>, vector<8x32xf32> -> vector<8x32xf32>
    "tpu.trace_stop"() : () -> ()
    %68 = arith.addf %62, %67 : vector<8x32xf32>
    %69 = vector.extract_strided_slice %45 {offsets = [0, 4, 0], sizes = [8, 1, 88], strides = [1, 1, 1]} : vector<8x11x88xf32> to vector<8x1x88xf32>
    %70 = vector.shape_cast %69 : vector<8x1x88xf32> to vector<8x88xf32>
    %c4 = arith.constant 4 : index
    %c0_46 = arith.constant 0 : index
    %c0_47 = arith.constant 0 : index
    %71 = vector.load %arg6[%c4, %c0_46, %c0_47] : memref<11x88x32xf32, #tpu.memory_space<vmem>>, vector<1x88x32xf32>
    %72 = vector.shape_cast %71 : vector<1x88x32xf32> to vector<88x32xf32>
    "tpu.trace_start"() <{level = 10 : i32, message = "nf,fo->no"}> : () -> ()
    %cst_48 = arith.constant dense<0.000000e+00> : vector<8x32xf32>
    %73 = tpu.matmul %70, %72, %cst_48 {dimension_numbers = #tpu.dot_dimension_numbers<[1], [0], [0], [1], [0, 0, 1, 1], [], []>} : vector<8x88xf32>, vector<88x32xf32>, vector<8x32xf32> -> vector<8x32xf32>
    "tpu.trace_stop"() : () -> ()
    %74 = arith.addf %68, %73 : vector<8x32xf32>
    %75 = vector.extract_strided_slice %45 {offsets = [0, 5, 0], sizes = [8, 1, 88], strides = [1, 1, 1]} : vector<8x11x88xf32> to vector<8x1x88xf32>
    %76 = vector.shape_cast %75 : vector<8x1x88xf32> to vector<8x88xf32>
    %c5 = arith.constant 5 : index
    %c0_49 = arith.constant 0 : index
    %c0_50 = arith.constant 0 : index
    %77 = vector.load %arg6[%c5, %c0_49, %c0_50] : memref<11x88x32xf32, #tpu.memory_space<vmem>>, vector<1x88x32xf32>
    %78 = vector.shape_cast %77 : vector<1x88x32xf32> to vector<88x32xf32>
    "tpu.trace_start"() <{level = 10 : i32, message = "nf,fo->no"}> : () -> ()
    %cst_51 = arith.constant dense<0.000000e+00> : vector<8x32xf32>
    %79 = tpu.matmul %76, %78, %cst_51 {dimension_numbers = #tpu.dot_dimension_numbers<[1], [0], [0], [1], [0, 0, 1, 1], [], []>} : vector<8x88xf32>, vector<88x32xf32>, vector<8x32xf32> -> vector<8x32xf32>
    "tpu.trace_stop"() : () -> ()
    %80 = arith.addf %74, %79 : vector<8x32xf32>
    %81 = vector.extract_strided_slice %45 {offsets = [0, 6, 0], sizes = [8, 1, 88], strides = [1, 1, 1]} : vector<8x11x88xf32> to vector<8x1x88xf32>
    %82 = vector.shape_cast %81 : vector<8x1x88xf32> to vector<8x88xf32>
    %c6 = arith.constant 6 : index
    %c0_52 = arith.constant 0 : index
    %c0_53 = arith.constant 0 : index
    %83 = vector.load %arg6[%c6, %c0_52, %c0_53] : memref<11x88x32xf32, #tpu.memory_space<vmem>>, vector<1x88x32xf32>
    %84 = vector.shape_cast %83 : vector<1x88x32xf32> to vector<88x32xf32>
    "tpu.trace_start"() <{level = 10 : i32, message = "nf,fo->no"}> : () -> ()
    %cst_54 = arith.constant dense<0.000000e+00> : vector<8x32xf32>
    %85 = tpu.matmul %82, %84, %cst_54 {dimension_numbers = #tpu.dot_dimension_numbers<[1], [0], [0], [1], [0, 0, 1, 1], [], []>} : vector<8x88xf32>, vector<88x32xf32>, vector<8x32xf32> -> vector<8x32xf32>
    "tpu.trace_stop"() : () -> ()
    %86 = arith.addf %80, %85 : vector<8x32xf32>
    %87 = vector.extract_strided_slice %45 {offsets = [0, 7, 0], sizes = [8, 1, 88], strides = [1, 1, 1]} : vector<8x11x88xf32> to vector<8x1x88xf32>
    %88 = vector.shape_cast %87 : vector<8x1x88xf32> to vector<8x88xf32>
    %c7 = arith.constant 7 : index
    %c0_55 = arith.constant 0 : index
    %c0_56 = arith.constant 0 : index
    %89 = vector.load %arg6[%c7, %c0_55, %c0_56] : memref<11x88x32xf32, #tpu.memory_space<vmem>>, vector<1x88x32xf32>
    %90 = vector.shape_cast %89 : vector<1x88x32xf32> to vector<88x32xf32>
    "tpu.trace_start"() <{level = 10 : i32, message = "nf,fo->no"}> : () -> ()
    %cst_57 = arith.constant dense<0.000000e+00> : vector<8x32xf32>
    %91 = tpu.matmul %88, %90, %cst_57 {dimension_numbers = #tpu.dot_dimension_numbers<[1], [0], [0], [1], [0, 0, 1, 1], [], []>} : vector<8x88xf32>, vector<88x32xf32>, vector<8x32xf32> -> vector<8x32xf32>
    "tpu.trace_stop"() : () -> ()
    %92 = arith.addf %86, %91 : vector<8x32xf32>
    %93 = vector.extract_strided_slice %45 {offsets = [0, 8, 0], sizes = [8, 1, 88], strides = [1, 1, 1]} : vector<8x11x88xf32> to vector<8x1x88xf32>
    %94 = vector.shape_cast %93 : vector<8x1x88xf32> to vector<8x88xf32>
    %c8 = arith.constant 8 : index
    %c0_58 = arith.constant 0 : index
    %c0_59 = arith.constant 0 : index
    %95 = vector.load %arg6[%c8, %c0_58, %c0_59] : memref<11x88x32xf32, #tpu.memory_space<vmem>>, vector<1x88x32xf32>
    %96 = vector.shape_cast %95 : vector<1x88x32xf32> to vector<88x32xf32>
    "tpu.trace_start"() <{level = 10 : i32, message = "nf,fo->no"}> : () -> ()
    %cst_60 = arith.constant dense<0.000000e+00> : vector<8x32xf32>
    %97 = tpu.matmul %94, %96, %cst_60 {dimension_numbers = #tpu.dot_dimension_numbers<[1], [0], [0], [1], [0, 0, 1, 1], [], []>} : vector<8x88xf32>, vector<88x32xf32>, vector<8x32xf32> -> vector<8x32xf32>
    "tpu.trace_stop"() : () -> ()
    %98 = arith.addf %92, %97 : vector<8x32xf32>
    %99 = vector.extract_strided_slice %45 {offsets = [0, 9, 0], sizes = [8, 1, 88], strides = [1, 1, 1]} : vector<8x11x88xf32> to vector<8x1x88xf32>
    %100 = vector.shape_cast %99 : vector<8x1x88xf32> to vector<8x88xf32>
    %c9 = arith.constant 9 : index
    %c0_61 = arith.constant 0 : index
    %c0_62 = arith.constant 0 : index
    %101 = vector.load %arg6[%c9, %c0_61, %c0_62] : memref<11x88x32xf32, #tpu.memory_space<vmem>>, vector<1x88x32xf32>
    %102 = vector.shape_cast %101 : vector<1x88x32xf32> to vector<88x32xf32>
    "tpu.trace_start"() <{level = 10 : i32, message = "nf,fo->no"}> : () -> ()
    %cst_63 = arith.constant dense<0.000000e+00> : vector<8x32xf32>
    %103 = tpu.matmul %100, %102, %cst_63 {dimension_numbers = #tpu.dot_dimension_numbers<[1], [0], [0], [1], [0, 0, 1, 1], [], []>} : vector<8x88xf32>, vector<88x32xf32>, vector<8x32xf32> -> vector<8x32xf32>
    "tpu.trace_stop"() : () -> ()
    %104 = arith.addf %98, %103 : vector<8x32xf32>
    %105 = vector.extract_strided_slice %45 {offsets = [0, 10, 0], sizes = [8, 1, 88], strides = [1, 1, 1]} : vector<8x11x88xf32> to vector<8x1x88xf32>
    %106 = vector.shape_cast %105 : vector<8x1x88xf32> to vector<8x88xf32>
    %c10 = arith.constant 10 : index
    %c0_64 = arith.constant 0 : index
    %c0_65 = arith.constant 0 : index
    %107 = vector.load %arg6[%c10, %c0_64, %c0_65] : memref<11x88x32xf32, #tpu.memory_space<vmem>>, vector<1x88x32xf32>
    %108 = vector.shape_cast %107 : vector<1x88x32xf32> to vector<88x32xf32>
    "tpu.trace_start"() <{level = 10 : i32, message = "nf,fo->no"}> : () -> ()
    %cst_66 = arith.constant dense<0.000000e+00> : vector<8x32xf32>
    %109 = tpu.matmul %106, %108, %cst_66 {dimension_numbers = #tpu.dot_dimension_numbers<[1], [0], [0], [1], [0, 0, 1, 1], [], []>} : vector<8x88xf32>, vector<88x32xf32>, vector<8x32xf32> -> vector<8x32xf32>
    "tpu.trace_stop"() : () -> ()
    %110 = arith.addf %104, %109 : vector<8x32xf32>
    %c0_67 = arith.constant 0 : index
    %c0_68 = arith.constant 0 : index
    %111 = vector.load %arg7[%c0_67, %c0_68] : memref<1x32xf32, #tpu.memory_space<vmem>>, vector<1x32xf32>
    %112 = vector.broadcast %111 : vector<1x32xf32> to vector<8x32xf32>
    %113 = arith.addf %110, %112 : vector<8x32xf32>
    %c0_69 = arith.constant 0 : index
    %c0_70 = arith.constant 0 : index
    %114 = vector.load %arg8[%c0_69, %c0_70] : memref<32x10xf32, #tpu.memory_space<vmem>>, vector<32x10xf32>
    "tpu.trace_start"() <{level = 10 : i32, message = "nh,ho->no"}> : () -> ()
    %cst_71 = arith.constant dense<0.000000e+00> : vector<8x10xf32>
    %115 = tpu.matmul %113, %114, %cst_71 {dimension_numbers = #tpu.dot_dimension_numbers<[1], [0], [0], [1], [0, 0, 1, 1], [], []>} : vector<8x32xf32>, vector<32x10xf32>, vector<8x10xf32> -> vector<8x10xf32>
    "tpu.trace_stop"() : () -> ()
    %c0_72 = arith.constant 0 : index
    %c0_73 = arith.constant 0 : index
    %116 = vector.load %arg9[%c0_72, %c0_73] : memref<1x10xf32, #tpu.memory_space<vmem>>, vector<1x10xf32>
    %117 = vector.broadcast %116 : vector<1x10xf32> to vector<8x10xf32>
    %118 = arith.addf %115, %117 : vector<8x10xf32>
    %cst_74 = arith.constant dense<0xFF800000> : vector<8xf32>
    %119 = vector.multi_reduction <maximumf>, %118, %cst_74 [1] : vector<8x10xf32> to vector<8xf32>
    %120 = vector.shape_cast %119 : vector<8xf32> to vector<8x1xf32>
    %121 = vector.broadcast %120 : vector<8x1xf32> to vector<8x10xf32>
    %122 = arith.subf %118, %121 : vector<8x10xf32>
    %123 = math.exp %122 : vector<8x10xf32>
    %cst_75 = arith.constant dense<0.000000e+00> : vector<8xf32>
    %124 = vector.multi_reduction <add>, %123, %cst_75 [1] : vector<8x10xf32> to vector<8xf32>
    %125 = vector.shape_cast %124 : vector<8xf32> to vector<8x1xf32>
    %126 = math.log %125 : vector<8x1xf32>
    %127 = vector.broadcast %126 : vector<8x1xf32> to vector<8x10xf32>
    %128 = arith.subf %122, %127 : vector<8x10xf32>
    %c0_76 = arith.constant 0 : index
    %c0_77 = arith.constant 0 : index
    %129 = vector.load %arg10[%c0_76, %c0_77] : memref<8x10xf32, #tpu.memory_space<vmem>>, vector<8x10xf32>
    tpu.vector_store %arg10[%c0_76, %c0_77], %128 {strides = array<i32>} : memref<8x10xf32, #tpu.memory_space<vmem>>, vector<8x10xf32>,
    return
  }
  func.func @transform_0(%arg0: i32) -> (i32, i32, i32) {
    %c0_i32 = arith.constant 0 : i32
    %c0_i32_0 = arith.constant 0 : i32
    %c0_i32_1 = arith.constant 0 : i32
    return %arg0, %c0_i32, %c0_i32_0 : i32, i32, i32
  }
  func.func @transform_1(%arg0: i32) -> (i32, i32, i32) {
    %c0_i32 = arith.constant 0 : i32
    %c0_i32_0 = arith.constant 0 : i32
    %c0_i32_1 = arith.constant 0 : i32
    %c0_i32_2 = arith.constant 0 : i32
    return %c0_i32, %c0_i32_0, %c0_i32_1 : i32, i32, i32
  }
  func.func @transform_2(%arg0: i32) -> (i32, i32, i32) {
    %c0_i32 = arith.constant 0 : i32
    %c0_i32_0 = arith.constant 0 : i32
    %c0_i32_1 = arith.constant 0 : i32
    %c0_i32_2 = arith.constant 0 : i32
    return %c0_i32, %c0_i32_0, %c0_i32_1 : i32, i32, i32
  }
  func.func @transform_3(%arg0: i32) -> (i32, i32, i32) {
    %c0_i32 = arith.constant 0 : i32
    %c0_i32_0 = arith.constant 0 : i32
    %c0_i32_1 = arith.constant 0 : i32
    %c0_i32_2 = arith.constant 0 : i32
    return %c0_i32, %c0_i32_0, %c0_i32_1 : i32, i32, i32
  }
  func.func @transform_4(%arg0: i32) -> (i32, i32, i32) {
    %c0_i32 = arith.constant 0 : i32
    %c0_i32_0 = arith.constant 0 : i32
    %c0_i32_1 = arith.constant 0 : i32
    %c0_i32_2 = arith.constant 0 : i32
    return %c0_i32, %c0_i32_0, %c0_i32_1 : i32, i32, i32
  }
  func.func @transform_5(%arg0: i32) -> (i32, i32, i32) {
    %c0_i32 = arith.constant 0 : i32
    %c0_i32_0 = arith.constant 0 : i32
    %c0_i32_1 = arith.constant 0 : i32
    %c0_i32_2 = arith.constant 0 : i32
    return %c0_i32, %c0_i32_0, %c0_i32_1 : i32, i32, i32
  }
  func.func @transform_6(%arg0: i32) -> (i32, i32) {
    %c0_i32 = arith.constant 0 : i32
    %c0_i32_0 = arith.constant 0 : i32
    %c0_i32_1 = arith.constant 0 : i32
    return %c0_i32, %c0_i32_0 : i32, i32
  }
  func.func @transform_7(%arg0: i32) -> (i32, i32) {
    %c0_i32 = arith.constant 0 : i32
    %c0_i32_0 = arith.constant 0 : i32
    %c0_i32_1 = arith.constant 0 : i32
    return %c0_i32, %c0_i32_0 : i32, i32
  }
  func.func @transform_8(%arg0: i32) -> (i32, i32) {
    %c0_i32 = arith.constant 0 : i32
    %c0_i32_0 = arith.constant 0 : i32
    %c0_i32_1 = arith.constant 0 : i32
    return %c0_i32, %c0_i32_0 : i32, i32
  }
  func.func @transform_9(%arg0: i32) -> (i32, i32) {
    %c0_i32 = arith.constant 0 : i32
    %c0_i32_0 = arith.constant 0 : i32
    return %arg0, %c0_i32 : i32, i32
  }
}

</mosaic_0001>

<llo_original>
// kernel: tpu_custom_call.1
$region0: #{tpu_custom_call.1}
  #allocation0 [shape = 'u32[]', space=smem, size = 0x4, offset = 0x4, fixed_abs, tag = 'smem constant byte address 0x4 - core index']
  #allocation1 [shape = 'u32[144,128]{1,0:T(1,128)}', space=vmem, size = 0x12000, scoped, tag = 'internal scratch']
  %s0 = inlined_call_operand.vmem [shape: f32[8,16,16], index: 0, kind: input, shape index: {}]
  %s1 = inlined_call_operand.vmem [shape: f32[3,16,56], index: 1, kind: input, shape index: {}]
  %s2 = inlined_call_operand.vmem [shape: f32[1,1,56], index: 2, kind: input, shape index: {}]
  %s3 = inlined_call_operand.vmem [shape: f32[3,56,96], index: 3, kind: input, shape index: {}]
  %s4 = inlined_call_operand.vmem [shape: f32[1,1,96], index: 4, kind: input, shape index: {}]
  %s5 = inlined_call_operand.vmem [shape: f32[11,88,32], index: 5, kind: input, shape index: {}]
  %s6 = inlined_call_operand.vmem [shape: f32[1,32], index: 6, kind: input, shape index: {}]
  %s7 = inlined_call_operand.vmem [shape: f32[32,10], index: 7, kind: input, shape index: {}]
  %s8 = inlined_call_operand.vmem [shape: f32[1,10], index: 8, kind: input, shape index: {}]
  %s9 = inlined_call_operand.hbm [shape: f32[8,10], index: 9, kind: output, shape index: {}]
  %s10 = sld [smem:[#allocation0]]
  $region46: #{tpu_custom_call.1} parent=0
    _
  %s12 = ssub.s32 1, %s10
  %s13 = scalar_select 0, %s12, %s10
  $region1: #{tpu_custom_call.1} parent=0
    #allocation2 [shape = 'u8[4096]{0}', space=vmem, size = 0x1000, scoped, tag = 'output window, operand 0, single buffered']
    #allocation3 [shape = 's32[1]{0}', space=sflag, size = 0x4, scoped, tag = 'scoped memory for tpu_custom_call.1']
    %14 = vsyncpa [#allocation3], 0
    // Predicated region
    $region2: #{tpu_custom_call.1} parent=1 // pred_check
      _
    $region3: #{tpu_custom_call.1} parent=1 // pred_check_branch
      %16 = sbr.rel (0) target = $region5
    $region4: #{tpu_custom_call.1} parent=1 // pred_region
      _
    $region5: #{tpu_custom_call.1} parent=1 // pred_fallthru
      _
    // Predicated region
    $region6: #{tpu_custom_call.1} parent=1 // pred_check
      _
    $region7: #{tpu_custom_call.1} parent=1 // pred_check_branch
      %18 = sbr.rel (0) target = $region9
    $region8: #{tpu_custom_call.1} parent=1 // pred_region
      _
    $region9: #{tpu_custom_call.1} parent=1 // pred_fallthru
      _
    // Predicated region
    $region10: #{tpu_custom_call.1} parent=1 // pred_check
      _
    $region11: #{tpu_custom_call.1} parent=1 // pred_check_branch
      %20 = sbr.rel (0) target = $region13
    $region12: #{tpu_custom_call.1} parent=1 // pred_region
      _
    $region13: #{tpu_custom_call.1} parent=1 // pred_fallthru
      _
    // Predicated region
    $region14: #{tpu_custom_call.1} parent=1 // pred_check
      _
    $region15: #{tpu_custom_call.1} parent=1 // pred_check_branch
      %22 = sbr.rel (0) target = $region17
    $region16: #{tpu_custom_call.1} parent=1 // pred_region
      _
    $region17: #{tpu_custom_call.1} parent=1 // pred_fallthru
      _
    // Predicated region
    $region18: #{tpu_custom_call.1} parent=1 // pred_check
      _
    $region19: #{tpu_custom_call.1} parent=1 // pred_check_branch
      %24 = sbr.rel (0) target = $region21
    $region20: #{tpu_custom_call.1} parent=1 // pred_region
      _
    $region21: #{tpu_custom_call.1} parent=1 // pred_fallthru
      _
    // Predicated region
    $region22: #{tpu_custom_call.1} parent=1 // pred_check
      _
    $region23: #{tpu_custom_call.1} parent=1 // pred_check_branch
      %26 = sbr.rel (0) target = $region25
    $region24: #{tpu_custom_call.1} parent=1 // pred_region
      _
    $region25: #{tpu_custom_call.1} parent=1 // pred_fallthru
      _
    // Predicated region
    $region26: #{tpu_custom_call.1} parent=1 // pred_check
      _
    $region27: #{tpu_custom_call.1} parent=1 // pred_check_branch
      %28 = sbr.rel (0) target = $region29
    $region28: #{tpu_custom_call.1} parent=1 // pred_region
      _
    $region29: #{tpu_custom_call.1} parent=1 // pred_fallthru
      _
    // Predicated region
    $region30: #{tpu_custom_call.1} parent=1 // pred_check
      _
    $region31: #{tpu_custom_call.1} parent=1 // pred_check_branch
      %30 = sbr.rel (0) target = $region33
    $region32: #{tpu_custom_call.1} parent=1 // pred_region
      _
    $region33: #{tpu_custom_call.1} parent=1 // pred_fallthru
      _
    // Predicated region
    $region34: #{tpu_custom_call.1} parent=1 // pred_check
      _
    $region35: #{tpu_custom_call.1} parent=1 // pred_check_branch
      %32 = sbr.rel (0) target = $region37
    $region36: #{tpu_custom_call.1} parent=1 // pred_region
      _
    $region37: #{tpu_custom_call.1} parent=1 // pred_fallthru
      _
    %v33 = vld [vmem:[%s0] sm:$0xff]
    %v34 = vld [vmem:[%s0 + $0x8] sm:$0xff]
    %v35 = vld [vmem:[%s0 + $0x10] sm:$0xff]
    %v36 = vld [vmem:[%s0 + $0x18] sm:$0xff]
    %v37 = vld [vmem:[%s0 + $0x20] sm:$0xff]
    %v38 = vld [vmem:[%s0 + $0x28] sm:$0xff]
    %v39 = vld [vmem:[%s0 + $0x30] sm:$0xff]
    %v40 = vld [vmem:[%s0 + $0x38] sm:$0xff]
    %v41 = vld [vmem:[%s0 + $0x40] sm:$0xff]
    %v42 = vld [vmem:[%s0 + $0x48] sm:$0xff]
    %v43 = vld [vmem:[%s0 + $0x50] sm:$0xff]
    %v44 = vld [vmem:[%s0 + $0x58] sm:$0xff]
    %v45 = vld [vmem:[%s0 + $0x60] sm:$0xff]
    %v46 = vld [vmem:[%s0 + $0x68] sm:$0xff]
    %v47 = vld [vmem:[%s0 + $0x70] sm:$0xff]
    %v48 = vld [vmem:[%s0 + $0x78] sm:$0xff]
    %v49 = vld [vmem:[%s1] sm:$0xff]
    %v50 = vld [vmem:[%s1 + $0x8] sm:$0xff]
    %s51 = scalar_lea.vmem %s1, 16
    %v52 = vld [vmem:[%s51] sm:$0xff]
    %v53 = vld [vmem:[%s51 + $0x8] sm:$0xff]
    %v70 = vcombine.high %v33, %v33
    %v72 = vunpack.c.l.s4 1983009808
    %v73 = vunpack.c.0.s8 %v72
    %v74 = vlaneseq
    %v75 = vshrl.u32 %v74, 7
    %v76 = vsub.s32 %v73, %v75
    %v77 = vrot.slane %v33, %v76
    %v79 = vunpack.c.l.s4 1983009808
    %v80 = vunpack.c.0.s8 %v79
    %v81 = vlaneseq
    %v82 = vshrl.u32 %v81, 7
    %v83 = vsub.s32 %v80, %v82
    %v84 = vrot.slane %v70, %v83
    %v85 = vcombine.high %v77, %v77
    %v86 = vcombine.high %v84, %v84
    %v87 = vcombine.high %v34, %v34
    %v89 = vunpack.c.l.s4 1983009808
    %v90 = vunpack.c.0.s8 %v89
    %v91 = vlaneseq
    %v92 = vshrl.u32 %v91, 7
    %v93 = vsub.s32 %v90, %v92
    %v94 = vrot.slane %v34, %v93
    %v96 = vunpack.c.l.s4 1983009808
    %v97 = vunpack.c.0.s8 %v96
    %v98 = vlaneseq
    %v99 = vshrl.u32 %v98, 7
    %v100 = vsub.s32 %v97, %v99
    %v101 = vrot.slane %v87, %v100
    %v102 = vcombine.high %v94, %v94
    %v103 = vcombine.high %v101, %v101
    %v104 = vcombine.high %v35, %v35
    %v106 = vunpack.c.l.s4 1983009808
    %v107 = vunpack.c.0.s8 %v106
    %v108 = vlaneseq
    %v109 = vshrl.u32 %v108, 7
    %v110 = vsub.s32 %v107, %v109
    %v111 = vrot.slane %v35, %v110
    %v113 = vunpack.c.l.s4 1983009808
    %v114 = vunpack.c.0.s8 %v113
    %v115 = vlaneseq
    %v116 = vshrl.u32 %v115, 7
    %v117 = vsub.s32 %v114, %v116
    %v118 = vrot.slane %v104, %v117
    %v119 = vcombine.high %v111, %v111
    %v120 = vcombine.high %v118, %v118
    %v121 = vcombine.high %v36, %v36
    %v123 = vunpack.c.l.s4 1983009808
    %v124 = vunpack.c.0.s8 %v123
    %v125 = vlaneseq
    %v126 = vshrl.u32 %v125, 7
    %v127 = vsub.s32 %v124, %v126
    %v128 = vrot.slane %v36, %v127
    %v130 = vunpack.c.l.s4 1983009808
    %v131 = vunpack.c.0.s8 %v130
    %v132 = vlaneseq
    %v133 = vshrl.u32 %v132, 7
    %v134 = vsub.s32 %v131, %v133
    %v135 = vrot.slane %v121, %v134
    %v136 = vcombine.high %v128, %v128
    %v137 = vcombine.high %v135, %v135
    %v138 = vcombine.high %v37, %v37
    %v140 = vunpack.c.l.s4 1983009808
    %v141 = vunpack.c.0.s8 %v140
    %v142 = vlaneseq
    %v143 = vshrl.u32 %v142, 7
    %v144 = vsub.s32 %v141, %v143
    %v145 = vrot.slane %v37, %v144
    %v147 = vunpack.c.l.s4 1983009808
    %v148 = vunpack.c.0.s8 %v147
    %v149 = vlaneseq
    %v150 = vshrl.u32 %v149, 7
    %v151 = vsub.s32 %v148, %v150
    %v152 = vrot.slane %v138, %v151
    %v153 = vcombine.high %v145, %v145
    %v154 = vcombine.high %v152, %v152
    %v155 = vcombine.high %v38, %v38
    %v157 = vunpack.c.l.s4 1983009808
    %v158 = vunpack.c.0.s8 %v157
    %v159 = vlaneseq
    %v160 = vshrl.u32 %v159, 7
    %v161 = vsub.s32 %v158, %v160
    %v162 = vrot.slane %v38, %v161
    %v164 = vunpack.c.l.s4 1983009808
    %v165 = vunpack.c.0.s8 %v164
    %v166 = vlaneseq
    %v167 = vshrl.u32 %v166, 7
    %v168 = vsub.s32 %v165, %v167
    %v169 = vrot.slane %v155, %v168
    %v170 = vcombine.high %v162, %v162
    %v171 = vcombine.high %v169, %v169
    %v172 = vcombine.high %v39, %v39
    %v174 = vunpack.c.l.s4 1983009808
    %v175 = vunpack.c.0.s8 %v174
    %v176 = vlaneseq
    %v177 = vshrl.u32 %v176, 7
    %v178 = vsub.s32 %v175, %v177
    %v179 = vrot.slane %v39, %v178
    %v181 = vunpack.c.l.s4 1983009808
    %v182 = vunpack.c.0.s8 %v181
    %v183 = vlaneseq
    %v184 = vshrl.u32 %v183, 7
    %v185 = vsub.s32 %v182, %v184
    %v186 = vrot.slane %v172, %v185
    %v187 = vcombine.high %v179, %v179
    %v188 = vcombine.high %v186, %v186
    %v189 = vcombine.high %v40, %v40
    %v191 = vunpack.c.l.s4 1983009808
    %v192 = vunpack.c.0.s8 %v191
    %v193 = vlaneseq
    %v194 = vshrl.u32 %v193, 7
    %v195 = vsub.s32 %v192, %v194
    %v196 = vrot.slane %v40, %v195
    %v198 = vunpack.c.l.s4 1983009808
    %v199 = vunpack.c.0.s8 %v198
    %v200 = vlaneseq
    %v201 = vshrl.u32 %v200, 7
    %v202 = vsub.s32 %v199, %v201
    %v203 = vrot.slane %v189, %v202
    %v204 = vcombine.high %v196, %v196
    %v205 = vcombine.high %v203, %v203
    %v206 = vcombine.high %v41, %v41
    %v208 = vunpack.c.l.s4 1983009808
    %v209 = vunpack.c.0.s8 %v208
    %v210 = vlaneseq
    %v211 = vshrl.u32 %v210, 7
    %v212 = vsub.s32 %v209, %v211
    %v213 = vrot.slane %v41, %v212
    %v215 = vunpack.c.l.s4 1983009808
    %v216 = vunpack.c.0.s8 %v215
    %v217 = vlaneseq
    %v218 = vshrl.u32 %v217, 7
    %v219 = vsub.s32 %v216, %v218
    %v220 = vrot.slane %v206, %v219
    %v221 = vcombine.high %v213, %v213
    %v222 = vcombine.high %v220, %v220
    %v223 = vcombine.high %v42, %v42
    %v225 = vunpack.c.l.s4 1983009808
    %v226 = vunpack.c.0.s8 %v225
    %v227 = vlaneseq
    %v228 = vshrl.u32 %v227, 7
    %v229 = vsub.s32 %v226, %v228
    %v230 = vrot.slane %v42, %v229
    %v232 = vunpack.c.l.s4 1983009808
    %v233 = vunpack.c.0.s8 %v232
    %v234 = vlaneseq
    %v235 = vshrl.u32 %v234, 7
    %v236 = vsub.s32 %v233, %v235
    %v237 = vrot.slane %v223, %v236
    %v238 = vcombine.high %v230, %v230
    %v239 = vcombine.high %v237, %v237
    %v240 = vcombine.high %v43, %v43
    %v242 = vunpack.c.l.s4 1983009808
    %v243 = vunpack.c.0.s8 %v242
    %v244 = vlaneseq
    %v245 = vshrl.u32 %v244, 7
    %v246 = vsub.s32 %v243, %v245
    %v247 = vrot.slane %v43, %v246
    %v249 = vunpack.c.l.s4 1983009808
    %v250 = vunpack.c.0.s8 %v249
    %v251 = vlaneseq
    %v252 = vshrl.u32 %v251, 7
    %v253 = vsub.s32 %v250, %v252
    %v254 = vrot.slane %v240, %v253
    %v255 = vcombine.high %v247, %v247
    %v256 = vcombine.high %v254, %v254
    %v257 = vcombine.high %v44, %v44
    %v259 = vunpack.c.l.s4 1983009808
    %v260 = vunpack.c.0.s8 %v259
    %v261 = vlaneseq
    %v262 = vshrl.u32 %v261, 7
    %v263 = vsub.s32 %v260, %v262
    %v264 = vrot.slane %v44, %v263
    %v266 = vunpack.c.l.s4 1983009808
    %v267 = vunpack.c.0.s8 %v266
    %v268 = vlaneseq
    %v269 = vshrl.u32 %v268, 7
    %v270 = vsub.s32 %v267, %v269
    %v271 = vrot.slane %v257, %v270
    %v272 = vcombine.high %v264, %v264
    %v273 = vcombine.high %v271, %v271
    %v274 = vcombine.high %v45, %v45
    %v276 = vunpack.c.l.s4 1983009808
    %v277 = vunpack.c.0.s8 %v276
    %v278 = vlaneseq
    %v279 = vshrl.u32 %v278, 7
    %v280 = vsub.s32 %v277, %v279
    %v281 = vrot.slane %v45, %v280
    %v283 = vunpack.c.l.s4 1983009808
    %v284 = vunpack.c.0.s8 %v283
    %v285 = vlaneseq
    %v286 = vshrl.u32 %v285, 7
    %v287 = vsub.s32 %v284, %v286
    %v288 = vrot.slane %v274, %v287
    %v289 = vcombine.high %v281, %v281
    %v290 = vcombine.high %v288, %v288
    %v291 = vcombine.high %v46, %v46
    %v293 = vunpack.c.l.s4 1983009808
    %v294 = vunpack.c.0.s8 %v293
    %v295 = vlaneseq
    %v296 = vshrl.u32 %v295, 7
    %v297 = vsub.s32 %v294, %v296
    %v298 = vrot.slane %v46, %v297
    %v300 = vunpack.c.l.s4 1983009808
    %v301 = vunpack.c.0.s8 %v300
    %v302 = vlaneseq
    %v303 = vshrl.u32 %v302, 7
    %v304 = vsub.s32 %v301, %v303
    %v305 = vrot.slane %v291, %v304
    %v306 = vcombine.high %v298, %v298
    %v307 = vcombine.high %v305, %v305
    %v308 = vcombine.high %v47, %v47
    %v310 = vunpack.c.l.s4 1983009808
    %v311 = vunpack.c.0.s8 %v310
    %v312 = vlaneseq
    %v313 = vshrl.u32 %v312, 7
    %v314 = vsub.s32 %v311, %v313
    %v315 = vrot.slane %v47, %v314
    %v317 = vunpack.c.l.s4 1983009808
    %v318 = vunpack.c.0.s8 %v317
    %v319 = vlaneseq
    %v320 = vshrl.u32 %v319, 7
    %v321 = vsub.s32 %v318, %v320
    %v322 = vrot.slane %v308, %v321
    %v323 = vcombine.high %v315, %v315
    %v324 = vcombine.high %v322, %v322
    %v325 = vcombine.high %v48, %v48
    %v327 = vunpack.c.l.s4 1983009808
    %v328 = vunpack.c.0.s8 %v327
    %v329 = vlaneseq
    %v330 = vshrl.u32 %v329, 7
    %v331 = vsub.s32 %v328, %v330
    %v332 = vrot.slane %v48, %v331
    %v334 = vunpack.c.l.s4 1983009808
    %v335 = vunpack.c.0.s8 %v334
    %v336 = vlaneseq
    %v337 = vshrl.u32 %v336, 7
    %v338 = vsub.s32 %v335, %v337
    %v339 = vrot.slane %v325, %v338
    %v340 = vcombine.high %v332, %v332
    %v341 = vcombine.high %v339, %v339
    %vm342 = vcmask 1040384
    %vm343 = vcmask 1042434
    %vm344 = vmor %vm342, %vm343
    %vm345 = vcmask 1044484
    %vm346 = vmor %vm344, %vm345
    %vm347 = vcmask 1046534
    %vm348 = vmor %vm346, %vm347
    %v349 = vrot.slane %v77, 7
    %v350 = vrot.slane %v349, 2
    %v351 = vrot.slane %v85, 7
    %v352 = vsel %vm348, %v350, %v351
    %v353 = vrot.slane %v351, 2
    %v354 = vrot.slane %v84, 7
    %v355 = vsel %vm348, %v353, %v354
    %v356 = vrot.slane %v354, 2
    %v357 = vrot.slane %v86, 7
    %v358 = vsel %vm348, %v356, %v357
    %v359 = vrot.slane %v357, 2
    %v360 = vrot.slane %v94, 7
    %v361 = vsel %vm348, %v359, %v360
    %v362 = vrot.slane %v360, 2
    %v363 = vrot.slane %v102, 7
    %v364 = vsel %vm348, %v362, %v363
    %v365 = vrot.slane %v363, 2
    %v366 = vrot.slane %v101, 7
    %v367 = vsel %vm348, %v365, %v366
    %v368 = vrot.slane %v366, 2
    %v369 = vrot.slane %v103, 7
    %v370 = vsel %vm348, %v368, %v369
    %v371 = vrot.slane %v111, 7
    %v372 = vrot.slane %v371, 2
    %v373 = vrot.slane %v119, 7
    %v374 = vsel %vm348, %v372, %v373
    %v375 = vrot.slane %v373, 2
    %v376 = vrot.slane %v118, 7
    %v377 = vsel %vm348, %v375, %v376
    %v378 = vrot.slane %v376, 2
    %v379 = vrot.slane %v120, 7
    %v380 = vsel %vm348, %v378, %v379
    %v381 = vrot.slane %v379, 2
    %v382 = vrot.slane %v128, 7
    %v383 = vsel %vm348, %v381, %v382
    %v384 = vrot.slane %v382, 2
    %v385 = vrot.slane %v136, 7
    %v386 = vsel %vm348, %v384, %v385
    %v387 = vrot.slane %v385, 2
    %v388 = vrot.slane %v135, 7
    %v389 = vsel %vm348, %v387, %v388
    %v390 = vrot.slane %v388, 2
    %v391 = vrot.slane %v137, 7
    %v392 = vsel %vm348, %v390, %v391
    %v393 = vrot.slane %v145, 7
    %v394 = vrot.slane %v393, 2
    %v395 = vrot.slane %v153, 7
    %v396 = vsel %vm348, %v394, %v395
    %v397 = vrot.slane %v395, 2
    %v398 = vrot.slane %v152, 7
    %v399 = vsel %vm348, %v397, %v398
    %v400 = vrot.slane %v398, 2
    %v401 = vrot.slane %v154, 7
    %v402 = vsel %vm348, %v400, %v401
    %v403 = vrot.slane %v401, 2
    %v404 = vrot.slane %v162, 7
    %v405 = vsel %vm348, %v403, %v404
    %v406 = vrot.slane %v404, 2
    %v407 = vrot.slane %v170, 7
    %v408 = vsel %vm348, %v406, %v407
    %v409 = vrot.slane %v407, 2
    %v410 = vrot.slane %v169, 7
    %v411 = vsel %vm348, %v409, %v410
    %v412 = vrot.slane %v410, 2
    %v413 = vrot.slane %v171, 7
    %v414 = vsel %vm348, %v412, %v413
    %v415 = vrot.slane %v179, 7
    %v416 = vrot.slane %v415, 2
    %v417 = vrot.slane %v187, 7
    %v418 = vsel %vm348, %v416, %v417
    %v419 = vrot.slane %v417, 2
    %v420 = vrot.slane %v186, 7
    %v421 = vsel %vm348, %v419, %v420
    %v422 = vrot.slane %v420, 2
    %v423 = vrot.slane %v188, 7
    %v424 = vsel %vm348, %v422, %v423
    %v425 = vrot.slane %v423, 2
    %v426 = vrot.slane %v196, 7
    %v427 = vsel %vm348, %v425, %v426
    %v428 = vrot.slane %v426, 2
    %v429 = vrot.slane %v204, 7
    %v430 = vsel %vm348, %v428, %v429
    %v431 = vrot.slane %v429, 2
    %v432 = vrot.slane %v203, 7
    %v433 = vsel %vm348, %v431, %v432
    %v434 = vrot.slane %v432, 2
    %v435 = vrot.slane %v205, 7
    %v436 = vsel %vm348, %v434, %v435
    %v437 = vrot.slane %v213, 7
    %v438 = vrot.slane %v437, 2
    %v439 = vrot.slane %v221, 7
    %v440 = vsel %vm348, %v438, %v439
    %v441 = vrot.slane %v439, 2
    %v442 = vrot.slane %v220, 7
    %v443 = vsel %vm348, %v441, %v442
    %v444 = vrot.slane %v442, 2
    %v445 = vrot.slane %v222, 7
    %v446 = vsel %vm348, %v444, %v445
    %v447 = vrot.slane %v445, 2
    %v448 = vrot.slane %v230, 7
    %v449 = vsel %vm348, %v447, %v448
    %v450 = vrot.slane %v448, 2
    %v451 = vrot.slane %v238, 7
    %v452 = vsel %vm348, %v450, %v451
    %v453 = vrot.slane %v451, 2
    %v454 = vrot.slane %v237, 7
    %v455 = vsel %vm348, %v453, %v454
    %v456 = vrot.slane %v454, 2
    %v457 = vrot.slane %v239, 7
    %v458 = vsel %vm348, %v456, %v457
    %v459 = vrot.slane %v247, 7
    %v460 = vrot.slane %v459, 2
    %v461 = vrot.slane %v255, 7
    %v462 = vsel %vm348, %v460, %v461
    %v463 = vrot.slane %v461, 2
    %v464 = vrot.slane %v254, 7
    %v465 = vsel %vm348, %v463, %v464
    %v466 = vrot.slane %v464, 2
    %v467 = vrot.slane %v256, 7
    %v468 = vsel %vm348, %v466, %v467
    %v469 = vrot.slane %v467, 2
    %v470 = vrot.slane %v264, 7
    %v471 = vsel %vm348, %v469, %v470
    %v472 = vrot.slane %v470, 2
    %v473 = vrot.slane %v272, 7
    %v474 = vsel %vm348, %v472, %v473
    %v475 = vrot.slane %v473, 2
    %v476 = vrot.slane %v271, 7
    %v477 = vsel %vm348, %v475, %v476
    %v478 = vrot.slane %v476, 2
    %v479 = vrot.slane %v273, 7
    %v480 = vsel %vm348, %v478, %v479
    %v481 = vrot.slane %v281, 7
    %v482 = vrot.slane %v481, 2
    %v483 = vrot.slane %v289, 7
    %v484 = vsel %vm348, %v482, %v483
    %v485 = vrot.slane %v483, 2
    %v486 = vrot.slane %v288, 7
    %v487 = vsel %vm348, %v485, %v486
    %v488 = vrot.slane %v486, 2
    %v489 = vrot.slane %v290, 7
    %v490 = vsel %vm348, %v488, %v489
    %v491 = vrot.slane %v489, 2
    %v492 = vrot.slane %v298, 7
    %v493 = vsel %vm348, %v491, %v492
    %v494 = vrot.slane %v492, 2
    %v495 = vrot.slane %v306, 7
    %v496 = vsel %vm348, %v494, %v495
    %v497 = vrot.slane %v495, 2
    %v498 = vrot.slane %v305, 7
    %v499 = vsel %vm348, %v497, %v498
    %v500 = vrot.slane %v498, 2
    %v501 = vrot.slane %v307, 7
    %v502 = vsel %vm348, %v500, %v501
    %v503 = vrot.slane %v315, 7
    %v504 = vrot.slane %v503, 2
    %v505 = vrot.slane %v323, 7
    %v506 = vsel %vm348, %v504, %v505
    %v507 = vrot.slane %v505, 2
    %v508 = vrot.slane %v322, 7
    %v509 = vsel %vm348, %v507, %v508
    %v510 = vrot.slane %v508, 2
    %v511 = vrot.slane %v324, 7
    %v512 = vsel %vm348, %v510, %v511
    %v513 = vrot.slane %v511, 2
    %v514 = vrot.slane %v332, 7
    %v515 = vsel %vm348, %v513, %v514
    %v516 = vrot.slane %v514, 2
    %v517 = vrot.slane %v340, 7
    %v518 = vsel %vm348, %v516, %v517
    %v519 = vrot.slane %v517, 2
    %v520 = vrot.slane %v339, 7
    %v521 = vsel %vm348, %v519, %v520
    %v522 = vrot.slane %v520, 2
    %v523 = vrot.slane %v341, 7
    %v524 = vsel %vm348, %v522, %v523
    %v525 = vcombine.low %v352, %v355
    %v526 = vcombine.low %v358, %v361
    %v528 = vunpack.c.l.s4 1983009808
    %v529 = vunpack.c.0.s8 %v528
    %v530 = vlaneseq
    %v531 = vshrl.u32 %v530, 7
    %v532 = vsub.s32 %v529, %v531
    %v533 = vrot.slane %v525, %v532
    %v535 = vunpack.c.l.s4 1983009808
    %v536 = vunpack.c.0.s8 %v535
    %v537 = vlaneseq
    %v538 = vshrl.u32 %v537, 7
    %v539 = vsub.s32 %v536, %v538
    %v540 = vrot.slane %v526, %v539
    %v541 = vcombine.low %v533, %v540
    %v542 = vcombine.low %v364, %v367
    %v543 = vcombine.low %v370, %v374
    %v545 = vunpack.c.l.s4 1983009808
    %v546 = vunpack.c.0.s8 %v545
    %v547 = vlaneseq
    %v548 = vshrl.u32 %v547, 7
    %v549 = vsub.s32 %v546, %v548
    %v550 = vrot.slane %v542, %v549
    %v552 = vunpack.c.l.s4 1983009808
    %v553 = vunpack.c.0.s8 %v552
    %v554 = vlaneseq
    %v555 = vshrl.u32 %v554, 7
    %v556 = vsub.s32 %v553, %v555
    %v557 = vrot.slane %v543, %v556
    %v558 = vcombine.low %v550, %v557
    %v559 = vcombine.low %v377, %v380
    %v560 = vcombine.low %v383, %v386
    %v562 = vunpack.c.l.s4 1983009808
    %v563 = vunpack.c.0.s8 %v562
    %v564 = vlaneseq
    %v565 = vshrl.u32 %v564, 7
    %v566 = vsub.s32 %v563, %v565
    %v567 = vrot.slane %v559, %v566
    %v569 = vunpack.c.l.s4 1983009808
    %v570 = vunpack.c.0.s8 %v569
    %v571 = vlaneseq
    %v572 = vshrl.u32 %v571, 7
    %v573 = vsub.s32 %v570, %v572
    %v574 = vrot.slane %v560, %v573
    %v575 = vcombine.low %v567, %v574
    %v576 = vcombine.low %v389, %v392
    %v577 = vcombine.low %v396, %v399
    %v579 = vunpack.c.l.s4 1983009808
    %v580 = vunpack.c.0.s8 %v579
    %v581 = vlaneseq
    %v582 = vshrl.u32 %v581, 7
    %v583 = vsub.s32 %v580, %v582
    %v584 = vrot.slane %v576, %v583
    %v586 = vunpack.c.l.s4 1983009808
    %v587 = vunpack.c.0.s8 %v586
    %v588 = vlaneseq
    %v589 = vshrl.u32 %v588, 7
    %v590 = vsub.s32 %v587, %v589
    %v591 = vrot.slane %v577, %v590
    %v592 = vcombine.low %v584, %v591
    %v593 = vcombine.low %v402, %v405
    %v594 = vcombine.low %v408, %v411
    %v596 = vunpack.c.l.s4 1983009808
    %v597 = vunpack.c.0.s8 %v596
    %v598 = vlaneseq
    %v599 = vshrl.u32 %v598, 7
    %v600 = vsub.s32 %v597, %v599
    %v601 = vrot.slane %v593, %v600
    %v603 = vunpack.c.l.s4 1983009808
    %v604 = vunpack.c.0.s8 %v603
    %v605 = vlaneseq
    %v606 = vshrl.u32 %v605, 7
    %v607 = vsub.s32 %v604, %v606
    %v608 = vrot.slane %v594, %v607
    %v609 = vcombine.low %v601, %v608
    %v610 = vcombine.low %v414, %v418
    %v611 = vcombine.low %v421, %v424
    %v613 = vunpack.c.l.s4 1983009808
    %v614 = vunpack.c.0.s8 %v613
    %v615 = vlaneseq
    %v616 = vshrl.u32 %v615, 7
    %v617 = vsub.s32 %v614, %v616
    %v618 = vrot.slane %v610, %v617
    %v620 = vunpack.c.l.s4 1983009808
    %v621 = vunpack.c.0.s8 %v620
    %v622 = vlaneseq
    %v623 = vshrl.u32 %v622, 7
    %v624 = vsub.s32 %v621, %v623
    %v625 = vrot.slane %v611, %v624
    %v626 = vcombine.low %v618, %v625
    %v627 = vcombine.low %v427, %v430
    %v628 = vcombine.low %v433, %v436
    %v630 = vunpack.c.l.s4 1983009808
    %v631 = vunpack.c.0.s8 %v630
    %v632 = vlaneseq
    %v633 = vshrl.u32 %v632, 7
    %v634 = vsub.s32 %v631, %v633
    %v635 = vrot.slane %v627, %v634
    %v637 = vunpack.c.l.s4 1983009808
    %v638 = vunpack.c.0.s8 %v637
    %v639 = vlaneseq
    %v640 = vshrl.u32 %v639, 7
    %v641 = vsub.s32 %v638, %v640
    %v642 = vrot.slane %v628, %v641
    %v643 = vcombine.low %v635, %v642
    %v644 = vcombine.low %v440, %v443
    %v645 = vcombine.low %v446, %v449
    %v647 = vunpack.c.l.s4 1983009808
    %v648 = vunpack.c.0.s8 %v647
    %v649 = vlaneseq
    %v650 = vshrl.u32 %v649, 7
    %v651 = vsub.s32 %v648, %v650
    %v652 = vrot.slane %v644, %v651
    %v654 = vunpack.c.l.s4 1983009808
    %v655 = vunpack.c.0.s8 %v654
    %v656 = vlaneseq
    %v657 = vshrl.u32 %v656, 7
    %v658 = vsub.s32 %v655, %v657
    %v659 = vrot.slane %v645, %v658
    %v660 = vcombine.low %v652, %v659
    %v661 = vcombine.low %v452, %v455
    %v662 = vcombine.low %v458, %v462
    %v664 = vunpack.c.l.s4 1983009808
    %v665 = vunpack.c.0.s8 %v664
    %v666 = vlaneseq
    %v667 = vshrl.u32 %v666, 7
    %v668 = vsub.s32 %v665, %v667
    %v669 = vrot.slane %v661, %v668
    %v671 = vunpack.c.l.s4 1983009808
    %v672 = vunpack.c.0.s8 %v671
    %v673 = vlaneseq
    %v674 = vshrl.u32 %v673, 7
    %v675 = vsub.s32 %v672, %v674
    %v676 = vrot.slane %v662, %v675
    %v677 = vcombine.low %v669, %v676
    %v678 = vcombine.low %v465, %v468
    %v679 = vcombine.low %v471, %v474
    %v681 = vunpack.c.l.s4 1983009808
    %v682 = vunpack.c.0.s8 %v681
    %v683 = vlaneseq
    %v684 = vshrl.u32 %v683, 7
    %v685 = vsub.s32 %v682, %v684
    %v686 = vrot.slane %v678, %v685
    %v688 = vunpack.c.l.s4 1983009808
    %v689 = vunpack.c.0.s8 %v688
    %v690 = vlaneseq
    %v691 = vshrl.u32 %v690, 7
    %v692 = vsub.s32 %v689, %v691
    %v693 = vrot.slane %v679, %v692
    %v694 = vcombine.low %v686, %v693
    %v695 = vcombine.low %v477, %v480
    %v696 = vcombine.low %v484, %v487
    %v698 = vunpack.c.l.s4 1983009808
    %v699 = vunpack.c.0.s8 %v698
    %v700 = vlaneseq
    %v701 = vshrl.u32 %v700, 7
    %v702 = vsub.s32 %v699, %v701
    %v703 = vrot.slane %v695, %v702
    %v705 = vunpack.c.l.s4 1983009808
    %v706 = vunpack.c.0.s8 %v705
    %v707 = vlaneseq
    %v708 = vshrl.u32 %v707, 7
    %v709 = vsub.s32 %v706, %v708
    %v710 = vrot.slane %v696, %v709
    %v711 = vcombine.low %v703, %v710
    %v712 = vcombine.low %v490, %v493
    %v713 = vcombine.low %v496, %v499
    %v715 = vunpack.c.l.s4 1983009808
    %v716 = vunpack.c.0.s8 %v715
    %v717 = vlaneseq
    %v718 = vshrl.u32 %v717, 7
    %v719 = vsub.s32 %v716, %v718
    %v720 = vrot.slane %v712, %v719
    %v722 = vunpack.c.l.s4 1983009808
    %v723 = vunpack.c.0.s8 %v722
    %v724 = vlaneseq
    %v725 = vshrl.u32 %v724, 7
    %v726 = vsub.s32 %v723, %v725
    %v727 = vrot.slane %v713, %v726
    %v728 = vcombine.low %v720, %v727
    %v729 = vcombine.low %v502, %v506
    %v730 = vcombine.low %v509, %v512
    %v732 = vunpack.c.l.s4 1983009808
    %v733 = vunpack.c.0.s8 %v732
    %v734 = vlaneseq
    %v735 = vshrl.u32 %v734, 7
    %v736 = vsub.s32 %v733, %v735
    %v737 = vrot.slane %v729, %v736
    %v739 = vunpack.c.l.s4 1983009808
    %v740 = vunpack.c.0.s8 %v739
    %v741 = vlaneseq
    %v742 = vshrl.u32 %v741, 7
    %v743 = vsub.s32 %v740, %v742
    %v744 = vrot.slane %v730, %v743
    %v745 = vcombine.low %v737, %v744
    %v746 = vcombine.low %v515, %v518
    %v747 = vcombine.low %v521, %v524
    %v749 = vunpack.c.l.s4 1983009808
    %v750 = vunpack.c.0.s8 %v749
    %v751 = vlaneseq
    %v752 = vshrl.u32 %v751, 7
    %v753 = vsub.s32 %v750, %v752
    %v754 = vrot.slane %v746, %v753
    %v756 = vunpack.c.l.s4 1983009808
    %v757 = vunpack.c.0.s8 %v756
    %v758 = vlaneseq
    %v759 = vshrl.u32 %v758, 7
    %v760 = vsub.s32 %v757, %v759
    %v761 = vrot.slane %v747, %v760
    %v762 = vcombine.low %v754, %v761
    %vm763 = vcmask 130048
    %v764 = vsel %vm763, %v541, 0
    %v766 = vsel %vm763, %v558, 0
    %v768 = vsel %vm763, %v575, 0
    %v770 = vsel %vm763, %v592, 0
    %v772 = vsel %vm763, %v609, 0
    %v774 = vsel %vm763, %v626, 0
    %v776 = vsel %vm763, %v643, 0
    %v778 = vsel %vm763, %v660, 0
    %v780 = vsel %vm763, %v677, 0
    %v782 = vsel %vm763, %v694, 0
    %v784 = vsel %vm763, %v711, 0
    %v786 = vsel %vm763, %v728, 0
    %v788 = vsel %vm763, %v745, 0
    %v790 = vsel %vm763, %v762, 0
    %792 = vmatprep.subr.mxu0 0.0
    %793 = vmatpush1.msra.mxu0 %v52
    %794 = vmatprep.subr.mxu0 0.0
    %795 = vmatpush1.msra.mxu0 %v53
    %796 = vmatprep.subr.mxu0 0.0
    %797 = vmatpush1.msra.mxu0 0.0
    %798 = vmatprep.subr.mxu0 0.0
    %799 = vmatpush1.msra.mxu0 0.0
    %800 = vmatprep.subr.mxu0 0.0
    %801 = vmatpush1.msra.mxu0 0.0
    %802 = vmatprep.subr.mxu0 0.0
    %803 = vmatpush1.msra.mxu0 0.0
    %804 = vmatprep.subr.mxu0 0.0
    %805 = vmatpush1.msra.mxu0 0.0
    %806 = vmatprep.subr.mxu0 0.0
    %807 = vmatpush1.msra.mxu0 0.0
    %808 = vmatprep.subr.mxu0 0.0
    %809 = vmatpush1.msra.mxu0 0.0
    %810 = vmatprep.subr.mxu0 0.0
    %811 = vmatpush1.msra.mxu0 0.0
    %812 = vmatprep.subr.mxu0 0.0
    %813 = vmatpush1.msra.mxu0 0.0
    %814 = vmatprep.subr.mxu0 0.0
    %815 = vmatpush1.msra.mxu0 0.0
    %816 = vmatprep.subr.mxu0 0.0
    %817 = vmatpush1.msra.mxu0 0.0
    %818 = vmatprep.subr.mxu0 0.0
    %819 = vmatpush1.msra.mxu0 0.0
    %820 = vmatprep.subr.mxu0 0.0
    %821 = vmatpush1.msra.mxu0 0.0
    %822 = vmatprep.subr.mxu0 0.0
    %823 = vmatpush1.msra.mxu0 0.0
    %824 = vmatprep.subr.mxu0 0.0
    %825 = vmatpush1.msra.mxu0 0.0
    %826 = vmatprep.subr.mxu0 0.0
    %827 = vmatpush1.msra.mxu0 0.0
    %828 = vmatprep.subr.mxu0 0.0
    %829 = vmatpush1.msra.mxu0 0.0
    %830 = vmatprep.subr.mxu0 0.0
    %831 = vmatpush1.msra.mxu0 0.0
    %832 = vmatprep.subr.mxu0 0.0
    %833 = vmatpush1.msra.mxu0 0.0
    %834 = vmatprep.subr.mxu0 0.0
    %835 = vmatpush1.msra.mxu0 0.0
    %836 = vmatprep.subr.mxu0 0.0
    %837 = vmatpush1.msra.mxu0 0.0
    %838 = vmatprep.subr.mxu0 0.0
    %839 = vmatpush1.msra.mxu0 0.0
    %840 = vmatprep.subr.mxu0 0.0
    %841 = vmatpush1.msra.mxu0 0.0
    %842 = vmatprep.subr.mxu0 0.0
    %843 = vmatpush1.msra.mxu0 0.0
    %844 = vmatprep.subr.mxu0 0.0
    %845 = vmatpush1.msra.mxu0 0.0
    %846 = vmatprep.subr.mxu0 0.0
    %847 = vmatpush1.msra.mxu0 0.0
    %848 = vmatprep.subr.mxu0 0.0
    %849 = vmatpush1.msra.mxu0 0.0
    %850 = vmatprep.subr.mxu0 0.0
    %851 = vmatpush1.msra.mxu0 0.0
    %852 = vmatprep.subr.mxu0 0.0
    %853 = vmatpush1.msra.mxu0 0.0
    %854 = vmatprep.subr.mxu0 0.0
    %855 = vmatpush1.msra.mxu0 0.0
    %856 = vmatprep.mubr.f32.mxu0 0.0
    %857 = vmatmul.mubr.f32.gmra.mrb[0].mxu0 %v764
    %v858 = vpop.f32.mrb[0].mxu0
    %v859 = vadd.f32 0.0, %v858
    %v860 = vpop.f32.mrb[0].mxu0
    %861 = vmatprep.mubr.f32.mxu0 0.0
    %862 = vmatmul.mubr.f32.gmra.mrb[0].mxu0 %v766
    %v863 = vpop.f32.mrb[0].mxu0
    %v864 = vadd.f32 0.0, %v863
    %v865 = vpop.f32.mrb[0].mxu0
    %866 = vmatprep.mubr.f32.mxu0 0.0
    %867 = vmatmul.mubr.f32.gmra.mrb[0].mxu0 %v768
    %v868 = vpop.f32.mrb[0].mxu0
    %v869 = vadd.f32 0.0, %v868
    %v870 = vpop.f32.mrb[0].mxu0
    %871 = vmatprep.mubr.f32.mxu0 0.0
    %872 = vmatmul.mubr.f32.gmra.mrb[0].mxu0 %v770
    %v873 = vpop.f32.mrb[0].mxu0
    %v874 = vadd.f32 0.0, %v873
    %v875 = vpop.f32.mrb[0].mxu0
    %876 = vmatprep.mubr.f32.mxu0 0.0
    %877 = vmatmul.mubr.f32.gmra.mrb[0].mxu0 %v772
    %v878 = vpop.f32.mrb[0].mxu0
    %v879 = vadd.f32 0.0, %v878
    %v880 = vpop.f32.mrb[0].mxu0
    %881 = vmatprep.mubr.f32.mxu0 0.0
    %882 = vmatmul.mubr.f32.gmra.mrb[0].mxu0 %v774
    %v883 = vpop.f32.mrb[0].mxu0
    %v884 = vadd.f32 0.0, %v883
    %v885 = vpop.f32.mrb[0].mxu0
    %886 = vmatprep.mubr.f32.mxu0 0.0
    %887 = vmatmul.mubr.f32.gmra.mrb[0].mxu0 %v776
    %v888 = vpop.f32.mrb[0].mxu0
    %v889 = vadd.f32 0.0, %v888
    %v890 = vpop.f32.mrb[0].mxu0
    %891 = vmatprep.mubr.f32.mxu0 0.0
    %892 = vmatmul.mubr.f32.gmra.mrb[0].mxu0 %v778
    %v893 = vpop.f32.mrb[0].mxu0
    %v894 = vadd.f32 0.0, %v893
    %v895 = vpop.f32.mrb[0].mxu0
    %896 = vmatprep.mubr.f32.mxu0 0.0
    %897 = vmatmul.mubr.f32.gmra.mrb[0].mxu0 %v780
    %v898 = vpop.f32.mrb[0].mxu0
    %v899 = vadd.f32 0.0, %v898
    %v900 = vpop.f32.mrb[0].mxu0
    %901 = vmatprep.mubr.f32.mxu0 0.0
    %902 = vmatmul.mubr.f32.gmra.mrb[0].mxu0 %v782
    %v903 = vpop.f32.mrb[0].mxu0
    %v904 = vadd.f32 0.0, %v903
    %v905 = vpop.f32.mrb[0].mxu0
    %906 = vmatprep.mubr.f32.mxu0 0.0
    %907 = vmatmul.mubr.f32.gmra.mrb[0].mxu0 %v784
    %v908 = vpop.f32.mrb[0].mxu0
    %v909 = vadd.f32 0.0, %v908
    %v910 = vpop.f32.mrb[0].mxu0
    %911 = vmatprep.mubr.f32.mxu0 0.0
    %912 = vmatmul.mubr.f32.gmra.mrb[0].mxu0 %v786
    %v913 = vpop.f32.mrb[0].mxu0
    %v914 = vadd.f32 0.0, %v913
    %v915 = vpop.f32.mrb[0].mxu0
    %916 = vmatprep.mubr.f32.mxu0 0.0
    %917 = vmatmul.mubr.f32.gmra.mrb[0].mxu0 %v788
    %v918 = vpop.f32.mrb[0].mxu0
    %v919 = vadd.f32 0.0, %v918
    %v920 = vpop.f32.mrb[0].mxu0
    %921 = vmatprep.mubr.f32.mxu0 0.0
    %922 = vmatmul.mubr.f32.gmra.mrb[0].mxu0 %v790
    %v923 = vpop.f32.mrb[0].mxu0
    %v924 = vadd.f32 0.0, %v923
    %v925 = vpop.f32.mrb[0].mxu0
    %926 = vdwg.mxu0
    %v927 = vcombine.low %v77, %v85
    %v928 = vcombine.low %v84, %v86
    %v930 = vunpack.c.l.s4 1983009808
    %v931 = vunpack.c.0.s8 %v930
    %v932 = vlaneseq
    %v933 = vshrl.u32 %v932, 7
    %v934 = vsub.s32 %v931, %v933
    %v935 = vrot.slane %v927, %v934
    %v937 = vunpack.c.l.s4 1983009808
    %v938 = vunpack.c.0.s8 %v937
    %v939 = vlaneseq
    %v940 = vshrl.u32 %v939, 7
    %v941 = vsub.s32 %v938, %v940
    %v942 = vrot.slane %v928, %v941
    %v943 = vcombine.low %v935, %v942
    %v944 = vcombine.low %v94, %v102
    %v945 = vcombine.low %v101, %v111
    %v947 = vunpack.c.l.s4 1983009808
    %v948 = vunpack.c.0.s8 %v947
    %v949 = vlaneseq
    %v950 = vshrl.u32 %v949, 7
    %v951 = vsub.s32 %v948, %v950
    %v952 = vrot.slane %v944, %v951
    %v954 = vunpack.c.l.s4 1983009808
    %v955 = vunpack.c.0.s8 %v954
    %v956 = vlaneseq
    %v957 = vshrl.u32 %v956, 7
    %v958 = vsub.s32 %v955, %v957
    %v959 = vrot.slane %v945, %v958
    %v960 = vcombine.low %v952, %v959
    %v961 = vcombine.low %v119, %v118
    %v962 = vcombine.low %v120, %v128
    %v964 = vunpack.c.l.s4 1983009808
    %v965 = vunpack.c.0.s8 %v964
    %v966 = vlaneseq
    %v967 = vshrl.u32 %v966, 7
    %v968 = vsub.s32 %v965, %v967
    %v969 = vrot.slane %v961, %v968
    %v971 = vunpack.c.l.s4 1983009808
    %v972 = vunpack.c.0.s8 %v971
    %v973 = vlaneseq
    %v974 = vshrl.u32 %v973, 7
    %v975 = vsub.s32 %v972, %v974
    %v976 = vrot.slane %v962, %v975
    %v977 = vcombine.low %v969, %v976
    %v978 = vcombine.low %v136, %v135
    %v979 = vcombine.low %v145, %v153
    %v981 = vunpack.c.l.s4 1983009808
    %v982 = vunpack.c.0.s8 %v981
    %v983 = vlaneseq
    %v984 = vshrl.u32 %v983, 7
    %v985 = vsub.s32 %v982, %v984
    %v986 = vrot.slane %v978, %v985
    %v988 = vunpack.c.l.s4 1983009808
    %v989 = vunpack.c.0.s8 %v988
    %v990 = vlaneseq
    %v991 = vshrl.u32 %v990, 7
    %v992 = vsub.s32 %v989, %v991
    %v993 = vrot.slane %v979, %v992
    %v994 = vcombine.low %v986, %v993
    %v995 = vcombine.low %v152, %v154
    %v996 = vcombine.low %v162, %v170
    %v998 = vunpack.c.l.s4 1983009808
    %v999 = vunpack.c.0.s8 %v998
    %v1000 = vlaneseq
    %v1001 = vshrl.u32 %v1000, 7
    %v1002 = vsub.s32 %v999, %v1001
    %v1003 = vrot.slane %v995, %v1002
    %v1005 = vunpack.c.l.s4 1983009808
    %v1006 = vunpack.c.0.s8 %v1005
    %v1007 = vlaneseq
    %v1008 = vshrl.u32 %v1007, 7
    %v1009 = vsub.s32 %v1006, %v1008
    %v1010 = vrot.slane %v996, %v1009
    %v1011 = vcombine.low %v1003, %v1010
    %v1012 = vcombine.low %v169, %v179
    %v1013 = vcombine.low %v187, %v186
    %v1015 = vunpack.c.l.s4 1983009808
    %v1016 = vunpack.c.0.s8 %v1015
    %v1017 = vlaneseq
    %v1018 = vshrl.u32 %v1017, 7
    %v1019 = vsub.s32 %v1016, %v1018
    %v1020 = vrot.slane %v1012, %v1019
    %v1022 = vunpack.c.l.s4 1983009808
    %v1023 = vunpack.c.0.s8 %v1022
    %v1024 = vlaneseq
    %v1025 = vshrl.u32 %v1024, 7
    %v1026 = vsub.s32 %v1023, %v1025
    %v1027 = vrot.slane %v1013, %v1026
    %v1028 = vcombine.low %v1020, %v1027
    %v1029 = vcombine.low %v188, %v196
    %v1030 = vcombine.low %v204, %v203
    %v1032 = vunpack.c.l.s4 1983009808
    %v1033 = vunpack.c.0.s8 %v1032
    %v1034 = vlaneseq
    %v1035 = vshrl.u32 %v1034, 7
    %v1036 = vsub.s32 %v1033, %v1035
    %v1037 = vrot.slane %v1029, %v1036
    %v1039 = vunpack.c.l.s4 1983009808
    %v1040 = vunpack.c.0.s8 %v1039
    %v1041 = vlaneseq
    %v1042 = vshrl.u32 %v1041, 7
    %v1043 = vsub.s32 %v1040, %v1042
    %v1044 = vrot.slane %v1030, %v1043
    %v1045 = vcombine.low %v1037, %v1044
    %v1046 = vcombine.low %v213, %v221
    %v1047 = vcombine.low %v220, %v222
    %v1049 = vunpack.c.l.s4 1983009808
    %v1050 = vunpack.c.0.s8 %v1049
    %v1051 = vlaneseq
    %v1052 = vshrl.u32 %v1051, 7
    %v1053 = vsub.s32 %v1050, %v1052
    %v1054 = vrot.slane %v1046, %v1053
    %v1056 = vunpack.c.l.s4 1983009808
    %v1057 = vunpack.c.0.s8 %v1056
    %v1058 = vlaneseq
    %v1059 = vshrl.u32 %v1058, 7
    %v1060 = vsub.s32 %v1057, %v1059
    %v1061 = vrot.slane %v1047, %v1060
    %v1062 = vcombine.low %v1054, %v1061
    %v1063 = vcombine.low %v230, %v238
    %v1064 = vcombine.low %v237, %v247
    %v1066 = vunpack.c.l.s4 1983009808
    %v1067 = vunpack.c.0.s8 %v1066
    %v1068 = vlaneseq
    %v1069 = vshrl.u32 %v1068, 7
    %v1070 = vsub.s32 %v1067, %v1069
    %v1071 = vrot.slane %v1063, %v1070
    %v1073 = vunpack.c.l.s4 1983009808
    %v1074 = vunpack.c.0.s8 %v1073
    %v1075 = vlaneseq
    %v1076 = vshrl.u32 %v1075, 7
    %v1077 = vsub.s32 %v1074, %v1076
    %v1078 = vrot.slane %v1064, %v1077
    %v1079 = vcombine.low %v1071, %v1078
    %v1080 = vcombine.low %v255, %v254
    %v1081 = vcombine.low %v256, %v264
    %v1083 = vunpack.c.l.s4 1983009808
    %v1084 = vunpack.c.0.s8 %v1083
    %v1085 = vlaneseq
    %v1086 = vshrl.u32 %v1085, 7
    %v1087 = vsub.s32 %v1084, %v1086
    %v1088 = vrot.slane %v1080, %v1087
    %v1090 = vunpack.c.l.s4 1983009808
    %v1091 = vunpack.c.0.s8 %v1090
    %v1092 = vlaneseq
    %v1093 = vshrl.u32 %v1092, 7
    %v1094 = vsub.s32 %v1091, %v1093
    %v1095 = vrot.slane %v1081, %v1094
    %v1096 = vcombine.low %v1088, %v1095
    %v1097 = vcombine.low %v272, %v271
    %v1098 = vcombine.low %v281, %v289
    %v1100 = vunpack.c.l.s4 1983009808
    %v1101 = vunpack.c.0.s8 %v1100
    %v1102 = vlaneseq
    %v1103 = vshrl.u32 %v1102, 7
    %v1104 = vsub.s32 %v1101, %v1103
    %v1105 = vrot.slane %v1097, %v1104
    %v1107 = vunpack.c.l.s4 1983009808
    %v1108 = vunpack.c.0.s8 %v1107
    %v1109 = vlaneseq
    %v1110 = vshrl.u32 %v1109, 7
    %v1111 = vsub.s32 %v1108, %v1110
    %v1112 = vrot.slane %v1098, %v1111
    %v1113 = vcombine.low %v1105, %v1112
    %v1114 = vcombine.low %v288, %v290
    %v1115 = vcombine.low %v298, %v306
    %v1117 = vunpack.c.l.s4 1983009808
    %v1118 = vunpack.c.0.s8 %v1117
    %v1119 = vlaneseq
    %v1120 = vshrl.u32 %v1119, 7
    %v1121 = vsub.s32 %v1118, %v1120
    %v1122 = vrot.slane %v1114, %v1121
    %v1124 = vunpack.c.l.s4 1983009808
    %v1125 = vunpack.c.0.s8 %v1124
    %v1126 = vlaneseq
    %v1127 = vshrl.u32 %v1126, 7
    %v1128 = vsub.s32 %v1125, %v1127
    %v1129 = vrot.slane %v1115, %v1128
    %v1130 = vcombine.low %v1122, %v1129
    %v1131 = vcombine.low %v305, %v315
    %v1132 = vcombine.low %v323, %v322
    %v1134 = vunpack.c.l.s4 1983009808
    %v1135 = vunpack.c.0.s8 %v1134
    %v1136 = vlaneseq
    %v1137 = vshrl.u32 %v1136, 7
    %v1138 = vsub.s32 %v1135, %v1137
    %v1139 = vrot.slane %v1131, %v1138
    %v1141 = vunpack.c.l.s4 1983009808
    %v1142 = vunpack.c.0.s8 %v1141
    %v1143 = vlaneseq
    %v1144 = vshrl.u32 %v1143, 7
    %v1145 = vsub.s32 %v1142, %v1144
    %v1146 = vrot.slane %v1132, %v1145
    %v1147 = vcombine.low %v1139, %v1146
    %v1148 = vcombine.low %v324, %v332
    %v1149 = vcombine.low %v340, %v339
    %v1151 = vunpack.c.l.s4 1983009808
    %v1152 = vunpack.c.0.s8 %v1151
    %v1153 = vlaneseq
    %v1154 = vshrl.u32 %v1153, 7
    %v1155 = vsub.s32 %v1152, %v1154
    %v1156 = vrot.slane %v1148, %v1155
    %v1158 = vunpack.c.l.s4 1983009808
    %v1159 = vunpack.c.0.s8 %v1158
    %v1160 = vlaneseq
    %v1161 = vshrl.u32 %v1160, 7
    %v1162 = vsub.s32 %v1159, %v1161
    %v1163 = vrot.slane %v1149, %v1162
    %v1164 = vcombine.low %v1156, %v1163
    %v1165 = vsel %vm763, %v943, 0
    %v1167 = vsel %vm763, %v960, 0
    %v1169 = vsel %vm763, %v977, 0
    %v1171 = vsel %vm763, %v994, 0
    %v1173 = vsel %vm763, %v1011, 0
    %v1175 = vsel %vm763, %v1028, 0
    %v1177 = vsel %vm763, %v1045, 0
    %v1179 = vsel %vm763, %v1062, 0
    %v1181 = vsel %vm763, %v1079, 0
    %v1183 = vsel %vm763, %v1096, 0
    %v1185 = vsel %vm763, %v1113, 0
    %v1187 = vsel %vm763, %v1130, 0
    %v1189 = vsel %vm763, %v1147, 0
    %v1191 = vsel %vm763, %v1164, 0
    %1193 = vmatprep.subr.mxu0 0.0
    %1194 = vmatpush1.msra.mxu0 %v49
    %1195 = vmatprep.subr.mxu0 0.0
    %1196 = vmatpush1.msra.mxu0 %v50
    %1197 = vmatprep.subr.mxu0 0.0
    %1198 = vmatpush1.msra.mxu0 0.0
    %1199 = vmatprep.subr.mxu0 0.0
    %1200 = vmatpush1.msra.mxu0 0.0
    %1201 = vmatprep.subr.mxu0 0.0
    %1202 = vmatpush1.msra.mxu0 0.0
    %1203 = vmatprep.subr.mxu0 0.0
    %1204 = vmatpush1.msra.mxu0 0.0
    %1205 = vmatprep.subr.mxu0 0.0
    %1206 = vmatpush1.msra.mxu0 0.0
    %1207 = vmatprep.subr.mxu0 0.0
    %1208 = vmatpush1.msra.mxu0 0.0
    %1209 = vmatprep.subr.mxu0 0.0
    %1210 = vmatpush1.msra.mxu0 0.0
    %1211 = vmatprep.subr.mxu0 0.0
    %1212 = vmatpush1.msra.mxu0 0.0
    %1213 = vmatprep.subr.mxu0 0.0
    %1214 = vmatpush1.msra.mxu0 0.0
    %1215 = vmatprep.subr.mxu0 0.0
    %1216 = vmatpush1.msra.mxu0 0.0
    %1217 = vmatprep.subr.mxu0 0.0
    %1218 = vmatpush1.msra.mxu0 0.0
    %1219 = vmatprep.subr.mxu0 0.0
    %1220 = vmatpush1.msra.mxu0 0.0
    %1221 = vmatprep.subr.mxu0 0.0
    %1222 = vmatpush1.msra.mxu0 0.0
    %1223 = vmatprep.subr.mxu0 0.0
    %1224 = vmatpush1.msra.mxu0 0.0
    %1225 = vmatprep.subr.mxu0 0.0
    %1226 = vmatpush1.msra.mxu0 0.0
    %1227 = vmatprep.subr.mxu0 0.0
    %1228 = vmatpush1.msra.mxu0 0.0
    %1229 = vmatprep.subr.mxu0 0.0
    %1230 = vmatpush1.msra.mxu0 0.0
    %1231 = vmatprep.subr.mxu0 0.0
    %1232 = vmatpush1.msra.mxu0 0.0
    %1233 = vmatprep.subr.mxu0 0.0
    %1234 = vmatpush1.msra.mxu0 0.0
    %1235 = vmatprep.subr.mxu0 0.0
    %1236 = vmatpush1.msra.mxu0 0.0
    %1237 = vmatprep.subr.mxu0 0.0
    %1238 = vmatpush1.msra.mxu0 0.0
    %1239 = vmatprep.subr.mxu0 0.0
    %1240 = vmatpush1.msra.mxu0 0.0
    %1241 = vmatprep.subr.mxu0 0.0
    %1242 = vmatpush1.msra.mxu0 0.0
    %1243 = vmatprep.subr.mxu0 0.0
    %1244 = vmatpush1.msra.mxu0 0.0
    %1245 = vmatprep.subr.mxu0 0.0
    %1246 = vmatpush1.msra.mxu0 0.0
    %1247 = vmatprep.subr.mxu0 0.0
    %1248 = vmatpush1.msra.mxu0 0.0
    %1249 = vmatprep.subr.mxu0 0.0
    %1250 = vmatpush1.msra.mxu0 0.0
    %1251 = vmatprep.subr.mxu0 0.0
    %1252 = vmatpush1.msra.mxu0 0.0
    %1253 = vmatprep.subr.mxu0 0.0
    %1254 = vmatpush1.msra.mxu0 0.0
    %1255 = vmatprep.subr.mxu0 0.0
    %1256 = vmatpush1.msra.mxu0 0.0
    %1257 = vmatprep.mubr.f32.mxu0 0.0
    %1258 = vmatmul.mubr.f32.gmra.mrb[0].mxu0 %v1165
    %v1259 = vpop.f32.mrb[0].mxu0
    %v1260 = vadd.f32 %v859, %v1259
    %v1261 = vpop.f32.mrb[0].mxu0
    %1262 = vmatprep.mubr.f32.mxu0 0.0
    %1263 = vmatmul.mubr.f32.gmra.mrb[0].mxu0 %v1167
    %v1264 = vpop.f32.mrb[0].mxu0
    %v1265 = vadd.f32 %v864, %v1264
    %v1266 = vpop.f32.mrb[0].mxu0
    %1267 = vmatprep.mubr.f32.mxu0 0.0
    %1268 = vmatmul.mubr.f32.gmra.mrb[0].mxu0 %v1169
    %v1269 = vpop.f32.mrb[0].mxu0
    %v1270 = vadd.f32 %v869, %v1269
    %v1271 = vpop.f32.mrb[0].mxu0
    %1272 = vmatprep.mubr.f32.mxu0 0.0
    %1273 = vmatmul.mubr.f32.gmra.mrb[0].mxu0 %v1171
    %v1274 = vpop.f32.mrb[0].mxu0
    %v1275 = vadd.f32 %v874, %v1274
    %v1276 = vpop.f32.mrb[0].mxu0
    %1277 = vmatprep.mubr.f32.mxu0 0.0
    %1278 = vmatmul.mubr.f32.gmra.mrb[0].mxu0 %v1173
    %v1279 = vpop.f32.mrb[0].mxu0
    %v1280 = vadd.f32 %v879, %v1279
    %v1281 = vpop.f32.mrb[0].mxu0
    %1282 = vmatprep.mubr.f32.mxu0 0.0
    %1283 = vmatmul.mubr.f32.gmra.mrb[0].mxu0 %v1175
    %v1284 = vpop.f32.mrb[0].mxu0
    %v1285 = vadd.f32 %v884, %v1284
    %v1286 = vpop.f32.mrb[0].mxu0
    %1287 = vmatprep.mubr.f32.mxu0 0.0
    %1288 = vmatmul.mubr.f32.gmra.mrb[0].mxu0 %v1177
    %v1289 = vpop.f32.mrb[0].mxu0
    %v1290 = vadd.f32 %v889, %v1289
    %v1291 = vpop.f32.mrb[0].mxu0
    %1292 = vmatprep.mubr.f32.mxu0 0.0
    %1293 = vmatmul.mubr.f32.gmra.mrb[0].mxu0 %v1179
    %v1294 = vpop.f32.mrb[0].mxu0
    %v1295 = vadd.f32 %v894, %v1294
    %v1296 = vpop.f32.mrb[0].mxu0
    %1297 = vmatprep.mubr.f32.mxu0 0.0
    %1298 = vmatmul.mubr.f32.gmra.mrb[0].mxu0 %v1181
    %v1299 = vpop.f32.mrb[0].mxu0
    %v1300 = vadd.f32 %v899, %v1299
    %v1301 = vpop.f32.mrb[0].mxu0
    %1302 = vmatprep.mubr.f32.mxu0 0.0
    %1303 = vmatmul.mubr.f32.gmra.mrb[0].mxu0 %v1183
    %v1304 = vpop.f32.mrb[0].mxu0
    %v1305 = vadd.f32 %v904, %v1304
    %v1306 = vpop.f32.mrb[0].mxu0
    %1307 = vmatprep.mubr.f32.mxu0 0.0
    %1308 = vmatmul.mubr.f32.gmra.mrb[0].mxu0 %v1185
    %v1309 = vpop.f32.mrb[0].mxu0
    %v1310 = vadd.f32 %v909, %v1309
    %v1311 = vpop.f32.mrb[0].mxu0
    %1312 = vmatprep.mubr.f32.mxu0 0.0
    %1313 = vmatmul.mubr.f32.gmra.mrb[0].mxu0 %v1187
    %v1314 = vpop.f32.mrb[0].mxu0
    %v1315 = vadd.f32 %v914, %v1314
    %v1316 = vpop.f32.mrb[0].mxu0
    %1317 = vmatprep.mubr.f32.mxu0 0.0
    %1318 = vmatmul.mubr.f32.gmra.mrb[0].mxu0 %v1189
    %v1319 = vpop.f32.mrb[0].mxu0
    %v1320 = vadd.f32 %v919, %v1319
    %v1321 = vpop.f32.mrb[0].mxu0
    %1322 = vmatprep.mubr.f32.mxu0 0.0
    %1323 = vmatmul.mubr.f32.gmra.mrb[0].mxu0 %v1191
    %v1324 = vpop.f32.mrb[0].mxu0
    %v1325 = vadd.f32 %v924, %v1324
    %v1326 = vpop.f32.mrb[0].mxu0
    %1327 = vdwg.mxu0
    %v1342 = vcombine.high %v1260, %v1260
    %v1344 = vunpack.c.l.s4 1983009808
    %v1345 = vunpack.c.0.s8 %v1344
    %v1346 = vlaneseq
    %v1347 = vshrl.u32 %v1346, 7
    %v1348 = vsub.s32 %v1345, %v1347
    %v1349 = vrot.slane %v1260, %v1348
    %v1351 = vunpack.c.l.s4 1983009808
    %v1352 = vunpack.c.0.s8 %v1351
    %v1353 = vlaneseq
    %v1354 = vshrl.u32 %v1353, 7
    %v1355 = vsub.s32 %v1352, %v1354
    %v1356 = vrot.slane %v1342, %v1355
    %v1357 = vcombine.high %v1349, %v1349
    %v1358 = vcombine.high %v1356, %v1356
    %v1359 = vcombine.high %v1265, %v1265
    %v1361 = vunpack.c.l.s4 1983009808
    %v1362 = vunpack.c.0.s8 %v1361
    %v1363 = vlaneseq
    %v1364 = vshrl.u32 %v1363, 7
    %v1365 = vsub.s32 %v1362, %v1364
    %v1366 = vrot.slane %v1265, %v1365
    %v1368 = vunpack.c.l.s4 1983009808
    %v1369 = vunpack.c.0.s8 %v1368
    %v1370 = vlaneseq
    %v1371 = vshrl.u32 %v1370, 7
    %v1372 = vsub.s32 %v1369, %v1371
    %v1373 = vrot.slane %v1359, %v1372
    %v1374 = vcombine.high %v1366, %v1366
    %v1375 = vcombine.high %v1373, %v1373
    %v1376 = vcombine.high %v1270, %v1270
    %v1378 = vunpack.c.l.s4 1983009808
    %v1379 = vunpack.c.0.s8 %v1378
    %v1380 = vlaneseq
    %v1381 = vshrl.u32 %v1380, 7
    %v1382 = vsub.s32 %v1379, %v1381
    %v1383 = vrot.slane %v1270, %v1382
    %v1385 = vunpack.c.l.s4 1983009808
    %v1386 = vunpack.c.0.s8 %v1385
    %v1387 = vlaneseq
    %v1388 = vshrl.u32 %v1387, 7
    %v1389 = vsub.s32 %v1386, %v1388
    %v1390 = vrot.slane %v1376, %v1389
    %v1391 = vcombine.high %v1383, %v1383
    %v1392 = vcombine.high %v1390, %v1390
    %v1393 = vcombine.high %v1275, %v1275
    %v1395 = vunpack.c.l.s4 1983009808
    %v1396 = vunpack.c.0.s8 %v1395
    %v1397 = vlaneseq
    %v1398 = vshrl.u32 %v1397, 7
    %v1399 = vsub.s32 %v1396, %v1398
    %v1400 = vrot.slane %v1275, %v1399
    %v1402 = vunpack.c.l.s4 1983009808
    %v1403 = vunpack.c.0.s8 %v1402
    %v1404 = vlaneseq
    %v1405 = vshrl.u32 %v1404, 7
    %v1406 = vsub.s32 %v1403, %v1405
    %v1407 = vrot.slane %v1393, %v1406
    %v1408 = vcombine.high %v1400, %v1400
    %v1409 = vcombine.high %v1407, %v1407
    %v1410 = vcombine.high %v1280, %v1280
    %v1412 = vunpack.c.l.s4 1983009808
    %v1413 = vunpack.c.0.s8 %v1412
    %v1414 = vlaneseq
    %v1415 = vshrl.u32 %v1414, 7
    %v1416 = vsub.s32 %v1413, %v1415
    %v1417 = vrot.slane %v1280, %v1416
    %v1419 = vunpack.c.l.s4 1983009808
    %v1420 = vunpack.c.0.s8 %v1419
    %v1421 = vlaneseq
    %v1422 = vshrl.u32 %v1421, 7
    %v1423 = vsub.s32 %v1420, %v1422
    %v1424 = vrot.slane %v1410, %v1423
    %v1425 = vcombine.high %v1417, %v1417
    %v1426 = vcombine.high %v1424, %v1424
    %v1427 = vcombine.high %v1285, %v1285
    %v1429 = vunpack.c.l.s4 1983009808
    %v1430 = vunpack.c.0.s8 %v1429
    %v1431 = vlaneseq
    %v1432 = vshrl.u32 %v1431, 7
    %v1433 = vsub.s32 %v1430, %v1432
    %v1434 = vrot.slane %v1285, %v1433
    %v1436 = vunpack.c.l.s4 1983009808
    %v1437 = vunpack.c.0.s8 %v1436
    %v1438 = vlaneseq
    %v1439 = vshrl.u32 %v1438, 7
    %v1440 = vsub.s32 %v1437, %v1439
    %v1441 = vrot.slane %v1427, %v1440
    %v1442 = vcombine.high %v1434, %v1434
    %v1443 = vcombine.high %v1441, %v1441
    %v1444 = vcombine.high %v1290, %v1290
    %v1446 = vunpack.c.l.s4 1983009808
    %v1447 = vunpack.c.0.s8 %v1446
    %v1448 = vlaneseq
    %v1449 = vshrl.u32 %v1448, 7
    %v1450 = vsub.s32 %v1447, %v1449
    %v1451 = vrot.slane %v1290, %v1450
    %v1453 = vunpack.c.l.s4 1983009808
    %v1454 = vunpack.c.0.s8 %v1453
    %v1455 = vlaneseq
    %v1456 = vshrl.u32 %v1455, 7
    %v1457 = vsub.s32 %v1454, %v1456
    %v1458 = vrot.slane %v1444, %v1457
    %v1459 = vcombine.high %v1451, %v1451
    %v1460 = vcombine.high %v1458, %v1458
    %v1461 = vcombine.high %v1295, %v1295
    %v1463 = vunpack.c.l.s4 1983009808
    %v1464 = vunpack.c.0.s8 %v1463
    %v1465 = vlaneseq
    %v1466 = vshrl.u32 %v1465, 7
    %v1467 = vsub.s32 %v1464, %v1466
    %v1468 = vrot.slane %v1295, %v1467
    %v1470 = vunpack.c.l.s4 1983009808
    %v1471 = vunpack.c.0.s8 %v1470
    %v1472 = vlaneseq
    %v1473 = vshrl.u32 %v1472, 7
    %v1474 = vsub.s32 %v1471, %v1473
    %v1475 = vrot.slane %v1461, %v1474
    %v1476 = vcombine.high %v1468, %v1468
    %v1477 = vcombine.high %v1475, %v1475
    %v1478 = vcombine.high %v1300, %v1300
    %v1480 = vunpack.c.l.s4 1983009808
    %v1481 = vunpack.c.0.s8 %v1480
    %v1482 = vlaneseq
    %v1483 = vshrl.u32 %v1482, 7
    %v1484 = vsub.s32 %v1481, %v1483
    %v1485 = vrot.slane %v1300, %v1484
    %v1487 = vunpack.c.l.s4 1983009808
    %v1488 = vunpack.c.0.s8 %v1487
    %v1489 = vlaneseq
    %v1490 = vshrl.u32 %v1489, 7
    %v1491 = vsub.s32 %v1488, %v1490
    %v1492 = vrot.slane %v1478, %v1491
    %v1493 = vcombine.high %v1485, %v1485
    %v1494 = vcombine.high %v1492, %v1492
    %v1495 = vcombine.high %v1305, %v1305
    %v1497 = vunpack.c.l.s4 1983009808
    %v1498 = vunpack.c.0.s8 %v1497
    %v1499 = vlaneseq
    %v1500 = vshrl.u32 %v1499, 7
    %v1501 = vsub.s32 %v1498, %v1500
    %v1502 = vrot.slane %v1305, %v1501
    %v1504 = vunpack.c.l.s4 1983009808
    %v1505 = vunpack.c.0.s8 %v1504
    %v1506 = vlaneseq
    %v1507 = vshrl.u32 %v1506, 7
    %v1508 = vsub.s32 %v1505, %v1507
    %v1509 = vrot.slane %v1495, %v1508
    %v1510 = vcombine.high %v1502, %v1502
    %v1511 = vcombine.high %v1509, %v1509
    %v1512 = vcombine.high %v1310, %v1310
    %v1514 = vunpack.c.l.s4 1983009808
    %v1515 = vunpack.c.0.s8 %v1514
    %v1516 = vlaneseq
    %v1517 = vshrl.u32 %v1516, 7
    %v1518 = vsub.s32 %v1515, %v1517
    %v1519 = vrot.slane %v1310, %v1518
    %v1521 = vunpack.c.l.s4 1983009808
    %v1522 = vunpack.c.0.s8 %v1521
    %v1523 = vlaneseq
    %v1524 = vshrl.u32 %v1523, 7
    %v1525 = vsub.s32 %v1522, %v1524
    %v1526 = vrot.slane %v1512, %v1525
    %v1527 = vcombine.high %v1519, %v1519
    %v1528 = vcombine.high %v1526, %v1526
    %v1529 = vcombine.high %v1315, %v1315
    %v1531 = vunpack.c.l.s4 1983009808
    %v1532 = vunpack.c.0.s8 %v1531
    %v1533 = vlaneseq
    %v1534 = vshrl.u32 %v1533, 7
    %v1535 = vsub.s32 %v1532, %v1534
    %v1536 = vrot.slane %v1315, %v1535
    %v1538 = vunpack.c.l.s4 1983009808
    %v1539 = vunpack.c.0.s8 %v1538
    %v1540 = vlaneseq
    %v1541 = vshrl.u32 %v1540, 7
    %v1542 = vsub.s32 %v1539, %v1541
    %v1543 = vrot.slane %v1529, %v1542
    %v1544 = vcombine.high %v1536, %v1536
    %v1545 = vcombine.high %v1543, %v1543
    %v1546 = vcombine.high %v1320, %v1320
    %v1548 = vunpack.c.l.s4 1983009808
    %v1549 = vunpack.c.0.s8 %v1548
    %v1550 = vlaneseq
    %v1551 = vshrl.u32 %v1550, 7
    %v1552 = vsub.s32 %v1549, %v1551
    %v1553 = vrot.slane %v1320, %v1552
    %v1555 = vunpack.c.l.s4 1983009808
    %v1556 = vunpack.c.0.s8 %v1555
    %v1557 = vlaneseq
    %v1558 = vshrl.u32 %v1557, 7
    %v1559 = vsub.s32 %v1556, %v1558
    %v1560 = vrot.slane %v1546, %v1559
    %v1561 = vcombine.high %v1553, %v1553
    %v1562 = vcombine.high %v1560, %v1560
    %v1563 = vcombine.high %v1325, %v1325
    %v1565 = vunpack.c.l.s4 1983009808
    %v1566 = vunpack.c.0.s8 %v1565
    %v1567 = vlaneseq
    %v1568 = vshrl.u32 %v1567, 7
    %v1569 = vsub.s32 %v1566, %v1568
    %v1570 = vrot.slane %v1325, %v1569
    %v1572 = vunpack.c.l.s4 1983009808
    %v1573 = vunpack.c.0.s8 %v1572
    %v1574 = vlaneseq
    %v1575 = vshrl.u32 %v1574, 7
    %v1576 = vsub.s32 %v1573, %v1575
    %v1577 = vrot.slane %v1563, %v1576
    %v1578 = vcombine.high %v1570, %v1570
    %v1579 = vcombine.high %v1577, %v1577
    %s1636 = scalar_lea.vmem %s1, 32
    %v1637 = vld [vmem:[%s1636] sm:$0xff]
    %v1638 = vld [vmem:[%s1636 + $0x8] sm:$0xff]
    %v1639 = vcombine.low %v85, %v84
    %v1640 = vcombine.low %v86, %v94
    %v1642 = vunpack.c.l.s4 1983009808
    %v1643 = vunpack.c.0.s8 %v1642
    %v1644 = vlaneseq
    %v1645 = vshrl.u32 %v1644, 7
    %v1646 = vsub.s32 %v1643, %v1645
    %v1647 = vrot.slane %v1639, %v1646
    %v1649 = vunpack.c.l.s4 1983009808
    %v1650 = vunpack.c.0.s8 %v1649
    %v1651 = vlaneseq
    %v1652 = vshrl.u32 %v1651, 7
    %v1653 = vsub.s32 %v1650, %v1652
    %v1654 = vrot.slane %v1640, %v1653
    %v1655 = vcombine.low %v1647, %v1654
    %v1656 = vcombine.low %v102, %v101
    %v1657 = vcombine.low %v103, %v119
    %v1659 = vunpack.c.l.s4 1983009808
    %v1660 = vunpack.c.0.s8 %v1659
    %v1661 = vlaneseq
    %v1662 = vshrl.u32 %v1661, 7
    %v1663 = vsub.s32 %v1660, %v1662
    %v1664 = vrot.slane %v1656, %v1663
    %v1666 = vunpack.c.l.s4 1983009808
    %v1667 = vunpack.c.0.s8 %v1666
    %v1668 = vlaneseq
    %v1669 = vshrl.u32 %v1668, 7
    %v1670 = vsub.s32 %v1667, %v1669
    %v1671 = vrot.slane %v1657, %v1670
    %v1672 = vcombine.low %v1664, %v1671
    %v1673 = vcombine.low %v118, %v120
    %v1674 = vcombine.low %v128, %v136
    %v1676 = vunpack.c.l.s4 1983009808
    %v1677 = vunpack.c.0.s8 %v1676
    %v1678 = vlaneseq
    %v1679 = vshrl.u32 %v1678, 7
    %v1680 = vsub.s32 %v1677, %v1679
    %v1681 = vrot.slane %v1673, %v1680
    %v1683 = vunpack.c.l.s4 1983009808
    %v1684 = vunpack.c.0.s8 %v1683
    %v1685 = vlaneseq
    %v1686 = vshrl.u32 %v1685, 7
    %v1687 = vsub.s32 %v1684, %v1686
    %v1688 = vrot.slane %v1674, %v1687
    %v1689 = vcombine.low %v1681, %v1688
    %v1690 = vcombine.low %v135, %v137
    %v1691 = vcombine.low %v153, %v152
    %v1693 = vunpack.c.l.s4 1983009808
    %v1694 = vunpack.c.0.s8 %v1693
    %v1695 = vlaneseq
    %v1696 = vshrl.u32 %v1695, 7
    %v1697 = vsub.s32 %v1694, %v1696
    %v1698 = vrot.slane %v1690, %v1697
    %v1700 = vunpack.c.l.s4 1983009808
    %v1701 = vunpack.c.0.s8 %v1700
    %v1702 = vlaneseq
    %v1703 = vshrl.u32 %v1702, 7
    %v1704 = vsub.s32 %v1701, %v1703
    %v1705 = vrot.slane %v1691, %v1704
    %v1706 = vcombine.low %v1698, %v1705
    %v1707 = vcombine.low %v154, %v162
    %v1708 = vcombine.low %v170, %v169
    %v1710 = vunpack.c.l.s4 1983009808
    %v1711 = vunpack.c.0.s8 %v1710
    %v1712 = vlaneseq
    %v1713 = vshrl.u32 %v1712, 7
    %v1714 = vsub.s32 %v1711, %v1713
    %v1715 = vrot.slane %v1707, %v1714
    %v1717 = vunpack.c.l.s4 1983009808
    %v1718 = vunpack.c.0.s8 %v1717
    %v1719 = vlaneseq
    %v1720 = vshrl.u32 %v1719, 7
    %v1721 = vsub.s32 %v1718, %v1720
    %v1722 = vrot.slane %v1708, %v1721
    %v1723 = vcombine.low %v1715, %v1722
    %v1724 = vcombine.low %v171, %v187
    %v1725 = vcombine.low %v186, %v188
    %v1727 = vunpack.c.l.s4 1983009808
    %v1728 = vunpack.c.0.s8 %v1727
    %v1729 = vlaneseq
    %v1730 = vshrl.u32 %v1729, 7
    %v1731 = vsub.s32 %v1728, %v1730
    %v1732 = vrot.slane %v1724, %v1731
    %v1734 = vunpack.c.l.s4 1983009808
    %v1735 = vunpack.c.0.s8 %v1734
    %v1736 = vlaneseq
    %v1737 = vshrl.u32 %v1736, 7
    %v1738 = vsub.s32 %v1735, %v1737
    %v1739 = vrot.slane %v1725, %v1738
    %v1740 = vcombine.low %v1732, %v1739
    %v1741 = vcombine.low %v196, %v204
    %v1742 = vcombine.low %v203, %v205
    %v1744 = vunpack.c.l.s4 1983009808
    %v1745 = vunpack.c.0.s8 %v1744
    %v1746 = vlaneseq
    %v1747 = vshrl.u32 %v1746, 7
    %v1748 = vsub.s32 %v1745, %v1747
    %v1749 = vrot.slane %v1741, %v1748
    %v1751 = vunpack.c.l.s4 1983009808
    %v1752 = vunpack.c.0.s8 %v1751
    %v1753 = vlaneseq
    %v1754 = vshrl.u32 %v1753, 7
    %v1755 = vsub.s32 %v1752, %v1754
    %v1756 = vrot.slane %v1742, %v1755
    %v1757 = vcombine.low %v1749, %v1756
    %v1758 = vcombine.low %v221, %v220
    %v1759 = vcombine.low %v222, %v230
    %v1761 = vunpack.c.l.s4 1983009808
    %v1762 = vunpack.c.0.s8 %v1761
    %v1763 = vlaneseq
    %v1764 = vshrl.u32 %v1763, 7
    %v1765 = vsub.s32 %v1762, %v1764
    %v1766 = vrot.slane %v1758, %v1765
    %v1768 = vunpack.c.l.s4 1983009808
    %v1769 = vunpack.c.0.s8 %v1768
    %v1770 = vlaneseq
    %v1771 = vshrl.u32 %v1770, 7
    %v1772 = vsub.s32 %v1769, %v1771
    %v1773 = vrot.slane %v1759, %v1772
    %v1774 = vcombine.low %v1766, %v1773
    %v1775 = vcombine.low %v238, %v237
    %v1776 = vcombine.low %v239, %v255
    %v1778 = vunpack.c.l.s4 1983009808
    %v1779 = vunpack.c.0.s8 %v1778
    %v1780 = vlaneseq
    %v1781 = vshrl.u32 %v1780, 7
    %v1782 = vsub.s32 %v1779, %v1781
    %v1783 = vrot.slane %v1775, %v1782
    %v1785 = vunpack.c.l.s4 1983009808
    %v1786 = vunpack.c.0.s8 %v1785
    %v1787 = vlaneseq
    %v1788 = vshrl.u32 %v1787, 7
    %v1789 = vsub.s32 %v1786, %v1788
    %v1790 = vrot.slane %v1776, %v1789
    %v1791 = vcombine.low %v1783, %v1790
    %v1792 = vcombine.low %v254, %v256
    %v1793 = vcombine.low %v264, %v272
    %v1795 = vunpack.c.l.s4 1983009808
    %v1796 = vunpack.c.0.s8 %v1795
    %v1797 = vlaneseq
    %v1798 = vshrl.u32 %v1797, 7
    %v1799 = vsub.s32 %v1796, %v1798
    %v1800 = vrot.slane %v1792, %v1799
    %v1802 = vunpack.c.l.s4 1983009808
    %v1803 = vunpack.c.0.s8 %v1802
    %v1804 = vlaneseq
    %v1805 = vshrl.u32 %v1804, 7
    %v1806 = vsub.s32 %v1803, %v1805
    %v1807 = vrot.slane %v1793, %v1806
    %v1808 = vcombine.low %v1800, %v1807
    %v1809 = vcombine.low %v271, %v273
    %v1810 = vcombine.low %v289, %v288
    %v1812 = vunpack.c.l.s4 1983009808
    %v1813 = vunpack.c.0.s8 %v1812
    %v1814 = vlaneseq
    %v1815 = vshrl.u32 %v1814, 7
    %v1816 = vsub.s32 %v1813, %v1815
    %v1817 = vrot.slane %v1809, %v1816
    %v1819 = vunpack.c.l.s4 1983009808
    %v1820 = vunpack.c.0.s8 %v1819
    %v1821 = vlaneseq
    %v1822 = vshrl.u32 %v1821, 7
    %v1823 = vsub.s32 %v1820, %v1822
    %v1824 = vrot.slane %v1810, %v1823
    %v1825 = vcombine.low %v1817, %v1824
    %v1826 = vcombine.low %v290, %v298
    %v1827 = vcombine.low %v306, %v305
    %v1829 = vunpack.c.l.s4 1983009808
    %v1830 = vunpack.c.0.s8 %v1829
    %v1831 = vlaneseq
    %v1832 = vshrl.u32 %v1831, 7
    %v1833 = vsub.s32 %v1830, %v1832
    %v1834 = vrot.slane %v1826, %v1833
    %v1836 = vunpack.c.l.s4 1983009808
    %v1837 = vunpack.c.0.s8 %v1836
    %v1838 = vlaneseq
    %v1839 = vshrl.u32 %v1838, 7
    %v1840 = vsub.s32 %v1837, %v1839
    %v1841 = vrot.slane %v1827, %v1840
    %v1842 = vcombine.low %v1834, %v1841
    %v1843 = vcombine.low %v307, %v323
    %v1844 = vcombine.low %v322, %v324
    %v1846 = vunpack.c.l.s4 1983009808
    %v1847 = vunpack.c.0.s8 %v1846
    %v1848 = vlaneseq
    %v1849 = vshrl.u32 %v1848, 7
    %v1850 = vsub.s32 %v1847, %v1849
    %v1851 = vrot.slane %v1843, %v1850
    %v1853 = vunpack.c.l.s4 1983009808
    %v1854 = vunpack.c.0.s8 %v1853
    %v1855 = vlaneseq
    %v1856 = vshrl.u32 %v1855, 7
    %v1857 = vsub.s32 %v1854, %v1856
    %v1858 = vrot.slane %v1844, %v1857
    %v1859 = vcombine.low %v1851, %v1858
    %v1860 = vcombine.low %v332, %v340
    %v1861 = vcombine.low %v339, %v341
    %v1863 = vunpack.c.l.s4 1983009808
    %v1864 = vunpack.c.0.s8 %v1863
    %v1865 = vlaneseq
    %v1866 = vshrl.u32 %v1865, 7
    %v1867 = vsub.s32 %v1864, %v1866
    %v1868 = vrot.slane %v1860, %v1867
    %v1870 = vunpack.c.l.s4 1983009808
    %v1871 = vunpack.c.0.s8 %v1870
    %v1872 = vlaneseq
    %v1873 = vshrl.u32 %v1872, 7
    %v1874 = vsub.s32 %v1871, %v1873
    %v1875 = vrot.slane %v1861, %v1874
    %v1876 = vcombine.low %v1868, %v1875
    %v1877 = vsel %vm763, %v1655, 0
    %v1879 = vsel %vm763, %v1672, 0
    %v1881 = vsel %vm763, %v1689, 0
    %v1883 = vsel %vm763, %v1706, 0
    %v1885 = vsel %vm763, %v1723, 0
    %v1887 = vsel %vm763, %v1740, 0
    %v1889 = vsel %vm763, %v1757, 0
    %v1891 = vsel %vm763, %v1774, 0
    %v1893 = vsel %vm763, %v1791, 0
    %v1895 = vsel %vm763, %v1808, 0
    %v1897 = vsel %vm763, %v1825, 0
    %v1899 = vsel %vm763, %v1842, 0
    %v1901 = vsel %vm763, %v1859, 0
    %v1903 = vsel %vm763, %v1876, 0
    %1905 = vmatprep.subr.mxu0 0.0
    %1906 = vmatpush1.msra.mxu0 %v1637
    %1907 = vmatprep.subr.mxu0 0.0
    %1908 = vmatpush1.msra.mxu0 %v1638
    %1909 = vmatprep.subr.mxu0 0.0
    %1910 = vmatpush1.msra.mxu0 0.0
    %1911 = vmatprep.subr.mxu0 0.0
    %1912 = vmatpush1.msra.mxu0 0.0
    %1913 = vmatprep.subr.mxu0 0.0
    %1914 = vmatpush1.msra.mxu0 0.0
    %1915 = vmatprep.subr.mxu0 0.0
    %1916 = vmatpush1.msra.mxu0 0.0
    %1917 = vmatprep.subr.mxu0 0.0
    %1918 = vmatpush1.msra.mxu0 0.0
    %1919 = vmatprep.subr.mxu0 0.0
    %1920 = vmatpush1.msra.mxu0 0.0
    %1921 = vmatprep.subr.mxu0 0.0
    %1922 = vmatpush1.msra.mxu0 0.0
    %1923 = vmatprep.subr.mxu0 0.0
    %1924 = vmatpush1.msra.mxu0 0.0
    %1925 = vmatprep.subr.mxu0 0.0
    %1926 = vmatpush1.msra.mxu0 0.0
    %1927 = vmatprep.subr.mxu0 0.0
    %1928 = vmatpush1.msra.mxu0 0.0
    %1929 = vmatprep.subr.mxu0 0.0
    %1930 = vmatpush1.msra.mxu0 0.0
    %1931 = vmatprep.subr.mxu0 0.0
    %1932 = vmatpush1.msra.mxu0 0.0
    %1933 = vmatprep.subr.mxu0 0.0
    %1934 = vmatpush1.msra.mxu0 0.0
    %1935 = vmatprep.subr.mxu0 0.0
    %1936 = vmatpush1.msra.mxu0 0.0
    %1937 = vmatprep.subr.mxu0 0.0
    %1938 = vmatpush1.msra.mxu0 0.0
    %1939 = vmatprep.subr.mxu0 0.0
    %1940 = vmatpush1.msra.mxu0 0.0
    %1941 = vmatprep.subr.mxu0 0.0
    %1942 = vmatpush1.msra.mxu0 0.0
    %1943 = vmatprep.subr.mxu0 0.0
    %1944 = vmatpush1.msra.mxu0 0.0
    %1945 = vmatprep.subr.mxu0 0.0
    %1946 = vmatpush1.msra.mxu0 0.0
    %1947 = vmatprep.subr.mxu0 0.0
    %1948 = vmatpush1.msra.mxu0 0.0
    %1949 = vmatprep.subr.mxu0 0.0
    %1950 = vmatpush1.msra.mxu0 0.0
    %1951 = vmatprep.subr.mxu0 0.0
    %1952 = vmatpush1.msra.mxu0 0.0
    %1953 = vmatprep.subr.mxu0 0.0
    %1954 = vmatpush1.msra.mxu0 0.0
    %1955 = vmatprep.subr.mxu0 0.0
    %1956 = vmatpush1.msra.mxu0 0.0
    %1957 = vmatprep.subr.mxu0 0.0
    %1958 = vmatpush1.msra.mxu0 0.0
    %1959 = vmatprep.subr.mxu0 0.0
    %1960 = vmatpush1.msra.mxu0 0.0
    %1961 = vmatprep.subr.mxu0 0.0
    %1962 = vmatpush1.msra.mxu0 0.0
    %1963 = vmatprep.subr.mxu0 0.0
    %1964 = vmatpush1.msra.mxu0 0.0
    %1965 = vmatprep.subr.mxu0 0.0
    %1966 = vmatpush1.msra.mxu0 0.0
    %1967 = vmatprep.subr.mxu0 0.0
    %1968 = vmatpush1.msra.mxu0 0.0
    %1969 = vmatprep.mubr.f32.mxu0 0.0
    %1970 = vmatmul.mubr.f32.gmra.mrb[0].mxu0 %v1877
    %v1971 = vpop.f32.mrb[0].mxu0
    %v1972 = vadd.f32 0.0, %v1971
    %v1973 = vpop.f32.mrb[0].mxu0
    %1974 = vmatprep.mubr.f32.mxu0 0.0
    %1975 = vmatmul.mubr.f32.gmra.mrb[0].mxu0 %v1879
    %v1976 = vpop.f32.mrb[0].mxu0
    %v1977 = vadd.f32 0.0, %v1976
    %v1978 = vpop.f32.mrb[0].mxu0
    %1979 = vmatprep.mubr.f32.mxu0 0.0
    %1980 = vmatmul.mubr.f32.gmra.mrb[0].mxu0 %v1881
    %v1981 = vpop.f32.mrb[0].mxu0
    %v1982 = vadd.f32 0.0, %v1981
    %v1983 = vpop.f32.mrb[0].mxu0
    %1984 = vmatprep.mubr.f32.mxu0 0.0
    %1985 = vmatmul.mubr.f32.gmra.mrb[0].mxu0 %v1883
    %v1986 = vpop.f32.mrb[0].mxu0
    %v1987 = vadd.f32 0.0, %v1986
    %v1988 = vpop.f32.mrb[0].mxu0
    %1989 = vmatprep.mubr.f32.mxu0 0.0
    %1990 = vmatmul.mubr.f32.gmra.mrb[0].mxu0 %v1885
    %v1991 = vpop.f32.mrb[0].mxu0
    %v1992 = vadd.f32 0.0, %v1991
    %v1993 = vpop.f32.mrb[0].mxu0
    %1994 = vmatprep.mubr.f32.mxu0 0.0
    %1995 = vmatmul.mubr.f32.gmra.mrb[0].mxu0 %v1887
    %v1996 = vpop.f32.mrb[0].mxu0
    %v1997 = vadd.f32 0.0, %v1996
    %v1998 = vpop.f32.mrb[0].mxu0
    %1999 = vmatprep.mubr.f32.mxu0 0.0
    %2000 = vmatmul.mubr.f32.gmra.mrb[0].mxu0 %v1889
    %v2001 = vpop.f32.mrb[0].mxu0
    %v2002 = vadd.f32 0.0, %v2001
    %v2003 = vpop.f32.mrb[0].mxu0
    %2004 = vmatprep.mubr.f32.mxu0 0.0
    %2005 = vmatmul.mubr.f32.gmra.mrb[0].mxu0 %v1891
    %v2006 = vpop.f32.mrb[0].mxu0
    %v2007 = vadd.f32 0.0, %v2006
    %v2008 = vpop.f32.mrb[0].mxu0
    %2009 = vmatprep.mubr.f32.mxu0 0.0
    %2010 = vmatmul.mubr.f32.gmra.mrb[0].mxu0 %v1893
    %v2011 = vpop.f32.mrb[0].mxu0
    %v2012 = vadd.f32 0.0, %v2011
    %v2013 = vpop.f32.mrb[0].mxu0
    %2014 = vmatprep.mubr.f32.mxu0 0.0
    %2015 = vmatmul.mubr.f32.gmra.mrb[0].mxu0 %v1895
    %v2016 = vpop.f32.mrb[0].mxu0
    %v2017 = vadd.f32 0.0, %v2016
    %v2018 = vpop.f32.mrb[0].mxu0
    %2019 = vmatprep.mubr.f32.mxu0 0.0
    %2020 = vmatmul.mubr.f32.gmra.mrb[0].mxu0 %v1897
    %v2021 = vpop.f32.mrb[0].mxu0
    %v2022 = vadd.f32 0.0, %v2021
    %v2023 = vpop.f32.mrb[0].mxu0
    %2024 = vmatprep.mubr.f32.mxu0 0.0
    %2025 = vmatmul.mubr.f32.gmra.mrb[0].mxu0 %v1899
    %v2026 = vpop.f32.mrb[0].mxu0
    %v2027 = vadd.f32 0.0, %v2026
    %v2028 = vpop.f32.mrb[0].mxu0
    %2029 = vmatprep.mubr.f32.mxu0 0.0
    %2030 = vmatmul.mubr.f32.gmra.mrb[0].mxu0 %v1901
    %v2031 = vpop.f32.mrb[0].mxu0
    %v2032 = vadd.f32 0.0, %v2031
    %v2033 = vpop.f32.mrb[0].mxu0
    %2034 = vmatprep.mubr.f32.mxu0 0.0
    %2035 = vmatmul.mubr.f32.gmra.mrb[0].mxu0 %v1903
    %v2036 = vpop.f32.mrb[0].mxu0
    %v2037 = vadd.f32 0.0, %v2036
    %v2038 = vpop.f32.mrb[0].mxu0
    %2039 = vdwg.mxu0
    %v2054 = vcombine.high %v1972, %v1972
    %v2056 = vunpack.c.l.s4 1983009808
    %v2057 = vunpack.c.0.s8 %v2056
    %v2058 = vlaneseq
    %v2059 = vshrl.u32 %v2058, 7
    %v2060 = vsub.s32 %v2057, %v2059
    %v2061 = vrot.slane %v1972, %v2060
    %v2063 = vunpack.c.l.s4 1983009808
    %v2064 = vunpack.c.0.s8 %v2063
    %v2065 = vlaneseq
    %v2066 = vshrl.u32 %v2065, 7
    %v2067 = vsub.s32 %v2064, %v2066
    %v2068 = vrot.slane %v2054, %v2067
    %v2069 = vcombine.high %v2061, %v2061
    %v2070 = vcombine.high %v2068, %v2068
    %v2071 = vcombine.high %v1977, %v1977
    %v2073 = vunpack.c.l.s4 1983009808
    %v2074 = vunpack.c.0.s8 %v2073
    %v2075 = vlaneseq
    %v2076 = vshrl.u32 %v2075, 7
    %v2077 = vsub.s32 %v2074, %v2076
    %v2078 = vrot.slane %v1977, %v2077
    %v2080 = vunpack.c.l.s4 1983009808
    %v2081 = vunpack.c.0.s8 %v2080
    %v2082 = vlaneseq
    %v2083 = vshrl.u32 %v2082, 7
    %v2084 = vsub.s32 %v2081, %v2083
    %v2085 = vrot.slane %v2071, %v2084
    %v2086 = vcombine.high %v2078, %v2078
    %v2087 = vcombine.high %v2085, %v2085
    %v2088 = vcombine.high %v1982, %v1982
    %v2090 = vunpack.c.l.s4 1983009808
    %v2091 = vunpack.c.0.s8 %v2090
    %v2092 = vlaneseq
    %v2093 = vshrl.u32 %v2092, 7
    %v2094 = vsub.s32 %v2091, %v2093
    %v2095 = vrot.slane %v1982, %v2094
    %v2097 = vunpack.c.l.s4 1983009808
    %v2098 = vunpack.c.0.s8 %v2097
    %v2099 = vlaneseq
    %v2100 = vshrl.u32 %v2099, 7
    %v2101 = vsub.s32 %v2098, %v2100
    %v2102 = vrot.slane %v2088, %v2101
    %v2103 = vcombine.high %v2095, %v2095
    %v2104 = vcombine.high %v2102, %v2102
    %v2105 = vcombine.high %v1987, %v1987
    %v2107 = vunpack.c.l.s4 1983009808
    %v2108 = vunpack.c.0.s8 %v2107
    %v2109 = vlaneseq
    %v2110 = vshrl.u32 %v2109, 7
    %v2111 = vsub.s32 %v2108, %v2110
    %v2112 = vrot.slane %v1987, %v2111
    %v2114 = vunpack.c.l.s4 1983009808
    %v2115 = vunpack.c.0.s8 %v2114
    %v2116 = vlaneseq
    %v2117 = vshrl.u32 %v2116, 7
    %v2118 = vsub.s32 %v2115, %v2117
    %v2119 = vrot.slane %v2105, %v2118
    %v2120 = vcombine.high %v2112, %v2112
    %v2121 = vcombine.high %v2119, %v2119
    %v2122 = vcombine.high %v1992, %v1992
    %v2124 = vunpack.c.l.s4 1983009808
    %v2125 = vunpack.c.0.s8 %v2124
    %v2126 = vlaneseq
    %v2127 = vshrl.u32 %v2126, 7
    %v2128 = vsub.s32 %v2125, %v2127
    %v2129 = vrot.slane %v1992, %v2128
    %v2131 = vunpack.c.l.s4 1983009808
    %v2132 = vunpack.c.0.s8 %v2131
    %v2133 = vlaneseq
    %v2134 = vshrl.u32 %v2133, 7
    %v2135 = vsub.s32 %v2132, %v2134
    %v2136 = vrot.slane %v2122, %v2135
    %v2137 = vcombine.high %v2129, %v2129
    %v2138 = vcombine.high %v2136, %v2136
    %v2139 = vcombine.high %v1997, %v1997
    %v2141 = vunpack.c.l.s4 1983009808
    %v2142 = vunpack.c.0.s8 %v2141
    %v2143 = vlaneseq
    %v2144 = vshrl.u32 %v2143, 7
    %v2145 = vsub.s32 %v2142, %v2144
    %v2146 = vrot.slane %v1997, %v2145
    %v2148 = vunpack.c.l.s4 1983009808
    %v2149 = vunpack.c.0.s8 %v2148
    %v2150 = vlaneseq
    %v2151 = vshrl.u32 %v2150, 7
    %v2152 = vsub.s32 %v2149, %v2151
    %v2153 = vrot.slane %v2139, %v2152
    %v2154 = vcombine.high %v2146, %v2146
    %v2155 = vcombine.high %v2153, %v2153
    %v2156 = vcombine.high %v2002, %v2002
    %v2158 = vunpack.c.l.s4 1983009808
    %v2159 = vunpack.c.0.s8 %v2158
    %v2160 = vlaneseq
    %v2161 = vshrl.u32 %v2160, 7
    %v2162 = vsub.s32 %v2159, %v2161
    %v2163 = vrot.slane %v2002, %v2162
    %v2165 = vunpack.c.l.s4 1983009808
    %v2166 = vunpack.c.0.s8 %v2165
    %v2167 = vlaneseq
    %v2168 = vshrl.u32 %v2167, 7
    %v2169 = vsub.s32 %v2166, %v2168
    %v2170 = vrot.slane %v2156, %v2169
    %v2171 = vcombine.high %v2163, %v2163
    %v2172 = vcombine.high %v2170, %v2170
    %v2173 = vcombine.high %v2007, %v2007
    %v2175 = vunpack.c.l.s4 1983009808
    %v2176 = vunpack.c.0.s8 %v2175
    %v2177 = vlaneseq
    %v2178 = vshrl.u32 %v2177, 7
    %v2179 = vsub.s32 %v2176, %v2178
    %v2180 = vrot.slane %v2007, %v2179
    %v2182 = vunpack.c.l.s4 1983009808
    %v2183 = vunpack.c.0.s8 %v2182
    %v2184 = vlaneseq
    %v2185 = vshrl.u32 %v2184, 7
    %v2186 = vsub.s32 %v2183, %v2185
    %v2187 = vrot.slane %v2173, %v2186
    %v2188 = vcombine.high %v2180, %v2180
    %v2189 = vcombine.high %v2187, %v2187
    %v2190 = vcombine.high %v2012, %v2012
    %v2192 = vunpack.c.l.s4 1983009808
    %v2193 = vunpack.c.0.s8 %v2192
    %v2194 = vlaneseq
    %v2195 = vshrl.u32 %v2194, 7
    %v2196 = vsub.s32 %v2193, %v2195
    %v2197 = vrot.slane %v2012, %v2196
    %v2199 = vunpack.c.l.s4 1983009808
    %v2200 = vunpack.c.0.s8 %v2199
    %v2201 = vlaneseq
    %v2202 = vshrl.u32 %v2201, 7
    %v2203 = vsub.s32 %v2200, %v2202
    %v2204 = vrot.slane %v2190, %v2203
    %v2205 = vcombine.high %v2197, %v2197
    %v2206 = vcombine.high %v2204, %v2204
    %v2207 = vcombine.high %v2017, %v2017
    %v2209 = vunpack.c.l.s4 1983009808
    %v2210 = vunpack.c.0.s8 %v2209
    %v2211 = vlaneseq
    %v2212 = vshrl.u32 %v2211, 7
    %v2213 = vsub.s32 %v2210, %v2212
    %v2214 = vrot.slane %v2017, %v2213
    %v2216 = vunpack.c.l.s4 1983009808
    %v2217 = vunpack.c.0.s8 %v2216
    %v2218 = vlaneseq
    %v2219 = vshrl.u32 %v2218, 7
    %v2220 = vsub.s32 %v2217, %v2219
    %v2221 = vrot.slane %v2207, %v2220
    %v2222 = vcombine.high %v2214, %v2214
    %v2223 = vcombine.high %v2221, %v2221
    %v2224 = vcombine.high %v2022, %v2022
    %v2226 = vunpack.c.l.s4 1983009808
    %v2227 = vunpack.c.0.s8 %v2226
    %v2228 = vlaneseq
    %v2229 = vshrl.u32 %v2228, 7
    %v2230 = vsub.s32 %v2227, %v2229
    %v2231 = vrot.slane %v2022, %v2230
    %v2233 = vunpack.c.l.s4 1983009808
    %v2234 = vunpack.c.0.s8 %v2233
    %v2235 = vlaneseq
    %v2236 = vshrl.u32 %v2235, 7
    %v2237 = vsub.s32 %v2234, %v2236
    %v2238 = vrot.slane %v2224, %v2237
    %v2239 = vcombine.high %v2231, %v2231
    %v2240 = vcombine.high %v2238, %v2238
    %v2241 = vcombine.high %v2027, %v2027
    %v2243 = vunpack.c.l.s4 1983009808
    %v2244 = vunpack.c.0.s8 %v2243
    %v2245 = vlaneseq
    %v2246 = vshrl.u32 %v2245, 7
    %v2247 = vsub.s32 %v2244, %v2246
    %v2248 = vrot.slane %v2027, %v2247
    %v2250 = vunpack.c.l.s4 1983009808
    %v2251 = vunpack.c.0.s8 %v2250
    %v2252 = vlaneseq
    %v2253 = vshrl.u32 %v2252, 7
    %v2254 = vsub.s32 %v2251, %v2253
    %v2255 = vrot.slane %v2241, %v2254
    %v2256 = vcombine.high %v2248, %v2248
    %v2257 = vcombine.high %v2255, %v2255
    %v2258 = vcombine.high %v2032, %v2032
    %v2260 = vunpack.c.l.s4 1983009808
    %v2261 = vunpack.c.0.s8 %v2260
    %v2262 = vlaneseq
    %v2263 = vshrl.u32 %v2262, 7
    %v2264 = vsub.s32 %v2261, %v2263
    %v2265 = vrot.slane %v2032, %v2264
    %v2267 = vunpack.c.l.s4 1983009808
    %v2268 = vunpack.c.0.s8 %v2267
    %v2269 = vlaneseq
    %v2270 = vshrl.u32 %v2269, 7
    %v2271 = vsub.s32 %v2268, %v2270
    %v2272 = vrot.slane %v2258, %v2271
    %v2273 = vcombine.high %v2265, %v2265
    %v2274 = vcombine.high %v2272, %v2272
    %v2275 = vcombine.high %v2037, %v2037
    %v2277 = vunpack.c.l.s4 1983009808
    %v2278 = vunpack.c.0.s8 %v2277
    %v2279 = vlaneseq
    %v2280 = vshrl.u32 %v2279, 7
    %v2281 = vsub.s32 %v2278, %v2280
    %v2282 = vrot.slane %v2037, %v2281
    %v2284 = vunpack.c.l.s4 1983009808
    %v2285 = vunpack.c.0.s8 %v2284
    %v2286 = vlaneseq
    %v2287 = vshrl.u32 %v2286, 7
    %v2288 = vsub.s32 %v2285, %v2287
    %v2289 = vrot.slane %v2275, %v2288
    %v2290 = vcombine.high %v2282, %v2282
    %v2291 = vcombine.high %v2289, %v2289
    %v2348 = vadd.f32 %v1349, %v2061
    %v2349 = vadd.f32 %v1357, %v2069
    %v2350 = vadd.f32 %v1356, %v2068
    %v2351 = vadd.f32 %v1358, %v2070
    %v2352 = vadd.f32 %v1366, %v2078
    %v2353 = vadd.f32 %v1374, %v2086
    %v2354 = vadd.f32 %v1373, %v2085
    %v2355 = vadd.f32 %v1375, %v2087
    %v2356 = vadd.f32 %v1383, %v2095
    %v2357 = vadd.f32 %v1391, %v2103
    %v2358 = vadd.f32 %v1390, %v2102
    %v2359 = vadd.f32 %v1392, %v2104
    %v2360 = vadd.f32 %v1400, %v2112
    %v2361 = vadd.f32 %v1408, %v2120
    %v2362 = vadd.f32 %v1407, %v2119
    %v2363 = vadd.f32 %v1409, %v2121
    %v2364 = vadd.f32 %v1417, %v2129
    %v2365 = vadd.f32 %v1425, %v2137
    %v2366 = vadd.f32 %v1424, %v2136
    %v2367 = vadd.f32 %v1426, %v2138
    %v2368 = vadd.f32 %v1434, %v2146
    %v2369 = vadd.f32 %v1442, %v2154
    %v2370 = vadd.f32 %v1441, %v2153
    %v2371 = vadd.f32 %v1443, %v2155
    %v2372 = vadd.f32 %v1451, %v2163
    %v2373 = vadd.f32 %v1459, %v2171
    %v2374 = vadd.f32 %v1458, %v2170
    %v2375 = vadd.f32 %v1460, %v2172
    %v2376 = vadd.f32 %v1468, %v2180
    %v2377 = vadd.f32 %v1476, %v2188
    %v2378 = vadd.f32 %v1475, %v2187
    %v2379 = vadd.f32 %v1477, %v2189
    %v2380 = vadd.f32 %v1485, %v2197
    %v2381 = vadd.f32 %v1493, %v2205
    %v2382 = vadd.f32 %v1492, %v2204
    %v2383 = vadd.f32 %v1494, %v2206
    %v2384 = vadd.f32 %v1502, %v2214
    %v2385 = vadd.f32 %v1510, %v2222
    %v2386 = vadd.f32 %v1509, %v2221
    %v2387 = vadd.f32 %v1511, %v2223
    %v2388 = vadd.f32 %v1519, %v2231
    %v2389 = vadd.f32 %v1527, %v2239
    %v2390 = vadd.f32 %v1526, %v2238
    %v2391 = vadd.f32 %v1528, %v2240
    %v2392 = vadd.f32 %v1536, %v2248
    %v2393 = vadd.f32 %v1544, %v2256
    %v2394 = vadd.f32 %v1543, %v2255
    %v2395 = vadd.f32 %v1545, %v2257
    %v2396 = vadd.f32 %v1553, %v2265
    %v2397 = vadd.f32 %v1561, %v2273
    %v2398 = vadd.f32 %v1560, %v2272
    %v2399 = vadd.f32 %v1562, %v2274
    %v2400 = vadd.f32 %v1570, %v2282
    %v2401 = vadd.f32 %v1578, %v2290
    %v2402 = vadd.f32 %v1577, %v2289
    %v2403 = vadd.f32 %v1579, %v2291
    %v2404 = vld [vmem:[%s2] sm:$0x1]
    %v2406 = vlaneseq
    %v2407 = vshrl.u32 %v2406, 7
    %v2408 = vsub.s32 0, %v2407
    %v2409 = vrot.slane %v2404, %v2408
    %v2410 = vcombine.high %v2409, %v2409
    %v2412 = vunpack.c.l.s4 1983009808
    %v2413 = vunpack.c.0.s8 %v2412
    %v2414 = vlaneseq
    %v2415 = vshrl.u32 %v2414, 7
    %v2416 = vsub.s32 %v2413, %v2415
    %v2417 = vrot.slane %v2409, %v2416
    %v2419 = vunpack.c.l.s4 1983009808
    %v2420 = vunpack.c.0.s8 %v2419
    %v2421 = vlaneseq
    %v2422 = vshrl.u32 %v2421, 7
    %v2423 = vsub.s32 %v2420, %v2422
    %v2424 = vrot.slane %v2410, %v2423
    %v2425 = vcombine.high %v2417, %v2417
    %v2426 = vcombine.high %v2424, %v2424
    %v2431 = vadd.f32 %v2348, %v2417
    %v2432 = vadd.f32 %v2349, %v2425
    %v2433 = vadd.f32 %v2350, %v2424
    %v2434 = vadd.f32 %v2351, %v2426
    %v2435 = vadd.f32 %v2352, %v2417
    %v2436 = vadd.f32 %v2353, %v2425
    %v2437 = vadd.f32 %v2354, %v2424
    %v2438 = vadd.f32 %v2355, %v2417
    %v2439 = vadd.f32 %v2356, %v2425
    %v2440 = vadd.f32 %v2357, %v2424
    %v2441 = vadd.f32 %v2358, %v2426
    %v2442 = vadd.f32 %v2359, %v2417
    %v2443 = vadd.f32 %v2360, %v2425
    %v2444 = vadd.f32 %v2361, %v2424
    %v2445 = vadd.f32 %v2362, %v2417
    %v2446 = vadd.f32 %v2363, %v2425
    %v2447 = vadd.f32 %v2364, %v2424
    %v2448 = vadd.f32 %v2365, %v2426
    %v2449 = vadd.f32 %v2366, %v2417
    %v2450 = vadd.f32 %v2367, %v2425
    %v2451 = vadd.f32 %v2368, %v2424
    %v2452 = vadd.f32 %v2369, %v2417
    %v2453 = vadd.f32 %v2370, %v2425
    %v2454 = vadd.f32 %v2371, %v2424
    %v2455 = vadd.f32 %v2372, %v2426
    %v2456 = vadd.f32 %v2373, %v2417
    %v2457 = vadd.f32 %v2374, %v2425
    %v2458 = vadd.f32 %v2375, %v2424
    %v2459 = vadd.f32 %v2376, %v2417
    %v2460 = vadd.f32 %v2377, %v2425
    %v2461 = vadd.f32 %v2378, %v2424
    %v2462 = vadd.f32 %v2379, %v2426
    %v2463 = vadd.f32 %v2380, %v2417
    %v2464 = vadd.f32 %v2381, %v2425
    %v2465 = vadd.f32 %v2382, %v2424
    %v2466 = vadd.f32 %v2383, %v2417
    %v2467 = vadd.f32 %v2384, %v2425
    %v2468 = vadd.f32 %v2385, %v2424
    %v2469 = vadd.f32 %v2386, %v2426
    %v2470 = vadd.f32 %v2387, %v2417
    %v2471 = vadd.f32 %v2388, %v2425
    %v2472 = vadd.f32 %v2389, %v2424
    %v2473 = vadd.f32 %v2390, %v2417
    %v2474 = vadd.f32 %v2391, %v2425
    %v2475 = vadd.f32 %v2392, %v2424
    %v2476 = vadd.f32 %v2393, %v2426
    %v2477 = vadd.f32 %v2394, %v2417
    %v2478 = vadd.f32 %v2395, %v2425
    %v2479 = vadd.f32 %v2396, %v2424
    %v2480 = vadd.f32 %v2397, %v2417
    %v2481 = vadd.f32 %v2398, %v2425
    %v2482 = vadd.f32 %v2399, %v2424
    %v2483 = vadd.f32 %v2400, %v2426
    %v2484 = vadd.f32 %v2401, %v2417
    %v2485 = vadd.f32 %v2402, %v2425
    %v2486 = vadd.f32 %v2403, %v2424
    %v2487 = vmax.f32 %v2431, 0.0
    %v2488 = vmax.f32 %v2432, 0.0
    %v2489 = vmax.f32 %v2433, 0.0
    %v2490 = vmax.f32 %v2434, 0.0
    %v2491 = vmax.f32 %v2435, 0.0
    %v2492 = vmax.f32 %v2436, 0.0
    %v2493 = vmax.f32 %v2437, 0.0
    %v2494 = vmax.f32 %v2438, 0.0
    %v2495 = vmax.f32 %v2439, 0.0
    %v2496 = vmax.f32 %v2440, 0.0
    %v2497 = vmax.f32 %v2441, 0.0
    %v2498 = vmax.f32 %v2442, 0.0
    %v2499 = vmax.f32 %v2443, 0.0
    %v2500 = vmax.f32 %v2444, 0.0
    %v2501 = vmax.f32 %v2445, 0.0
    %v2502 = vmax.f32 %v2446, 0.0
    %v2503 = vmax.f32 %v2447, 0.0
    %v2504 = vmax.f32 %v2448, 0.0
    %v2505 = vmax.f32 %v2449, 0.0
    %v2506 = vmax.f32 %v2450, 0.0
    %v2507 = vmax.f32 %v2451, 0.0
    %v2508 = vmax.f32 %v2452, 0.0
    %v2509 = vmax.f32 %v2453, 0.0
    %v2510 = vmax.f32 %v2454, 0.0
    %v2511 = vmax.f32 %v2455, 0.0
    %v2512 = vmax.f32 %v2456, 0.0
    %v2513 = vmax.f32 %v2457, 0.0
    %v2514 = vmax.f32 %v2458, 0.0
    %v2515 = vmax.f32 %v2459, 0.0
    %v2516 = vmax.f32 %v2460, 0.0
    %v2517 = vmax.f32 %v2461, 0.0
    %v2518 = vmax.f32 %v2462, 0.0
    %v2519 = vmax.f32 %v2463, 0.0
    %v2520 = vmax.f32 %v2464, 0.0
    %v2521 = vmax.f32 %v2465, 0.0
    %v2522 = vmax.f32 %v2466, 0.0
    %v2523 = vmax.f32 %v2467, 0.0
    %v2524 = vmax.f32 %v2468, 0.0
    %v2525 = vmax.f32 %v2469, 0.0
    %v2526 = vmax.f32 %v2470, 0.0
    %v2527 = vmax.f32 %v2471, 0.0
    %v2528 = vmax.f32 %v2472, 0.0
    %v2529 = vmax.f32 %v2473, 0.0
    %v2530 = vmax.f32 %v2474, 0.0
    %v2531 = vmax.f32 %v2475, 0.0
    %v2532 = vmax.f32 %v2476, 0.0
    %v2533 = vmax.f32 %v2477, 0.0
    %v2534 = vmax.f32 %v2478, 0.0
    %v2535 = vmax.f32 %v2479, 0.0
    %v2536 = vmax.f32 %v2480, 0.0
    %v2537 = vmax.f32 %v2481, 0.0
    %v2538 = vmax.f32 %v2482, 0.0
    %v2539 = vmax.f32 %v2483, 0.0
    %v2540 = vmax.f32 %v2484, 0.0
    %v2541 = vmax.f32 %v2485, 0.0
    %v2542 = vmax.f32 %v2486, 0.0
    %v2543 = vld [vmem:[%s3] sm:$0xff]
    %v2544 = vld [vmem:[%s3 + $0x8] sm:$0xff]
    %v2545 = vld [vmem:[%s3 + $0x10] sm:$0xff]
    %v2546 = vld [vmem:[%s3 + $0x18] sm:$0xff]
    %v2547 = vld [vmem:[%s3 + $0x20] sm:$0xff]
    %v2548 = vld [vmem:[%s3 + $0x28] sm:$0xff]
    %v2549 = vld [vmem:[%s3 + $0x30] sm:$0xff]
    %s2550 = scalar_lea.vmem %s3, 56
    %v2551 = vld [vmem:[%s2550] sm:$0xff]
    %v2552 = vld [vmem:[%s2550 + $0x8] sm:$0xff]
    %v2553 = vld [vmem:[%s2550 + $0x10] sm:$0xff]
    %v2554 = vld [vmem:[%s2550 + $0x18] sm:$0xff]
    %v2555 = vld [vmem:[%s2550 + $0x20] sm:$0xff]
    %v2556 = vld [vmem:[%s2550 + $0x28] sm:$0xff]
    %v2557 = vld [vmem:[%s2550 + $0x30] sm:$0xff]
    %v2614 = vrot.slane %v2487, 7
    %v2615 = vrot.slane %v2614, 2
    %v2616 = vrot.slane %v2488, 7
    %v2617 = vsel %vm348, %v2615, %v2616
    %v2618 = vrot.slane %v2616, 2
    %v2619 = vrot.slane %v2489, 7
    %v2620 = vsel %vm348, %v2618, %v2619
    %v2621 = vrot.slane %v2619, 2
    %v2622 = vrot.slane %v2490, 7
    %v2623 = vsel %vm348, %v2621, %v2622
    %v2624 = vrot.slane %v2622, 2
    %v2625 = vrot.slane %v2491, 7
    %v2626 = vsel %vm348, %v2624, %v2625
    %v2627 = vrot.slane %v2625, 2
    %v2628 = vrot.slane %v2492, 7
    %v2629 = vsel %vm348, %v2627, %v2628
    %v2630 = vrot.slane %v2628, 2
    %v2631 = vrot.slane %v2493, 7
    %v2632 = vsel %vm348, %v2630, %v2631
    %v2633 = vrot.slane %v2494, 7
    %v2634 = vrot.slane %v2633, 2
    %v2635 = vrot.slane %v2495, 7
    %v2636 = vsel %vm348, %v2634, %v2635
    %v2637 = vrot.slane %v2635, 2
    %v2638 = vrot.slane %v2496, 7
    %v2639 = vsel %vm348, %v2637, %v2638
    %v2640 = vrot.slane %v2638, 2
    %v2641 = vrot.slane %v2497, 7
    %v2642 = vsel %vm348, %v2640, %v2641
    %v2643 = vrot.slane %v2641, 2
    %v2644 = vrot.slane %v2498, 7
    %v2645 = vsel %vm348, %v2643, %v2644
    %v2646 = vrot.slane %v2644, 2
    %v2647 = vrot.slane %v2499, 7
    %v2648 = vsel %vm348, %v2646, %v2647
    %v2649 = vrot.slane %v2647, 2
    %v2650 = vrot.slane %v2500, 7
    %v2651 = vsel %vm348, %v2649, %v2650
    %v2652 = vrot.slane %v2501, 7
    %v2653 = vrot.slane %v2652, 2
    %v2654 = vrot.slane %v2502, 7
    %v2655 = vsel %vm348, %v2653, %v2654
    %v2656 = vrot.slane %v2654, 2
    %v2657 = vrot.slane %v2503, 7
    %v2658 = vsel %vm348, %v2656, %v2657
    %v2659 = vrot.slane %v2657, 2
    %v2660 = vrot.slane %v2504, 7
    %v2661 = vsel %vm348, %v2659, %v2660
    %v2662 = vrot.slane %v2660, 2
    %v2663 = vrot.slane %v2505, 7
    %v2664 = vsel %vm348, %v2662, %v2663
    %v2665 = vrot.slane %v2663, 2
    %v2666 = vrot.slane %v2506, 7
    %v2667 = vsel %vm348, %v2665, %v2666
    %v2668 = vrot.slane %v2666, 2
    %v2669 = vrot.slane %v2507, 7
    %v2670 = vsel %vm348, %v2668, %v2669
    %v2671 = vrot.slane %v2508, 7
    %v2672 = vrot.slane %v2671, 2
    %v2673 = vrot.slane %v2509, 7
    %v2674 = vsel %vm348, %v2672, %v2673
    %v2675 = vrot.slane %v2673, 2
    %v2676 = vrot.slane %v2510, 7
    %v2677 = vsel %vm348, %v2675, %v2676
    %v2678 = vrot.slane %v2676, 2
    %v2679 = vrot.slane %v2511, 7
    %v2680 = vsel %vm348, %v2678, %v2679
    %v2681 = vrot.slane %v2679, 2
    %v2682 = vrot.slane %v2512, 7
    %v2683 = vsel %vm348, %v2681, %v2682
    %v2684 = vrot.slane %v2682, 2
    %v2685 = vrot.slane %v2513, 7
    %v2686 = vsel %vm348, %v2684, %v2685
    %v2687 = vrot.slane %v2685, 2
    %v2688 = vrot.slane %v2514, 7
    %v2689 = vsel %vm348, %v2687, %v2688
    %v2690 = vrot.slane %v2515, 7
    %v2691 = vrot.slane %v2690, 2
    %v2692 = vrot.slane %v2516, 7
    %v2693 = vsel %vm348, %v2691, %v2692
    %v2694 = vrot.slane %v2692, 2
    %v2695 = vrot.slane %v2517, 7
    %v2696 = vsel %vm348, %v2694, %v2695
    %v2697 = vrot.slane %v2695, 2
    %v2698 = vrot.slane %v2518, 7
    %v2699 = vsel %vm348, %v2697, %v2698
    %v2700 = vrot.slane %v2698, 2
    %v2701 = vrot.slane %v2519, 7
    %v2702 = vsel %vm348, %v2700, %v2701
    %v2703 = vrot.slane %v2701, 2
    %v2704 = vrot.slane %v2520, 7
    %v2705 = vsel %vm348, %v2703, %v2704
    %v2706 = vrot.slane %v2704, 2
    %v2707 = vrot.slane %v2521, 7
    %v2708 = vsel %vm348, %v2706, %v2707
    %v2709 = vrot.slane %v2522, 7
    %v2710 = vrot.slane %v2709, 2
    %v2711 = vrot.slane %v2523, 7
    %v2712 = vsel %vm348, %v2710, %v2711
    %v2713 = vrot.slane %v2711, 2
    %v2714 = vrot.slane %v2524, 7
    %v2715 = vsel %vm348, %v2713, %v2714
    %v2716 = vrot.slane %v2714, 2
    %v2717 = vrot.slane %v2525, 7
    %v2718 = vsel %vm348, %v2716, %v2717
    %v2719 = vrot.slane %v2717, 2
    %v2720 = vrot.slane %v2526, 7
    %v2721 = vsel %vm348, %v2719, %v2720
    %v2722 = vrot.slane %v2720, 2
    %v2723 = vrot.slane %v2527, 7
    %v2724 = vsel %vm348, %v2722, %v2723
    %v2725 = vrot.slane %v2723, 2
    %v2726 = vrot.slane %v2528, 7
    %v2727 = vsel %vm348, %v2725, %v2726
    %v2728 = vrot.slane %v2529, 7
    %v2729 = vrot.slane %v2728, 2
    %v2730 = vrot.slane %v2530, 7
    %v2731 = vsel %vm348, %v2729, %v2730
    %v2732 = vrot.slane %v2730, 2
    %v2733 = vrot.slane %v2531, 7
    %v2734 = vsel %vm348, %v2732, %v2733
    %v2735 = vrot.slane %v2733, 2
    %v2736 = vrot.slane %v2532, 7
    %v2737 = vsel %vm348, %v2735, %v2736
    %v2738 = vrot.slane %v2736, 2
    %v2739 = vrot.slane %v2533, 7
    %v2740 = vsel %vm348, %v2738, %v2739
    %v2741 = vrot.slane %v2739, 2
    %v2742 = vrot.slane %v2534, 7
    %v2743 = vsel %vm348, %v2741, %v2742
    %v2744 = vrot.slane %v2742, 2
    %v2745 = vrot.slane %v2535, 7
    %v2746 = vsel %vm348, %v2744, %v2745
    %v2747 = vrot.slane %v2536, 7
    %v2748 = vrot.slane %v2747, 2
    %v2749 = vrot.slane %v2537, 7
    %v2750 = vsel %vm348, %v2748, %v2749
    %v2751 = vrot.slane %v2749, 2
    %v2752 = vrot.slane %v2538, 7
    %v2753 = vsel %vm348, %v2751, %v2752
    %v2754 = vrot.slane %v2752, 2
    %v2755 = vrot.slane %v2539, 7
    %v2756 = vsel %vm348, %v2754, %v2755
    %v2757 = vrot.slane %v2755, 2
    %v2758 = vrot.slane %v2540, 7
    %v2759 = vsel %vm348, %v2757, %v2758
    %v2760 = vrot.slane %v2758, 2
    %v2761 = vrot.slane %v2541, 7
    %v2762 = vsel %vm348, %v2760, %v2761
    %v2763 = vrot.slane %v2761, 2
    %v2764 = vrot.slane %v2542, 7
    %v2765 = vsel %vm348, %v2763, %v2764
    %v2766 = vcombine.low %v2617, %v2620
    %v2767 = vcombine.low %v2623, %v2626
    %v2769 = vunpack.c.l.s4 1983009808
    %v2770 = vunpack.c.0.s8 %v2769
    %v2771 = vlaneseq
    %v2772 = vshrl.u32 %v2771, 7
    %v2773 = vsub.s32 %v2770, %v2772
    %v2774 = vrot.slane %v2766, %v2773
    %v2776 = vunpack.c.l.s4 1983009808
    %v2777 = vunpack.c.0.s8 %v2776
    %v2778 = vlaneseq
    %v2779 = vshrl.u32 %v2778, 7
    %v2780 = vsub.s32 %v2777, %v2779
    %v2781 = vrot.slane %v2767, %v2780
    %v2782 = vcombine.low %v2774, %v2781
    %v2783 = vcombine.low %v2629, %v2632
    %v2784 = vcombine.low %v2636, %v2639
    %v2786 = vunpack.c.l.s4 1983009808
    %v2787 = vunpack.c.0.s8 %v2786
    %v2788 = vlaneseq
    %v2789 = vshrl.u32 %v2788, 7
    %v2790 = vsub.s32 %v2787, %v2789
    %v2791 = vrot.slane %v2783, %v2790
    %v2793 = vunpack.c.l.s4 1983009808
    %v2794 = vunpack.c.0.s8 %v2793
    %v2795 = vlaneseq
    %v2796 = vshrl.u32 %v2795, 7
    %v2797 = vsub.s32 %v2794, %v2796
    %v2798 = vrot.slane %v2784, %v2797
    %v2799 = vcombine.low %v2791, %v2798
    %v2800 = vcombine.low %v2642, %v2645
    %v2801 = vcombine.low %v2648, %v2651
    %v2803 = vunpack.c.l.s4 1983009808
    %v2804 = vunpack.c.0.s8 %v2803
    %v2805 = vlaneseq
    %v2806 = vshrl.u32 %v2805, 7
    %v2807 = vsub.s32 %v2804, %v2806
    %v2808 = vrot.slane %v2800, %v2807
    %v2810 = vunpack.c.l.s4 1983009808
    %v2811 = vunpack.c.0.s8 %v2810
    %v2812 = vlaneseq
    %v2813 = vshrl.u32 %v2812, 7
    %v2814 = vsub.s32 %v2811, %v2813
    %v2815 = vrot.slane %v2801, %v2814
    %v2816 = vcombine.low %v2808, %v2815
    %v2817 = vcombine.low %v2655, %v2658
    %v2818 = vcombine.low %v2661, %v2664
    %v2820 = vunpack.c.l.s4 1983009808
    %v2821 = vunpack.c.0.s8 %v2820
    %v2822 = vlaneseq
    %v2823 = vshrl.u32 %v2822, 7
    %v2824 = vsub.s32 %v2821, %v2823
    %v2825 = vrot.slane %v2817, %v2824
    %v2827 = vunpack.c.l.s4 1983009808
    %v2828 = vunpack.c.0.s8 %v2827
    %v2829 = vlaneseq
    %v2830 = vshrl.u32 %v2829, 7
    %v2831 = vsub.s32 %v2828, %v2830
    %v2832 = vrot.slane %v2818, %v2831
    %v2833 = vcombine.low %v2825, %v2832
    %v2834 = vcombine.low %v2667, %v2670
    %v2835 = vcombine.low %v2674, %v2677
    %v2837 = vunpack.c.l.s4 1983009808
    %v2838 = vunpack.c.0.s8 %v2837
    %v2839 = vlaneseq
    %v2840 = vshrl.u32 %v2839, 7
    %v2841 = vsub.s32 %v2838, %v2840
    %v2842 = vrot.slane %v2834, %v2841
    %v2844 = vunpack.c.l.s4 1983009808
    %v2845 = vunpack.c.0.s8 %v2844
    %v2846 = vlaneseq
    %v2847 = vshrl.u32 %v2846, 7
    %v2848 = vsub.s32 %v2845, %v2847
    %v2849 = vrot.slane %v2835, %v2848
    %v2850 = vcombine.low %v2842, %v2849
    %v2851 = vcombine.low %v2680, %v2683
    %v2852 = vcombine.low %v2686, %v2689
    %v2854 = vunpack.c.l.s4 1983009808
    %v2855 = vunpack.c.0.s8 %v2854
    %v2856 = vlaneseq
    %v2857 = vshrl.u32 %v2856, 7
    %v2858 = vsub.s32 %v2855, %v2857
    %v2859 = vrot.slane %v2851, %v2858
    %v2861 = vunpack.c.l.s4 1983009808
    %v2862 = vunpack.c.0.s8 %v2861
    %v2863 = vlaneseq
    %v2864 = vshrl.u32 %v2863, 7
    %v2865 = vsub.s32 %v2862, %v2864
    %v2866 = vrot.slane %v2852, %v2865
    %v2867 = vcombine.low %v2859, %v2866
    %v2868 = vcombine.low %v2693, %v2696
    %v2869 = vcombine.low %v2699, %v2702
    %v2871 = vunpack.c.l.s4 1983009808
    %v2872 = vunpack.c.0.s8 %v2871
    %v2873 = vlaneseq
    %v2874 = vshrl.u32 %v2873, 7
    %v2875 = vsub.s32 %v2872, %v2874
    %v2876 = vrot.slane %v2868, %v2875
    %v2878 = vunpack.c.l.s4 1983009808
    %v2879 = vunpack.c.0.s8 %v2878
    %v2880 = vlaneseq
    %v2881 = vshrl.u32 %v2880, 7
    %v2882 = vsub.s32 %v2879, %v2881
    %v2883 = vrot.slane %v2869, %v2882
    %v2884 = vcombine.low %v2876, %v2883
    %v2885 = vcombine.low %v2705, %v2708
    %v2886 = vcombine.low %v2712, %v2715
    %v2888 = vunpack.c.l.s4 1983009808
    %v2889 = vunpack.c.0.s8 %v2888
    %v2890 = vlaneseq
    %v2891 = vshrl.u32 %v2890, 7
    %v2892 = vsub.s32 %v2889, %v2891
    %v2893 = vrot.slane %v2885, %v2892
    %v2895 = vunpack.c.l.s4 1983009808
    %v2896 = vunpack.c.0.s8 %v2895
    %v2897 = vlaneseq
    %v2898 = vshrl.u32 %v2897, 7
    %v2899 = vsub.s32 %v2896, %v2898
    %v2900 = vrot.slane %v2886, %v2899
    %v2901 = vcombine.low %v2893, %v2900
    %v2902 = vcombine.low %v2718, %v2721
    %v2903 = vcombine.low %v2724, %v2727
    %v2905 = vunpack.c.l.s4 1983009808
    %v2906 = vunpack.c.0.s8 %v2905
    %v2907 = vlaneseq
    %v2908 = vshrl.u32 %v2907, 7
    %v2909 = vsub.s32 %v2906, %v2908
    %v2910 = vrot.slane %v2902, %v2909
    %v2912 = vunpack.c.l.s4 1983009808
    %v2913 = vunpack.c.0.s8 %v2912
    %v2914 = vlaneseq
    %v2915 = vshrl.u32 %v2914, 7
    %v2916 = vsub.s32 %v2913, %v2915
    %v2917 = vrot.slane %v2903, %v2916
    %v2918 = vcombine.low %v2910, %v2917
    %v2919 = vcombine.low %v2731, %v2734
    %v2920 = vcombine.low %v2737, %v2740
    %v2922 = vunpack.c.l.s4 1983009808
    %v2923 = vunpack.c.0.s8 %v2922
    %v2924 = vlaneseq
    %v2925 = vshrl.u32 %v2924, 7
    %v2926 = vsub.s32 %v2923, %v2925
    %v2927 = vrot.slane %v2919, %v2926
    %v2929 = vunpack.c.l.s4 1983009808
    %v2930 = vunpack.c.0.s8 %v2929
    %v2931 = vlaneseq
    %v2932 = vshrl.u32 %v2931, 7
    %v2933 = vsub.s32 %v2930, %v2932
    %v2934 = vrot.slane %v2920, %v2933
    %v2935 = vcombine.low %v2927, %v2934
    %v2936 = vcombine.low %v2743, %v2746
    %v2937 = vcombine.low %v2750, %v2753
    %v2939 = vunpack.c.l.s4 1983009808
    %v2940 = vunpack.c.0.s8 %v2939
    %v2941 = vlaneseq
    %v2942 = vshrl.u32 %v2941, 7
    %v2943 = vsub.s32 %v2940, %v2942
    %v2944 = vrot.slane %v2936, %v2943
    %v2946 = vunpack.c.l.s4 1983009808
    %v2947 = vunpack.c.0.s8 %v2946
    %v2948 = vlaneseq
    %v2949 = vshrl.u32 %v2948, 7
    %v2950 = vsub.s32 %v2947, %v2949
    %v2951 = vrot.slane %v2937, %v2950
    %v2952 = vcombine.low %v2944, %v2951
    %v2953 = vcombine.low %v2756, %v2759
    %v2954 = vcombine.low %v2762, %v2765
    %v2956 = vunpack.c.l.s4 1983009808
    %v2957 = vunpack.c.0.s8 %v2956
    %v2958 = vlaneseq
    %v2959 = vshrl.u32 %v2958, 7
    %v2960 = vsub.s32 %v2957, %v2959
    %v2961 = vrot.slane %v2953, %v2960
    %v2963 = vunpack.c.l.s4 1983009808
    %v2964 = vunpack.c.0.s8 %v2963
    %v2965 = vlaneseq
    %v2966 = vshrl.u32 %v2965, 7
    %v2967 = vsub.s32 %v2964, %v2966
    %v2968 = vrot.slane %v2954, %v2967
    %v2969 = vcombine.low %v2961, %v2968
    %vm2970 = vcmask 457728
    %v2971 = vsel %vm2970, %v2782, 0
    %v2973 = vsel %vm2970, %v2799, 0
    %v2975 = vsel %vm2970, %v2816, 0
    %v2977 = vsel %vm2970, %v2833, 0
    %v2979 = vsel %vm2970, %v2850, 0
    %v2981 = vsel %vm2970, %v2867, 0
    %v2983 = vsel %vm2970, %v2884, 0
    %v2985 = vsel %vm2970, %v2901, 0
    %v2987 = vsel %vm2970, %v2918, 0
    %v2989 = vsel %vm2970, %v2935, 0
    %v2991 = vsel %vm2970, %v2952, 0
    %v2993 = vsel %vm2970, %v2969, 0
    %2995 = vmatprep.subr.mxu0 0.0
    %2996 = vmatpush1.msra.mxu0 %v2551
    %2997 = vmatprep.subr.mxu0 0.0
    %2998 = vmatpush1.msra.mxu0 %v2552
    %2999 = vmatprep.subr.mxu0 0.0
    %3000 = vmatpush1.msra.mxu0 %v2553
    %3001 = vmatprep.subr.mxu0 0.0
    %3002 = vmatpush1.msra.mxu0 %v2554
    %3003 = vmatprep.subr.mxu0 0.0
    %3004 = vmatpush1.msra.mxu0 %v2555
    %3005 = vmatprep.subr.mxu0 0.0
    %3006 = vmatpush1.msra.mxu0 %v2556
    %3007 = vmatprep.subr.mxu0 0.0
    %3008 = vmatpush1.msra.mxu0 %v2557
    %3009 = vmatprep.subr.mxu0 0.0
    %3010 = vmatpush1.msra.mxu0 0.0
    %3011 = vmatprep.subr.mxu0 0.0
    %3012 = vmatpush1.msra.mxu0 0.0
    %3013 = vmatprep.subr.mxu0 0.0
    %3014 = vmatpush1.msra.mxu0 0.0
    %3015 = vmatprep.subr.mxu0 0.0
    %3016 = vmatpush1.msra.mxu0 0.0
    %3017 = vmatprep.subr.mxu0 0.0
    %3018 = vmatpush1.msra.mxu0 0.0
    %3019 = vmatprep.subr.mxu0 0.0
    %3020 = vmatpush1.msra.mxu0 0.0
    %3021 = vmatprep.subr.mxu0 0.0
    %3022 = vmatpush1.msra.mxu0 0.0
    %3023 = vmatprep.subr.mxu0 0.0
    %3024 = vmatpush1.msra.mxu0 0.0
    %3025 = vmatprep.subr.mxu0 0.0
    %3026 = vmatpush1.msra.mxu0 0.0
    %3027 = vmatprep.subr.mxu0 0.0
    %3028 = vmatpush1.msra.mxu0 0.0
    %3029 = vmatprep.subr.mxu0 0.0
    %3030 = vmatpush1.msra.mxu0 0.0
    %3031 = vmatprep.subr.mxu0 0.0
    %3032 = vmatpush1.msra.mxu0 0.0
    %3033 = vmatprep.subr.mxu0 0.0
    %3034 = vmatpush1.msra.mxu0 0.0
    %3035 = vmatprep.subr.mxu0 0.0
    %3036 = vmatpush1.msra.mxu0 0.0
    %3037 = vmatprep.subr.mxu0 0.0
    %3038 = vmatpush1.msra.mxu0 0.0
    %3039 = vmatprep.subr.mxu0 0.0
    %3040 = vmatpush1.msra.mxu0 0.0
    %3041 = vmatprep.subr.mxu0 0.0
    %3042 = vmatpush1.msra.mxu0 0.0
    %3043 = vmatprep.subr.mxu0 0.0
    %3044 = vmatpush1.msra.mxu0 0.0
    %3045 = vmatprep.subr.mxu0 0.0
    %3046 = vmatpush1.msra.mxu0 0.0
    %3047 = vmatprep.subr.mxu0 0.0
    %3048 = vmatpush1.msra.mxu0 0.0
    %3049 = vmatprep.subr.mxu0 0.0
    %3050 = vmatpush1.msra.mxu0 0.0
    %3051 = vmatprep.subr.mxu0 0.0
    %3052 = vmatpush1.msra.mxu0 0.0
    %3053 = vmatprep.subr.mxu0 0.0
    %3054 = vmatpush1.msra.mxu0 0.0
    %3055 = vmatprep.subr.mxu0 0.0
    %3056 = vmatpush1.msra.mxu0 0.0
    %3057 = vmatprep.subr.mxu0 0.0
    %3058 = vmatpush1.msra.mxu0 0.0
    %3059 = vmatprep.mubr.f32.mxu0 0.0
    %3060 = vmatmul.mubr.f32.gmra.mrb[0].mxu0 %v2971
    %v3061 = vpop.f32.mrb[0].mxu0
    %v3062 = vadd.f32 0.0, %v3061
    %v3063 = vpop.f32.mrb[0].mxu0
    %3064 = vmatprep.mubr.f32.mxu0 0.0
    %3065 = vmatmul.mubr.f32.gmra.mrb[0].mxu0 %v2973
    %v3066 = vpop.f32.mrb[0].mxu0
    %v3067 = vadd.f32 0.0, %v3066
    %v3068 = vpop.f32.mrb[0].mxu0
    %3069 = vmatprep.mubr.f32.mxu0 0.0
    %3070 = vmatmul.mubr.f32.gmra.mrb[0].mxu0 %v2975
    %v3071 = vpop.f32.mrb[0].mxu0
    %v3072 = vadd.f32 0.0, %v3071
    %v3073 = vpop.f32.mrb[0].mxu0
    %3074 = vmatprep.mubr.f32.mxu0 0.0
    %3075 = vmatmul.mubr.f32.gmra.mrb[0].mxu0 %v2977
    %v3076 = vpop.f32.mrb[0].mxu0
    %v3077 = vadd.f32 0.0, %v3076
    %v3078 = vpop.f32.mrb[0].mxu0
    %3079 = vmatprep.mubr.f32.mxu0 0.0
    %3080 = vmatmul.mubr.f32.gmra.mrb[0].mxu0 %v2979
    %v3081 = vpop.f32.mrb[0].mxu0
    %v3082 = vadd.f32 0.0, %v3081
    %v3083 = vpop.f32.mrb[0].mxu0
    %3084 = vmatprep.mubr.f32.mxu0 0.0
    %3085 = vmatmul.mubr.f32.gmra.mrb[0].mxu0 %v2981
    %v3086 = vpop.f32.mrb[0].mxu0
    %v3087 = vadd.f32 0.0, %v3086
    %v3088 = vpop.f32.mrb[0].mxu0
    %3089 = vmatprep.mubr.f32.mxu0 0.0
    %3090 = vmatmul.mubr.f32.gmra.mrb[0].mxu0 %v2983
    %v3091 = vpop.f32.mrb[0].mxu0
    %v3092 = vadd.f32 0.0, %v3091
    %v3093 = vpop.f32.mrb[0].mxu0
    %3094 = vmatprep.mubr.f32.mxu0 0.0
    %3095 = vmatmul.mubr.f32.gmra.mrb[0].mxu0 %v2985
    %v3096 = vpop.f32.mrb[0].mxu0
    %v3097 = vadd.f32 0.0, %v3096
    %v3098 = vpop.f32.mrb[0].mxu0
    %3099 = vmatprep.mubr.f32.mxu0 0.0
    %3100 = vmatmul.mubr.f32.gmra.mrb[0].mxu0 %v2987
    %v3101 = vpop.f32.mrb[0].mxu0
    %v3102 = vadd.f32 0.0, %v3101
    %v3103 = vpop.f32.mrb[0].mxu0
    %3104 = vmatprep.mubr.f32.mxu0 0.0
    %3105 = vmatmul.mubr.f32.gmra.mrb[0].mxu0 %v2989
    %v3106 = vpop.f32.mrb[0].mxu0
    %v3107 = vadd.f32 0.0, %v3106
    %v3108 = vpop.f32.mrb[0].mxu0
    %3109 = vmatprep.mubr.f32.mxu0 0.0
    %3110 = vmatmul.mubr.f32.gmra.mrb[0].mxu0 %v2991
    %v3111 = vpop.f32.mrb[0].mxu0
    %v3112 = vadd.f32 0.0, %v3111
    %v3113 = vpop.f32.mrb[0].mxu0
    %3114 = vmatprep.mubr.f32.mxu0 0.0
    %3115 = vmatmul.mubr.f32.gmra.mrb[0].mxu0 %v2993
    %v3116 = vpop.f32.mrb[0].mxu0
    %v3117 = vadd.f32 0.0, %v3116
    %v3118 = vpop.f32.mrb[0].mxu0
    %3119 = vdwg.mxu0
    %v3120 = vcombine.low %v2487, %v2488
    %v3121 = vcombine.low %v2489, %v2490
    %v3123 = vunpack.c.l.s4 1983009808
    %v3124 = vunpack.c.0.s8 %v3123
    %v3125 = vlaneseq
    %v3126 = vshrl.u32 %v3125, 7
    %v3127 = vsub.s32 %v3124, %v3126
    %v3128 = vrot.slane %v3120, %v3127
    %v3130 = vunpack.c.l.s4 1983009808
    %v3131 = vunpack.c.0.s8 %v3130
    %v3132 = vlaneseq
    %v3133 = vshrl.u32 %v3132, 7
    %v3134 = vsub.s32 %v3131, %v3133
    %v3135 = vrot.slane %v3121, %v3134
    %v3136 = vcombine.low %v3128, %v3135
    %v3137 = vcombine.low %v2491, %v2492
    %v3138 = vcombine.low %v2494, %v2495
    %v3140 = vunpack.c.l.s4 1983009808
    %v3141 = vunpack.c.0.s8 %v3140
    %v3142 = vlaneseq
    %v3143 = vshrl.u32 %v3142, 7
    %v3144 = vsub.s32 %v3141, %v3143
    %v3145 = vrot.slane %v3137, %v3144
    %v3147 = vunpack.c.l.s4 1983009808
    %v3148 = vunpack.c.0.s8 %v3147
    %v3149 = vlaneseq
    %v3150 = vshrl.u32 %v3149, 7
    %v3151 = vsub.s32 %v3148, %v3150
    %v3152 = vrot.slane %v3138, %v3151
    %v3153 = vcombine.low %v3145, %v3152
    %v3154 = vcombine.low %v2496, %v2497
    %v3155 = vcombine.low %v2498, %v2499
    %v3157 = vunpack.c.l.s4 1983009808
    %v3158 = vunpack.c.0.s8 %v3157
    %v3159 = vlaneseq
    %v3160 = vshrl.u32 %v3159, 7
    %v3161 = vsub.s32 %v3158, %v3160
    %v3162 = vrot.slane %v3154, %v3161
    %v3164 = vunpack.c.l.s4 1983009808
    %v3165 = vunpack.c.0.s8 %v3164
    %v3166 = vlaneseq
    %v3167 = vshrl.u32 %v3166, 7
    %v3168 = vsub.s32 %v3165, %v3167
    %v3169 = vrot.slane %v3155, %v3168
    %v3170 = vcombine.low %v3162, %v3169
    %v3171 = vcombine.low %v2501, %v2502
    %v3172 = vcombine.low %v2503, %v2504
    %v3174 = vunpack.c.l.s4 1983009808
    %v3175 = vunpack.c.0.s8 %v3174
    %v3176 = vlaneseq
    %v3177 = vshrl.u32 %v3176, 7
    %v3178 = vsub.s32 %v3175, %v3177
    %v3179 = vrot.slane %v3171, %v3178
    %v3181 = vunpack.c.l.s4 1983009808
    %v3182 = vunpack.c.0.s8 %v3181
    %v3183 = vlaneseq
    %v3184 = vshrl.u32 %v3183, 7
    %v3185 = vsub.s32 %v3182, %v3184
    %v3186 = vrot.slane %v3172, %v3185
    %v3187 = vcombine.low %v3179, %v3186
    %v3188 = vcombine.low %v2505, %v2506
    %v3189 = vcombine.low %v2508, %v2509
    %v3191 = vunpack.c.l.s4 1983009808
    %v3192 = vunpack.c.0.s8 %v3191
    %v3193 = vlaneseq
    %v3194 = vshrl.u32 %v3193, 7
    %v3195 = vsub.s32 %v3192, %v3194
    %v3196 = vrot.slane %v3188, %v3195
    %v3198 = vunpack.c.l.s4 1983009808
    %v3199 = vunpack.c.0.s8 %v3198
    %v3200 = vlaneseq
    %v3201 = vshrl.u32 %v3200, 7
    %v3202 = vsub.s32 %v3199, %v3201
    %v3203 = vrot.slane %v3189, %v3202
    %v3204 = vcombine.low %v3196, %v3203
    %v3205 = vcombine.low %v2510, %v2511
    %v3206 = vcombine.low %v2512, %v2513
    %v3208 = vunpack.c.l.s4 1983009808
    %v3209 = vunpack.c.0.s8 %v3208
    %v3210 = vlaneseq
    %v3211 = vshrl.u32 %v3210, 7
    %v3212 = vsub.s32 %v3209, %v3211
    %v3213 = vrot.slane %v3205, %v3212
    %v3215 = vunpack.c.l.s4 1983009808
    %v3216 = vunpack.c.0.s8 %v3215
    %v3217 = vlaneseq
    %v3218 = vshrl.u32 %v3217, 7
    %v3219 = vsub.s32 %v3216, %v3218
    %v3220 = vrot.slane %v3206, %v3219
    %v3221 = vcombine.low %v3213, %v3220
    %v3222 = vcombine.low %v2515, %v2516
    %v3223 = vcombine.low %v2517, %v2518
    %v3225 = vunpack.c.l.s4 1983009808
    %v3226 = vunpack.c.0.s8 %v3225
    %v3227 = vlaneseq
    %v3228 = vshrl.u32 %v3227, 7
    %v3229 = vsub.s32 %v3226, %v3228
    %v3230 = vrot.slane %v3222, %v3229
    %v3232 = vunpack.c.l.s4 1983009808
    %v3233 = vunpack.c.0.s8 %v3232
    %v3234 = vlaneseq
    %v3235 = vshrl.u32 %v3234, 7
    %v3236 = vsub.s32 %v3233, %v3235
    %v3237 = vrot.slane %v3223, %v3236
    %v3238 = vcombine.low %v3230, %v3237
    %v3239 = vcombine.low %v2519, %v2520
    %v3240 = vcombine.low %v2522, %v2523
    %v3242 = vunpack.c.l.s4 1983009808
    %v3243 = vunpack.c.0.s8 %v3242
    %v3244 = vlaneseq
    %v3245 = vshrl.u32 %v3244, 7
    %v3246 = vsub.s32 %v3243, %v3245
    %v3247 = vrot.slane %v3239, %v3246
    %v3249 = vunpack.c.l.s4 1983009808
    %v3250 = vunpack.c.0.s8 %v3249
    %v3251 = vlaneseq
    %v3252 = vshrl.u32 %v3251, 7
    %v3253 = vsub.s32 %v3250, %v3252
    %v3254 = vrot.slane %v3240, %v3253
    %v3255 = vcombine.low %v3247, %v3254
    %v3256 = vcombine.low %v2524, %v2525
    %v3257 = vcombine.low %v2526, %v2527
    %v3259 = vunpack.c.l.s4 1983009808
    %v3260 = vunpack.c.0.s8 %v3259
    %v3261 = vlaneseq
    %v3262 = vshrl.u32 %v3261, 7
    %v3263 = vsub.s32 %v3260, %v3262
    %v3264 = vrot.slane %v3256, %v3263
    %v3266 = vunpack.c.l.s4 1983009808
    %v3267 = vunpack.c.0.s8 %v3266
    %v3268 = vlaneseq
    %v3269 = vshrl.u32 %v3268, 7
    %v3270 = vsub.s32 %v3267, %v3269
    %v3271 = vrot.slane %v3257, %v3270
    %v3272 = vcombine.low %v3264, %v3271
    %v3273 = vcombine.low %v2529, %v2530
    %v3274 = vcombine.low %v2531, %v2532
    %v3276 = vunpack.c.l.s4 1983009808
    %v3277 = vunpack.c.0.s8 %v3276
    %v3278 = vlaneseq
    %v3279 = vshrl.u32 %v3278, 7
    %v3280 = vsub.s32 %v3277, %v3279
    %v3281 = vrot.slane %v3273, %v3280
    %v3283 = vunpack.c.l.s4 1983009808
    %v3284 = vunpack.c.0.s8 %v3283
    %v3285 = vlaneseq
    %v3286 = vshrl.u32 %v3285, 7
    %v3287 = vsub.s32 %v3284, %v3286
    %v3288 = vrot.slane %v3274, %v3287
    %v3289 = vcombine.low %v3281, %v3288
    %v3290 = vcombine.low %v2533, %v2534
    %v3291 = vcombine.low %v2536, %v2537
    %v3293 = vunpack.c.l.s4 1983009808
    %v3294 = vunpack.c.0.s8 %v3293
    %v3295 = vlaneseq
    %v3296 = vshrl.u32 %v3295, 7
    %v3297 = vsub.s32 %v3294, %v3296
    %v3298 = vrot.slane %v3290, %v3297
    %v3300 = vunpack.c.l.s4 1983009808
    %v3301 = vunpack.c.0.s8 %v3300
    %v3302 = vlaneseq
    %v3303 = vshrl.u32 %v3302, 7
    %v3304 = vsub.s32 %v3301, %v3303
    %v3305 = vrot.slane %v3291, %v3304
    %v3306 = vcombine.low %v3298, %v3305
    %v3307 = vcombine.low %v2538, %v2539
    %v3308 = vcombine.low %v2540, %v2541
    %v3310 = vunpack.c.l.s4 1983009808
    %v3311 = vunpack.c.0.s8 %v3310
    %v3312 = vlaneseq
    %v3313 = vshrl.u32 %v3312, 7
    %v3314 = vsub.s32 %v3311, %v3313
    %v3315 = vrot.slane %v3307, %v3314
    %v3317 = vunpack.c.l.s4 1983009808
    %v3318 = vunpack.c.0.s8 %v3317
    %v3319 = vlaneseq
    %v3320 = vshrl.u32 %v3319, 7
    %v3321 = vsub.s32 %v3318, %v3320
    %v3322 = vrot.slane %v3308, %v3321
    %v3323 = vcombine.low %v3315, %v3322
    %v3324 = vsel %vm2970, %v3136, 0
    %v3326 = vsel %vm2970, %v3153, 0
    %v3328 = vsel %vm2970, %v3170, 0
    %v3330 = vsel %vm2970, %v3187, 0
    %v3332 = vsel %vm2970, %v3204, 0
    %v3334 = vsel %vm2970, %v3221, 0
    %v3336 = vsel %vm2970, %v3238, 0
    %v3338 = vsel %vm2970, %v3255, 0
    %v3340 = vsel %vm2970, %v3272, 0
    %v3342 = vsel %vm2970, %v3289, 0
    %v3344 = vsel %vm2970, %v3306, 0
    %v3346 = vsel %vm2970, %v3323, 0
    %3348 = vmatprep.subr.mxu0 0.0
    %3349 = vmatpush1.msra.mxu0 %v2543
    %3350 = vmatprep.subr.mxu0 0.0
    %3351 = vmatpush1.msra.mxu0 %v2544
    %3352 = vmatprep.subr.mxu0 0.0
    %3353 = vmatpush1.msra.mxu0 %v2545
    %3354 = vmatprep.subr.mxu0 0.0
    %3355 = vmatpush1.msra.mxu0 %v2546
    %3356 = vmatprep.subr.mxu0 0.0
    %3357 = vmatpush1.msra.mxu0 %v2547
    %3358 = vmatprep.subr.mxu0 0.0
    %3359 = vmatpush1.msra.mxu0 %v2548
    %3360 = vmatprep.subr.mxu0 0.0
    %3361 = vmatpush1.msra.mxu0 %v2549
    %3362 = vmatprep.subr.mxu0 0.0
    %3363 = vmatpush1.msra.mxu0 0.0
    %3364 = vmatprep.subr.mxu0 0.0
    %3365 = vmatpush1.msra.mxu0 0.0
    %3366 = vmatprep.subr.mxu0 0.0
    %3367 = vmatpush1.msra.mxu0 0.0
    %3368 = vmatprep.subr.mxu0 0.0
    %3369 = vmatpush1.msra.mxu0 0.0
    %3370 = vmatprep.subr.mxu0 0.0
    %3371 = vmatpush1.msra.mxu0 0.0
    %3372 = vmatprep.subr.mxu0 0.0
    %3373 = vmatpush1.msra.mxu0 0.0
    %3374 = vmatprep.subr.mxu0 0.0
    %3375 = vmatpush1.msra.mxu0 0.0
    %3376 = vmatprep.subr.mxu0 0.0
    %3377 = vmatpush1.msra.mxu0 0.0
    %3378 = vmatprep.subr.mxu0 0.0
    %3379 = vmatpush1.msra.mxu0 0.0
    %3380 = vmatprep.subr.mxu0 0.0
    %3381 = vmatpush1.msra.mxu0 0.0
    %3382 = vmatprep.subr.mxu0 0.0
    %3383 = vmatpush1.msra.mxu0 0.0
    %3384 = vmatprep.subr.mxu0 0.0
    %3385 = vmatpush1.msra.mxu0 0.0
    %3386 = vmatprep.subr.mxu0 0.0
    %3387 = vmatpush1.msra.mxu0 0.0
    %3388 = vmatprep.subr.mxu0 0.0
    %3389 = vmatpush1.msra.mxu0 0.0
    %3390 = vmatprep.subr.mxu0 0.0
    %3391 = vmatpush1.msra.mxu0 0.0
    %3392 = vmatprep.subr.mxu0 0.0
    %3393 = vmatpush1.msra.mxu0 0.0
    %3394 = vmatprep.subr.mxu0 0.0
    %3395 = vmatpush1.msra.mxu0 0.0
    %3396 = vmatprep.subr.mxu0 0.0
    %3397 = vmatpush1.msra.mxu0 0.0
    %3398 = vmatprep.subr.mxu0 0.0
    %3399 = vmatpush1.msra.mxu0 0.0
    %3400 = vmatprep.subr.mxu0 0.0
    %3401 = vmatpush1.msra.mxu0 0.0
    %3402 = vmatprep.subr.mxu0 0.0
    %3403 = vmatpush1.msra.mxu0 0.0
    %3404 = vmatprep.subr.mxu0 0.0
    %3405 = vmatpush1.msra.mxu0 0.0
    %3406 = vmatprep.subr.mxu0 0.0
    %3407 = vmatpush1.msra.mxu0 0.0
    %3408 = vmatprep.subr.mxu0 0.0
    %3409 = vmatpush1.msra.mxu0 0.0
    %3410 = vmatprep.subr.mxu0 0.0
    %3411 = vmatpush1.msra.mxu0 0.0
    %3412 = vmatprep.mubr.f32.mxu0 0.0
    %3413 = vmatmul.mubr.f32.gmra.mrb[0].mxu0 %v3324
    %v3414 = vpop.f32.mrb[0].mxu0
    %v3415 = vadd.f32 %v3062, %v3414
    %v3416 = vpop.f32.mrb[0].mxu0
    %3417 = vmatprep.mubr.f32.mxu0 0.0
    %3418 = vmatmul.mubr.f32.gmra.mrb[0].mxu0 %v3326
    %v3419 = vpop.f32.mrb[0].mxu0
    %v3420 = vadd.f32 %v3067, %v3419
    %v3421 = vpop.f32.mrb[0].mxu0
    %3422 = vmatprep.mubr.f32.mxu0 0.0
    %3423 = vmatmul.mubr.f32.gmra.mrb[0].mxu0 %v3328
    %v3424 = vpop.f32.mrb[0].mxu0
    %v3425 = vadd.f32 %v3072, %v3424
    %v3426 = vpop.f32.mrb[0].mxu0
    %3427 = vmatprep.mubr.f32.mxu0 0.0
    %3428 = vmatmul.mubr.f32.gmra.mrb[0].mxu0 %v3330
    %v3429 = vpop.f32.mrb[0].mxu0
    %v3430 = vadd.f32 %v3077, %v3429
    %v3431 = vpop.f32.mrb[0].mxu0
    %3432 = vmatprep.mubr.f32.mxu0 0.0
    %3433 = vmatmul.mubr.f32.gmra.mrb[0].mxu0 %v3332
    %v3434 = vpop.f32.mrb[0].mxu0
    %v3435 = vadd.f32 %v3082, %v3434
    %v3436 = vpop.f32.mrb[0].mxu0
    %3437 = vmatprep.mubr.f32.mxu0 0.0
    %3438 = vmatmul.mubr.f32.gmra.mrb[0].mxu0 %v3334
    %v3439 = vpop.f32.mrb[0].mxu0
    %v3440 = vadd.f32 %v3087, %v3439
    %v3441 = vpop.f32.mrb[0].mxu0
    %3442 = vmatprep.mubr.f32.mxu0 0.0
    %3443 = vmatmul.mubr.f32.gmra.mrb[0].mxu0 %v3336
    %v3444 = vpop.f32.mrb[0].mxu0
    %v3445 = vadd.f32 %v3092, %v3444
    %v3446 = vpop.f32.mrb[0].mxu0
    %3447 = vmatprep.mubr.f32.mxu0 0.0
    %3448 = vmatmul.mubr.f32.gmra.mrb[0].mxu0 %v3338
    %v3449 = vpop.f32.mrb[0].mxu0
    %v3450 = vadd.f32 %v3097, %v3449
    %v3451 = vpop.f32.mrb[0].mxu0
    %3452 = vmatprep.mubr.f32.mxu0 0.0
    %3453 = vmatmul.mubr.f32.gmra.mrb[0].mxu0 %v3340
    %v3454 = vpop.f32.mrb[0].mxu0
    %v3455 = vadd.f32 %v3102, %v3454
    %v3456 = vpop.f32.mrb[0].mxu0
    %3457 = vmatprep.mubr.f32.mxu0 0.0
    %3458 = vmatmul.mubr.f32.gmra.mrb[0].mxu0 %v3342
    %v3459 = vpop.f32.mrb[0].mxu0
    %v3460 = vadd.f32 %v3107, %v3459
    %v3461 = vpop.f32.mrb[0].mxu0
    %3462 = vmatprep.mubr.f32.mxu0 0.0
    %3463 = vmatmul.mubr.f32.gmra.mrb[0].mxu0 %v3344
    %v3464 = vpop.f32.mrb[0].mxu0
    %v3465 = vadd.f32 %v3112, %v3464
    %v3466 = vpop.f32.mrb[0].mxu0
    %3467 = vmatprep.mubr.f32.mxu0 0.0
    %3468 = vmatmul.mubr.f32.gmra.mrb[0].mxu0 %v3346
    %v3469 = vpop.f32.mrb[0].mxu0
    %v3470 = vadd.f32 %v3117, %v3469
    %v3471 = vpop.f32.mrb[0].mxu0
    %3472 = vdwg.mxu0
    %v3485 = vcombine.high %v3415, %v3415
    %v3486 = vcombine.high %v3420, %v3420
    %v3487 = vcombine.high %v3425, %v3425
    %v3488 = vcombine.high %v3430, %v3430
    %v3489 = vcombine.high %v3435, %v3435
    %v3490 = vcombine.high %v3440, %v3440
    %v3491 = vcombine.high %v3445, %v3445
    %v3492 = vcombine.high %v3450, %v3450
    %v3493 = vcombine.high %v3455, %v3455
    %v3494 = vcombine.high %v3460, %v3460
    %v3495 = vcombine.high %v3465, %v3465
    %v3496 = vcombine.high %v3470, %v3470
    %s3509 = scalar_lea.vmem %s3, 112
    %v3510 = vld [vmem:[%s3509] sm:$0xff]
    %v3511 = vld [vmem:[%s3509 + $0x8] sm:$0xff]
    %v3512 = vld [vmem:[%s3509 + $0x10] sm:$0xff]
    %v3513 = vld [vmem:[%s3509 + $0x18] sm:$0xff]
    %v3514 = vld [vmem:[%s3509 + $0x20] sm:$0xff]
    %v3515 = vld [vmem:[%s3509 + $0x28] sm:$0xff]
    %v3516 = vld [vmem:[%s3509 + $0x30] sm:$0xff]
    %v3517 = vcombine.low %v2488, %v2489
    %v3518 = vcombine.low %v2490, %v2491
    %v3520 = vunpack.c.l.s4 1983009808
    %v3521 = vunpack.c.0.s8 %v3520
    %v3522 = vlaneseq
    %v3523 = vshrl.u32 %v3522, 7
    %v3524 = vsub.s32 %v3521, %v3523
    %v3525 = vrot.slane %v3517, %v3524
    %v3527 = vunpack.c.l.s4 1983009808
    %v3528 = vunpack.c.0.s8 %v3527
    %v3529 = vlaneseq
    %v3530 = vshrl.u32 %v3529, 7
    %v3531 = vsub.s32 %v3528, %v3530
    %v3532 = vrot.slane %v3518, %v3531
    %v3533 = vcombine.low %v3525, %v3532
    %v3534 = vcombine.low %v2492, %v2493
    %v3535 = vcombine.low %v2495, %v2496
    %v3537 = vunpack.c.l.s4 1983009808
    %v3538 = vunpack.c.0.s8 %v3537
    %v3539 = vlaneseq
    %v3540 = vshrl.u32 %v3539, 7
    %v3541 = vsub.s32 %v3538, %v3540
    %v3542 = vrot.slane %v3534, %v3541
    %v3544 = vunpack.c.l.s4 1983009808
    %v3545 = vunpack.c.0.s8 %v3544
    %v3546 = vlaneseq
    %v3547 = vshrl.u32 %v3546, 7
    %v3548 = vsub.s32 %v3545, %v3547
    %v3549 = vrot.slane %v3535, %v3548
    %v3550 = vcombine.low %v3542, %v3549
    %v3551 = vcombine.low %v2497, %v2498
    %v3552 = vcombine.low %v2499, %v2500
    %v3554 = vunpack.c.l.s4 1983009808
    %v3555 = vunpack.c.0.s8 %v3554
    %v3556 = vlaneseq
    %v3557 = vshrl.u32 %v3556, 7
    %v3558 = vsub.s32 %v3555, %v3557
    %v3559 = vrot.slane %v3551, %v3558
    %v3561 = vunpack.c.l.s4 1983009808
    %v3562 = vunpack.c.0.s8 %v3561
    %v3563 = vlaneseq
    %v3564 = vshrl.u32 %v3563, 7
    %v3565 = vsub.s32 %v3562, %v3564
    %v3566 = vrot.slane %v3552, %v3565
    %v3567 = vcombine.low %v3559, %v3566
    %v3568 = vcombine.low %v2502, %v2503
    %v3569 = vcombine.low %v2504, %v2505
    %v3571 = vunpack.c.l.s4 1983009808
    %v3572 = vunpack.c.0.s8 %v3571
    %v3573 = vlaneseq
    %v3574 = vshrl.u32 %v3573, 7
    %v3575 = vsub.s32 %v3572, %v3574
    %v3576 = vrot.slane %v3568, %v3575
    %v3578 = vunpack.c.l.s4 1983009808
    %v3579 = vunpack.c.0.s8 %v3578
    %v3580 = vlaneseq
    %v3581 = vshrl.u32 %v3580, 7
    %v3582 = vsub.s32 %v3579, %v3581
    %v3583 = vrot.slane %v3569, %v3582
    %v3584 = vcombine.low %v3576, %v3583
    %v3585 = vcombine.low %v2506, %v2507
    %v3586 = vcombine.low %v2509, %v2510
    %v3588 = vunpack.c.l.s4 1983009808
    %v3589 = vunpack.c.0.s8 %v3588
    %v3590 = vlaneseq
    %v3591 = vshrl.u32 %v3590, 7
    %v3592 = vsub.s32 %v3589, %v3591
    %v3593 = vrot.slane %v3585, %v3592
    %v3595 = vunpack.c.l.s4 1983009808
    %v3596 = vunpack.c.0.s8 %v3595
    %v3597 = vlaneseq
    %v3598 = vshrl.u32 %v3597, 7
    %v3599 = vsub.s32 %v3596, %v3598
    %v3600 = vrot.slane %v3586, %v3599
    %v3601 = vcombine.low %v3593, %v3600
    %v3602 = vcombine.low %v2511, %v2512
    %v3603 = vcombine.low %v2513, %v2514
    %v3605 = vunpack.c.l.s4 1983009808
    %v3606 = vunpack.c.0.s8 %v3605
    %v3607 = vlaneseq
    %v3608 = vshrl.u32 %v3607, 7
    %v3609 = vsub.s32 %v3606, %v3608
    %v3610 = vrot.slane %v3602, %v3609
    %v3612 = vunpack.c.l.s4 1983009808
    %v3613 = vunpack.c.0.s8 %v3612
    %v3614 = vlaneseq
    %v3615 = vshrl.u32 %v3614, 7
    %v3616 = vsub.s32 %v3613, %v3615
    %v3617 = vrot.slane %v3603, %v3616
    %v3618 = vcombine.low %v3610, %v3617
    %v3619 = vcombine.low %v2516, %v2517
    %v3620 = vcombine.low %v2518, %v2519
    %v3622 = vunpack.c.l.s4 1983009808
    %v3623 = vunpack.c.0.s8 %v3622
    %v3624 = vlaneseq
    %v3625 = vshrl.u32 %v3624, 7
    %v3626 = vsub.s32 %v3623, %v3625
    %v3627 = vrot.slane %v3619, %v3626
    %v3629 = vunpack.c.l.s4 1983009808
    %v3630 = vunpack.c.0.s8 %v3629
    %v3631 = vlaneseq
    %v3632 = vshrl.u32 %v3631, 7
    %v3633 = vsub.s32 %v3630, %v3632
    %v3634 = vrot.slane %v3620, %v3633
    %v3635 = vcombine.low %v3627, %v3634
    %v3636 = vcombine.low %v2520, %v2521
    %v3637 = vcombine.low %v2523, %v2524
    %v3639 = vunpack.c.l.s4 1983009808
    %v3640 = vunpack.c.0.s8 %v3639
    %v3641 = vlaneseq
    %v3642 = vshrl.u32 %v3641, 7
    %v3643 = vsub.s32 %v3640, %v3642
    %v3644 = vrot.slane %v3636, %v3643
    %v3646 = vunpack.c.l.s4 1983009808
    %v3647 = vunpack.c.0.s8 %v3646
    %v3648 = vlaneseq
    %v3649 = vshrl.u32 %v3648, 7
    %v3650 = vsub.s32 %v3647, %v3649
    %v3651 = vrot.slane %v3637, %v3650
    %v3652 = vcombine.low %v3644, %v3651
    %v3653 = vcombine.low %v2525, %v2526
    %v3654 = vcombine.low %v2527, %v2528
    %v3656 = vunpack.c.l.s4 1983009808
    %v3657 = vunpack.c.0.s8 %v3656
    %v3658 = vlaneseq
    %v3659 = vshrl.u32 %v3658, 7
    %v3660 = vsub.s32 %v3657, %v3659
    %v3661 = vrot.slane %v3653, %v3660
    %v3663 = vunpack.c.l.s4 1983009808
    %v3664 = vunpack.c.0.s8 %v3663
    %v3665 = vlaneseq
    %v3666 = vshrl.u32 %v3665, 7
    %v3667 = vsub.s32 %v3664, %v3666
    %v3668 = vrot.slane %v3654, %v3667
    %v3669 = vcombine.low %v3661, %v3668
    %v3670 = vcombine.low %v2530, %v2531
    %v3671 = vcombine.low %v2532, %v2533
    %v3673 = vunpack.c.l.s4 1983009808
    %v3674 = vunpack.c.0.s8 %v3673
    %v3675 = vlaneseq
    %v3676 = vshrl.u32 %v3675, 7
    %v3677 = vsub.s32 %v3674, %v3676
    %v3678 = vrot.slane %v3670, %v3677
    %v3680 = vunpack.c.l.s4 1983009808
    %v3681 = vunpack.c.0.s8 %v3680
    %v3682 = vlaneseq
    %v3683 = vshrl.u32 %v3682, 7
    %v3684 = vsub.s32 %v3681, %v3683
    %v3685 = vrot.slane %v3671, %v3684
    %v3686 = vcombine.low %v3678, %v3685
    %v3687 = vcombine.low %v2534, %v2535
    %v3688 = vcombine.low %v2537, %v2538
    %v3690 = vunpack.c.l.s4 1983009808
    %v3691 = vunpack.c.0.s8 %v3690
    %v3692 = vlaneseq
    %v3693 = vshrl.u32 %v3692, 7
    %v3694 = vsub.s32 %v3691, %v3693
    %v3695 = vrot.slane %v3687, %v3694
    %v3697 = vunpack.c.l.s4 1983009808
    %v3698 = vunpack.c.0.s8 %v3697
    %v3699 = vlaneseq
    %v3700 = vshrl.u32 %v3699, 7
    %v3701 = vsub.s32 %v3698, %v3700
    %v3702 = vrot.slane %v3688, %v3701
    %v3703 = vcombine.low %v3695, %v3702
    %v3704 = vcombine.low %v2539, %v2540
    %v3705 = vcombine.low %v2541, %v2542
    %v3707 = vunpack.c.l.s4 1983009808
    %v3708 = vunpack.c.0.s8 %v3707
    %v3709 = vlaneseq
    %v3710 = vshrl.u32 %v3709, 7
    %v3711 = vsub.s32 %v3708, %v3710
    %v3712 = vrot.slane %v3704, %v3711
    %v3714 = vunpack.c.l.s4 1983009808
    %v3715 = vunpack.c.0.s8 %v3714
    %v3716 = vlaneseq
    %v3717 = vshrl.u32 %v3716, 7
    %v3718 = vsub.s32 %v3715, %v3717
    %v3719 = vrot.slane %v3705, %v3718
    %v3720 = vcombine.low %v3712, %v3719
    %v3721 = vsel %vm2970, %v3533, 0
    %v3723 = vsel %vm2970, %v3550, 0
    %v3725 = vsel %vm2970, %v3567, 0
    %v3727 = vsel %vm2970, %v3584, 0
    %v3729 = vsel %vm2970, %v3601, 0
    %v3731 = vsel %vm2970, %v3618, 0
    %v3733 = vsel %vm2970, %v3635, 0
    %v3735 = vsel %vm2970, %v3652, 0
    %v3737 = vsel %vm2970, %v3669, 0
    %v3739 = vsel %vm2970, %v3686, 0
    %v3741 = vsel %vm2970, %v3703, 0
    %v3743 = vsel %vm2970, %v3720, 0
    %3745 = vmatprep.subr.mxu0 0.0
    %3746 = vmatpush1.msra.mxu0 %v3510
    %3747 = vmatprep.subr.mxu0 0.0
    %3748 = vmatpush1.msra.mxu0 %v3511
    %3749 = vmatprep.subr.mxu0 0.0
    %3750 = vmatpush1.msra.mxu0 %v3512
    %3751 = vmatprep.subr.mxu0 0.0
    %3752 = vmatpush1.msra.mxu0 %v3513
    %3753 = vmatprep.subr.mxu0 0.0
    %3754 = vmatpush1.msra.mxu0 %v3514
    %3755 = vmatprep.subr.mxu0 0.0
    %3756 = vmatpush1.msra.mxu0 %v3515
    %3757 = vmatprep.subr.mxu0 0.0
    %3758 = vmatpush1.msra.mxu0 %v3516
    %3759 = vmatprep.subr.mxu0 0.0
    %3760 = vmatpush1.msra.mxu0 0.0
    %3761 = vmatprep.subr.mxu0 0.0
    %3762 = vmatpush1.msra.mxu0 0.0
    %3763 = vmatprep.subr.mxu0 0.0
    %3764 = vmatpush1.msra.mxu0 0.0
    %3765 = vmatprep.subr.mxu0 0.0
    %3766 = vmatpush1.msra.mxu0 0.0
    %3767 = vmatprep.subr.mxu0 0.0
    %3768 = vmatpush1.msra.mxu0 0.0
    %3769 = vmatprep.subr.mxu0 0.0
    %3770 = vmatpush1.msra.mxu0 0.0
    %3771 = vmatprep.subr.mxu0 0.0
    %3772 = vmatpush1.msra.mxu0 0.0
    %3773 = vmatprep.subr.mxu0 0.0
    %3774 = vmatpush1.msra.mxu0 0.0
    %3775 = vmatprep.subr.mxu0 0.0
    %3776 = vmatpush1.msra.mxu0 0.0
    %3777 = vmatprep.subr.mxu0 0.0
    %3778 = vmatpush1.msra.mxu0 0.0
    %3779 = vmatprep.subr.mxu0 0.0
    %3780 = vmatpush1.msra.mxu0 0.0
    %3781 = vmatprep.subr.mxu0 0.0
    %3782 = vmatpush1.msra.mxu0 0.0
    %3783 = vmatprep.subr.mxu0 0.0
    %3784 = vmatpush1.msra.mxu0 0.0
    %3785 = vmatprep.subr.mxu0 0.0
    %3786 = vmatpush1.msra.mxu0 0.0
    %3787 = vmatprep.subr.mxu0 0.0
    %3788 = vmatpush1.msra.mxu0 0.0
    %3789 = vmatprep.subr.mxu0 0.0
    %3790 = vmatpush1.msra.mxu0 0.0
    %3791 = vmatprep.subr.mxu0 0.0
    %3792 = vmatpush1.msra.mxu0 0.0
    %3793 = vmatprep.subr.mxu0 0.0
    %3794 = vmatpush1.msra.mxu0 0.0
    %3795 = vmatprep.subr.mxu0 0.0
    %3796 = vmatpush1.msra.mxu0 0.0
    %3797 = vmatprep.subr.mxu0 0.0
    %3798 = vmatpush1.msra.mxu0 0.0
    %3799 = vmatprep.subr.mxu0 0.0
    %3800 = vmatpush1.msra.mxu0 0.0
    %3801 = vmatprep.subr.mxu0 0.0
    %3802 = vmatpush1.msra.mxu0 0.0
    %3803 = vmatprep.subr.mxu0 0.0
    %3804 = vmatpush1.msra.mxu0 0.0
    %3805 = vmatprep.subr.mxu0 0.0
    %3806 = vmatpush1.msra.mxu0 0.0
    %3807 = vmatprep.subr.mxu0 0.0
    %3808 = vmatpush1.msra.mxu0 0.0
    %3809 = vmatprep.mubr.f32.mxu0 0.0
    %3810 = vmatmul.mubr.f32.gmra.mrb[0].mxu0 %v3721
    %v3811 = vpop.f32.mrb[0].mxu0
    %v3812 = vadd.f32 0.0, %v3811
    %v3813 = vpop.f32.mrb[0].mxu0
    %3814 = vmatprep.mubr.f32.mxu0 0.0
    %3815 = vmatmul.mubr.f32.gmra.mrb[0].mxu0 %v3723
    %v3816 = vpop.f32.mrb[0].mxu0
    %v3817 = vadd.f32 0.0, %v3816
    %v3818 = vpop.f32.mrb[0].mxu0
    %3819 = vmatprep.mubr.f32.mxu0 0.0
    %3820 = vmatmul.mubr.f32.gmra.mrb[0].mxu0 %v3725
    %v3821 = vpop.f32.mrb[0].mxu0
    %v3822 = vadd.f32 0.0, %v3821
    %v3823 = vpop.f32.mrb[0].mxu0
    %3824 = vmatprep.mubr.f32.mxu0 0.0
    %3825 = vmatmul.mubr.f32.gmra.mrb[0].mxu0 %v3727
    %v3826 = vpop.f32.mrb[0].mxu0
    %v3827 = vadd.f32 0.0, %v3826
    %v3828 = vpop.f32.mrb[0].mxu0
    %3829 = vmatprep.mubr.f32.mxu0 0.0
    %3830 = vmatmul.mubr.f32.gmra.mrb[0].mxu0 %v3729
    %v3831 = vpop.f32.mrb[0].mxu0
    %v3832 = vadd.f32 0.0, %v3831
    %v3833 = vpop.f32.mrb[0].mxu0
    %3834 = vmatprep.mubr.f32.mxu0 0.0
    %3835 = vmatmul.mubr.f32.gmra.mrb[0].mxu0 %v3731
    %v3836 = vpop.f32.mrb[0].mxu0
    %v3837 = vadd.f32 0.0, %v3836
    %v3838 = vpop.f32.mrb[0].mxu0
    %3839 = vmatprep.mubr.f32.mxu0 0.0
    %3840 = vmatmul.mubr.f32.gmra.mrb[0].mxu0 %v3733
    %v3841 = vpop.f32.mrb[0].mxu0
    %v3842 = vadd.f32 0.0, %v3841
    %v3843 = vpop.f32.mrb[0].mxu0
    %3844 = vmatprep.mubr.f32.mxu0 0.0
    %3845 = vmatmul.mubr.f32.gmra.mrb[0].mxu0 %v3735
    %v3846 = vpop.f32.mrb[0].mxu0
    %v3847 = vadd.f32 0.0, %v3846
    %v3848 = vpop.f32.mrb[0].mxu0
    %3849 = vmatprep.mubr.f32.mxu0 0.0
    %3850 = vmatmul.mubr.f32.gmra.mrb[0].mxu0 %v3737
    %v3851 = vpop.f32.mrb[0].mxu0
    %v3852 = vadd.f32 0.0, %v3851
    %v3853 = vpop.f32.mrb[0].mxu0
    %3854 = vmatprep.mubr.f32.mxu0 0.0
    %3855 = vmatmul.mubr.f32.gmra.mrb[0].mxu0 %v3739
    %v3856 = vpop.f32.mrb[0].mxu0
    %v3857 = vadd.f32 0.0, %v3856
    %v3858 = vpop.f32.mrb[0].mxu0
    %3859 = vmatprep.mubr.f32.mxu0 0.0
    %3860 = vmatmul.mubr.f32.gmra.mrb[0].mxu0 %v3741
    %v3861 = vpop.f32.mrb[0].mxu0
    %v3862 = vadd.f32 0.0, %v3861
    %v3863 = vpop.f32.mrb[0].mxu0
    %3864 = vmatprep.mubr.f32.mxu0 0.0
    %3865 = vmatmul.mubr.f32.gmra.mrb[0].mxu0 %v3743
    %v3866 = vpop.f32.mrb[0].mxu0
    %v3867 = vadd.f32 0.0, %v3866
    %v3868 = vpop.f32.mrb[0].mxu0
    %3869 = vdwg.mxu0
    %v3882 = vcombine.high %v3812, %v3812
    %v3883 = vcombine.high %v3817, %v3817
    %v3884 = vcombine.high %v3822, %v3822
    %v3885 = vcombine.high %v3827, %v3827
    %v3886 = vcombine.high %v3832, %v3832
    %v3887 = vcombine.high %v3837, %v3837
    %v3888 = vcombine.high %v3842, %v3842
    %v3889 = vcombine.high %v3847, %v3847
    %v3890 = vcombine.high %v3852, %v3852
    %v3891 = vcombine.high %v3857, %v3857
    %v3892 = vcombine.high %v3862, %v3862
    %v3893 = vcombine.high %v3867, %v3867
    %v3906 = vadd.f32 %v3415, %v3812
    %v3907 = vadd.f32 %v3485, %v3882
    %v3908 = vadd.f32 %v3420, %v3817
    %v3909 = vadd.f32 %v3486, %v3883
    %v3910 = vadd.f32 %v3425, %v3822
    %v3911 = vadd.f32 %v3487, %v3884
    %v3912 = vadd.f32 %v3430, %v3827
    %v3913 = vadd.f32 %v3488, %v3885
    %v3914 = vadd.f32 %v3435, %v3832
    %v3915 = vadd.f32 %v3489, %v3886
    %v3916 = vadd.f32 %v3440, %v3837
    %v3917 = vadd.f32 %v3490, %v3887
    %v3918 = vadd.f32 %v3445, %v3842
    %v3919 = vadd.f32 %v3491, %v3888
    %v3920 = vadd.f32 %v3450, %v3847
    %v3921 = vadd.f32 %v3492, %v3889
    %v3922 = vadd.f32 %v3455, %v3852
    %v3923 = vadd.f32 %v3493, %v3890
    %v3924 = vadd.f32 %v3460, %v3857
    %v3925 = vadd.f32 %v3494, %v3891
    %v3926 = vadd.f32 %v3465, %v3862
    %v3927 = vadd.f32 %v3495, %v3892
    %v3928 = vadd.f32 %v3470, %v3867
    %v3929 = vadd.f32 %v3496, %v3893
    %v3930 = vld [vmem:[%s4] sm:$0x1]
    %v3932 = vlaneseq
    %v3933 = vshrl.u32 %v3932, 7
    %v3934 = vsub.s32 0, %v3933
    %v3935 = vrot.slane %v3930, %v3934
    %v3937 = vcombine.high %v3935, %v3935
    %v3939 = vadd.f32 %v3906, %v3935
    %v3940 = vadd.f32 %v3907, %v3937
    %v3941 = vadd.f32 %v3908, %v3935
    %v3942 = vadd.f32 %v3909, %v3935
    %v3943 = vadd.f32 %v3910, %v3937
    %v3944 = vadd.f32 %v3911, %v3935
    %v3945 = vadd.f32 %v3912, %v3935
    %v3946 = vadd.f32 %v3913, %v3937
    %v3947 = vadd.f32 %v3914, %v3935
    %v3948 = vadd.f32 %v3915, %v3935
    %v3949 = vadd.f32 %v3916, %v3937
    %v3950 = vadd.f32 %v3917, %v3935
    %v3951 = vadd.f32 %v3918, %v3935
    %v3952 = vadd.f32 %v3919, %v3937
    %v3953 = vadd.f32 %v3920, %v3935
    %v3954 = vadd.f32 %v3921, %v3935
    %v3955 = vadd.f32 %v3922, %v3937
    %v3956 = vadd.f32 %v3923, %v3935
    %v3957 = vadd.f32 %v3924, %v3935
    %v3958 = vadd.f32 %v3925, %v3937
    %v3959 = vadd.f32 %v3926, %v3935
    %v3960 = vadd.f32 %v3927, %v3935
    %v3961 = vadd.f32 %v3928, %v3937
    %v3962 = vadd.f32 %v3929, %v3935
    %v3963 = vmax.f32 %v3939, 0.0
    %v3964 = vmax.f32 %v3940, 0.0
    %v3965 = vmax.f32 %v3941, 0.0
    %v3966 = vmax.f32 %v3942, 0.0
    %v3967 = vmax.f32 %v3943, 0.0
    %v3968 = vmax.f32 %v3944, 0.0
    %v3969 = vmax.f32 %v3945, 0.0
    %v3970 = vmax.f32 %v3946, 0.0
    %v3971 = vmax.f32 %v3947, 0.0
    %v3972 = vmax.f32 %v3948, 0.0
    %v3973 = vmax.f32 %v3949, 0.0
    %v3974 = vmax.f32 %v3950, 0.0
    %v3975 = vmax.f32 %v3951, 0.0
    %v3976 = vmax.f32 %v3952, 0.0
    %v3977 = vmax.f32 %v3953, 0.0
    %v3978 = vmax.f32 %v3954, 0.0
    %v3979 = vmax.f32 %v3955, 0.0
    %v3980 = vmax.f32 %v3956, 0.0
    %v3981 = vmax.f32 %v3957, 0.0
    %v3982 = vmax.f32 %v3958, 0.0
    %v3983 = vmax.f32 %v3959, 0.0
    %v3984 = vmax.f32 %v3960, 0.0
    %v3985 = vmax.f32 %v3961, 0.0
    %v3986 = vmax.f32 %v3962, 0.0
    %4011 = vrot.lane.b32.xlu0 %v3963, 120
    %v4012 = vpop.permute.xlu0 %4011
    %4013 = vrot.lane.b32.xlu0 %v3964, 120
    %v4014 = vpop.permute.xlu0 %4013
    %4015 = vrot.lane.b32.xlu0 %v3965, 120
    %v4016 = vpop.permute.xlu0 %4015
    %4017 = vrot.lane.b32.xlu0 %v3966, 120
    %v4018 = vpop.permute.xlu0 %4017
    %4019 = vrot.lane.b32.xlu0 %v3967, 120
    %v4020 = vpop.permute.xlu0 %4019
    %4021 = vrot.lane.b32.xlu0 %v3968, 120
    %v4022 = vpop.permute.xlu0 %4021
    %4023 = vrot.lane.b32.xlu0 %v3969, 120
    %v4024 = vpop.permute.xlu0 %4023
    %4025 = vrot.lane.b32.xlu0 %v3970, 120
    %v4026 = vpop.permute.xlu0 %4025
    %4027 = vrot.lane.b32.xlu0 %v3971, 120
    %v4028 = vpop.permute.xlu0 %4027
    %4029 = vrot.lane.b32.xlu0 %v3972, 120
    %v4030 = vpop.permute.xlu0 %4029
    %4031 = vrot.lane.b32.xlu0 %v3973, 120
    %v4032 = vpop.permute.xlu0 %4031
    %4033 = vrot.lane.b32.xlu0 %v3974, 120
    %v4034 = vpop.permute.xlu0 %4033
    %4035 = vrot.lane.b32.xlu0 %v3975, 120
    %v4036 = vpop.permute.xlu0 %4035
    %4037 = vrot.lane.b32.xlu0 %v3976, 120
    %v4038 = vpop.permute.xlu0 %4037
    %4039 = vrot.lane.b32.xlu0 %v3977, 120
    %v4040 = vpop.permute.xlu0 %4039
    %4041 = vrot.lane.b32.xlu0 %v3978, 120
    %v4042 = vpop.permute.xlu0 %4041
    %4043 = vrot.lane.b32.xlu0 %v3979, 120
    %v4044 = vpop.permute.xlu0 %4043
    %4045 = vrot.lane.b32.xlu0 %v3980, 120
    %v4046 = vpop.permute.xlu0 %4045
    %4047 = vrot.lane.b32.xlu0 %v3981, 120
    %v4048 = vpop.permute.xlu0 %4047
    %4049 = vrot.lane.b32.xlu0 %v3982, 120
    %v4050 = vpop.permute.xlu0 %4049
    %4051 = vrot.lane.b32.xlu0 %v3983, 120
    %v4052 = vpop.permute.xlu0 %4051
    %4053 = vrot.lane.b32.xlu0 %v3984, 120
    %v4054 = vpop.permute.xlu0 %4053
    %4055 = vrot.lane.b32.xlu0 %v3985, 120
    %v4056 = vpop.permute.xlu0 %4055
    %4057 = vrot.lane.b32.xlu0 %v3986, 120
    %v4058 = vpop.permute.xlu0 %4057
    %v4083 = vmax.f32 %v3963, %v4012
    %v4084 = vmax.f32 %v3964, %v4014
    %v4085 = vmax.f32 %v3965, %v4016
    %v4086 = vmax.f32 %v3966, %v4018
    %v4087 = vmax.f32 %v3967, %v4020
    %v4088 = vmax.f32 %v3968, %v4022
    %v4089 = vmax.f32 %v3969, %v4024
    %v4090 = vmax.f32 %v3970, %v4026
    %v4091 = vmax.f32 %v3971, %v4028
    %v4092 = vmax.f32 %v3972, %v4030
    %v4093 = vmax.f32 %v3973, %v4032
    %v4094 = vmax.f32 %v3974, %v4034
    %v4095 = vmax.f32 %v3975, %v4036
    %v4096 = vmax.f32 %v3976, %v4038
    %v4097 = vmax.f32 %v3977, %v4040
    %v4098 = vmax.f32 %v3978, %v4042
    %v4099 = vmax.f32 %v3979, %v4044
    %v4100 = vmax.f32 %v3980, %v4046
    %v4101 = vmax.f32 %v3981, %v4048
    %v4102 = vmax.f32 %v3982, %v4050
    %v4103 = vmax.f32 %v3983, %v4052
    %v4104 = vmax.f32 %v3984, %v4054
    %v4105 = vmax.f32 %v3985, %v4056
    %v4106 = vmax.f32 %v3986, %v4058
    %vm4131 = vcmask 1042432
    %vm4132 = vcmask 1046532
    %vm4133 = vmor %vm4131, %vm4132
    %v4134 = vrot.slane %v4083, 5
    %v4135 = vrot.slane %v4134, 4
    %v4136 = vrot.slane %v4084, 5
    %v4137 = vsel %vm4133, %v4135, %v4136
    %v4138 = vrot.slane %v4136, 4
    %v4139 = vrot.slane %v4085, 5
    %v4140 = vsel %vm4133, %v4138, %v4139
    %v4141 = vrot.slane %v4139, 4
    %v4142 = vrot.slane %v4086, 5
    %v4143 = vrot.slane %v4142, 4
    %v4144 = vrot.slane %v4087, 5
    %v4145 = vsel %vm4133, %v4143, %v4144
    %v4146 = vrot.slane %v4144, 4
    %v4147 = vrot.slane %v4088, 5
    %v4148 = vsel %vm4133, %v4146, %v4147
    %v4149 = vrot.slane %v4147, 4
    %v4150 = vrot.slane %v4089, 5
    %v4151 = vrot.slane %v4150, 4
    %v4152 = vrot.slane %v4090, 5
    %v4153 = vsel %vm4133, %v4151, %v4152
    %v4154 = vrot.slane %v4152, 4
    %v4155 = vrot.slane %v4091, 5
    %v4156 = vsel %vm4133, %v4154, %v4155
    %v4157 = vrot.slane %v4155, 4
    %v4158 = vrot.slane %v4092, 5
    %v4159 = vrot.slane %v4158, 4
    %v4160 = vrot.slane %v4093, 5
    %v4161 = vsel %vm4133, %v4159, %v4160
    %v4162 = vrot.slane %v4160, 4
    %v4163 = vrot.slane %v4094, 5
    %v4164 = vsel %vm4133, %v4162, %v4163
    %v4165 = vrot.slane %v4163, 4
    %v4166 = vrot.slane %v4095, 5
    %v4167 = vrot.slane %v4166, 4
    %v4168 = vrot.slane %v4096, 5
    %v4169 = vsel %vm4133, %v4167, %v4168
    %v4170 = vrot.slane %v4168, 4
    %v4171 = vrot.slane %v4097, 5
    %v4172 = vsel %vm4133, %v4170, %v4171
    %v4173 = vrot.slane %v4171, 4
    %v4174 = vrot.slane %v4098, 5
    %v4175 = vrot.slane %v4174, 4
    %v4176 = vrot.slane %v4099, 5
    %v4177 = vsel %vm4133, %v4175, %v4176
    %v4178 = vrot.slane %v4176, 4
    %v4179 = vrot.slane %v4100, 5
    %v4180 = vsel %vm4133, %v4178, %v4179
    %v4181 = vrot.slane %v4179, 4
    %v4182 = vrot.slane %v4101, 5
    %v4183 = vrot.slane %v4182, 4
    %v4184 = vrot.slane %v4102, 5
    %v4185 = vsel %vm4133, %v4183, %v4184
    %v4186 = vrot.slane %v4184, 4
    %v4187 = vrot.slane %v4103, 5
    %v4188 = vsel %vm4133, %v4186, %v4187
    %v4189 = vrot.slane %v4187, 4
    %v4190 = vrot.slane %v4104, 5
    %v4191 = vrot.slane %v4190, 4
    %v4192 = vrot.slane %v4105, 5
    %v4193 = vsel %vm4133, %v4191, %v4192
    %v4194 = vrot.slane %v4192, 4
    %v4195 = vrot.slane %v4106, 5
    %v4196 = vsel %vm4133, %v4194, %v4195
    %v4197 = vrot.slane %v4195, 4
    %v4222 = vmax.f32 %v4083, %v4137
    %v4223 = vmax.f32 %v4084, %v4140
    %v4224 = vmax.f32 %v4085, %v4141
    %v4225 = vmax.f32 %v4086, %v4145
    %v4226 = vmax.f32 %v4087, %v4148
    %v4227 = vmax.f32 %v4088, %v4149
    %v4228 = vmax.f32 %v4089, %v4153
    %v4229 = vmax.f32 %v4090, %v4156
    %v4230 = vmax.f32 %v4091, %v4157
    %v4231 = vmax.f32 %v4092, %v4161
    %v4232 = vmax.f32 %v4093, %v4164
    %v4233 = vmax.f32 %v4094, %v4165
    %v4234 = vmax.f32 %v4095, %v4169
    %v4235 = vmax.f32 %v4096, %v4172
    %v4236 = vmax.f32 %v4097, %v4173
    %v4237 = vmax.f32 %v4098, %v4177
    %v4238 = vmax.f32 %v4099, %v4180
    %v4239 = vmax.f32 %v4100, %v4181
    %v4240 = vmax.f32 %v4101, %v4185
    %v4241 = vmax.f32 %v4102, %v4188
    %v4242 = vmax.f32 %v4103, %v4189
    %v4243 = vmax.f32 %v4104, %v4193
    %v4244 = vmax.f32 %v4105, %v4196
    %v4245 = vmax.f32 %v4106, %v4197
    %v4246 = vld [vmem:[%s5] sm:$0xff]
    %v4247 = vld [vmem:[%s5 + $0x8] sm:$0xff]
    %v4248 = vld [vmem:[%s5 + $0x10] sm:$0xff]
    %v4249 = vld [vmem:[%s5 + $0x18] sm:$0xff]
    %v4250 = vld [vmem:[%s5 + $0x20] sm:$0xff]
    %v4251 = vld [vmem:[%s5 + $0x28] sm:$0xff]
    %v4252 = vld [vmem:[%s5 + $0x30] sm:$0xff]
    %v4253 = vld [vmem:[%s5 + $0x38] sm:$0xff]
    %v4254 = vld [vmem:[%s5 + $0x40] sm:$0xff]
    %v4255 = vld [vmem:[%s5 + $0x48] sm:$0xff]
    %v4256 = vld [vmem:[%s5 + $0x50] sm:$0xff]
    %s4257 = scalar_lea.vmem %s5, 88
    %v4258 = vld [vmem:[%s4257] sm:$0xff]
    %v4259 = vld [vmem:[%s4257 + $0x8] sm:$0xff]
    %v4260 = vld [vmem:[%s4257 + $0x10] sm:$0xff]
    %v4261 = vld [vmem:[%s4257 + $0x18] sm:$0xff]
    %v4262 = vld [vmem:[%s4257 + $0x20] sm:$0xff]
    %v4263 = vld [vmem:[%s4257 + $0x28] sm:$0xff]
    %v4264 = vld [vmem:[%s4257 + $0x30] sm:$0xff]
    %v4265 = vld [vmem:[%s4257 + $0x38] sm:$0xff]
    %v4266 = vld [vmem:[%s4257 + $0x40] sm:$0xff]
    %v4267 = vld [vmem:[%s4257 + $0x48] sm:$0xff]
    %v4268 = vld [vmem:[%s4257 + $0x50] sm:$0xff]
    %v4277 = vlaneseq
    %v4278 = vshrl.u32 %v4277, 7
    %v4279 = vsub.s32 1, %v4278
    %v4280 = vrot.slane %v4222, %v4279
    %v4281 = vlaneseq
    %v4282 = vshrl.u32 %v4281, 7
    %v4283 = vsub.s32 1, %v4282
    %v4284 = vrot.slane %v4225, %v4283
    %v4285 = vlaneseq
    %v4286 = vshrl.u32 %v4285, 7
    %v4287 = vsub.s32 1, %v4286
    %v4288 = vrot.slane %v4228, %v4287
    %v4289 = vlaneseq
    %v4290 = vshrl.u32 %v4289, 7
    %v4291 = vsub.s32 1, %v4290
    %v4292 = vrot.slane %v4231, %v4291
    %v4293 = vlaneseq
    %v4294 = vshrl.u32 %v4293, 7
    %v4295 = vsub.s32 1, %v4294
    %v4296 = vrot.slane %v4234, %v4295
    %v4297 = vlaneseq
    %v4298 = vshrl.u32 %v4297, 7
    %v4299 = vsub.s32 1, %v4298
    %v4300 = vrot.slane %v4237, %v4299
    %v4301 = vlaneseq
    %v4302 = vshrl.u32 %v4301, 7
    %v4303 = vsub.s32 1, %v4302
    %v4304 = vrot.slane %v4240, %v4303
    %v4305 = vlaneseq
    %v4306 = vshrl.u32 %v4305, 7
    %v4307 = vsub.s32 1, %v4306
    %v4308 = vrot.slane %v4243, %v4307
    %vm4309 = vcmask 1041409
    %v4310 = vsel %vm4309, %v4284, %v4280
    %v4311 = vsel %vm343, %v4288, %v4310
    %vm4312 = vcmask 1043459
    %v4313 = vsel %vm4312, %v4292, %v4311
    %v4314 = vsel %vm345, %v4296, %v4313
    %vm4315 = vcmask 1045509
    %v4316 = vsel %vm4315, %v4300, %v4314
    %v4317 = vsel %vm347, %v4304, %v4316
    %vm4318 = vcmask 1047559
    %v4319 = vsel %vm4318, %v4308, %v4317
    %vm4320 = vcmask 719872
    %v4321 = vsel %vm4320, %v4319, 0
    %4323 = vmatprep.subr.mxu0 0.0
    %4324 = vmatpush1.msra.mxu0 %v4258
    %4325 = vmatprep.subr.mxu0 0.0
    %4326 = vmatpush1.msra.mxu0 %v4259
    %4327 = vmatprep.subr.mxu0 0.0
    %4328 = vmatpush1.msra.mxu0 %v4260
    %4329 = vmatprep.subr.mxu0 0.0
    %4330 = vmatpush1.msra.mxu0 %v4261
    %4331 = vmatprep.subr.mxu0 0.0
    %4332 = vmatpush1.msra.mxu0 %v4262
    %4333 = vmatprep.subr.mxu0 0.0
    %4334 = vmatpush1.msra.mxu0 %v4263
    %4335 = vmatprep.subr.mxu0 0.0
    %4336 = vmatpush1.msra.mxu0 %v4264
    %4337 = vmatprep.subr.mxu0 0.0
    %4338 = vmatpush1.msra.mxu0 %v4265
    %4339 = vmatprep.subr.mxu0 0.0
    %4340 = vmatpush1.msra.mxu0 %v4266
    %4341 = vmatprep.subr.mxu0 0.0
    %4342 = vmatpush1.msra.mxu0 %v4267
    %4343 = vmatprep.subr.mxu0 0.0
    %4344 = vmatpush1.msra.mxu0 %v4268
    %4345 = vmatprep.subr.mxu0 0.0
    %4346 = vmatpush1.msra.mxu0 0.0
    %4347 = vmatprep.subr.mxu0 0.0
    %4348 = vmatpush1.msra.mxu0 0.0
    %4349 = vmatprep.subr.mxu0 0.0
    %4350 = vmatpush1.msra.mxu0 0.0
    %4351 = vmatprep.subr.mxu0 0.0
    %4352 = vmatpush1.msra.mxu0 0.0
    %4353 = vmatprep.subr.mxu0 0.0
    %4354 = vmatpush1.msra.mxu0 0.0
    %4355 = vmatprep.subr.mxu0 0.0
    %4356 = vmatpush1.msra.mxu0 0.0
    %4357 = vmatprep.subr.mxu0 0.0
    %4358 = vmatpush1.msra.mxu0 0.0
    %4359 = vmatprep.subr.mxu0 0.0
    %4360 = vmatpush1.msra.mxu0 0.0
    %4361 = vmatprep.subr.mxu0 0.0
    %4362 = vmatpush1.msra.mxu0 0.0
    %4363 = vmatprep.subr.mxu0 0.0
    %4364 = vmatpush1.msra.mxu0 0.0
    %4365 = vmatprep.subr.mxu0 0.0
    %4366 = vmatpush1.msra.mxu0 0.0
    %4367 = vmatprep.subr.mxu0 0.0
    %4368 = vmatpush1.msra.mxu0 0.0
    %4369 = vmatprep.subr.mxu0 0.0
    %4370 = vmatpush1.msra.mxu0 0.0
    %4371 = vmatprep.subr.mxu0 0.0
    %4372 = vmatpush1.msra.mxu0 0.0
    %4373 = vmatprep.subr.mxu0 0.0
    %4374 = vmatpush1.msra.mxu0 0.0
    %4375 = vmatprep.subr.mxu0 0.0
    %4376 = vmatpush1.msra.mxu0 0.0
    %4377 = vmatprep.subr.mxu0 0.0
    %4378 = vmatpush1.msra.mxu0 0.0
    %4379 = vmatprep.subr.mxu0 0.0
    %4380 = vmatpush1.msra.mxu0 0.0
    %4381 = vmatprep.subr.mxu0 0.0
    %4382 = vmatpush1.msra.mxu0 0.0
    %4383 = vmatprep.subr.mxu0 0.0
    %4384 = vmatpush1.msra.mxu0 0.0
    %4385 = vmatprep.subr.mxu0 0.0
    %4386 = vmatpush1.msra.mxu0 0.0
    %4387 = vmatprep.mubr.f32.mxu0 0.0
    %4388 = vmatmul.mubr.f32.gmra.mrb[0].mxu0 %v4321
    %v4389 = vpop.f32.mrb[0].mxu0
    %v4390 = vadd.f32 0.0, %v4389
    %v4391 = vpop.f32.mrb[0].mxu0
    %4392 = vdwg.mxu0
    %v4393 = vlaneseq
    %v4394 = vshrl.u32 %v4393, 7
    %v4395 = vsub.s32 0, %v4394
    %v4396 = vrot.slane %v4222, %v4395
    %v4397 = vlaneseq
    %v4398 = vshrl.u32 %v4397, 7
    %v4399 = vsub.s32 0, %v4398
    %v4400 = vrot.slane %v4225, %v4399
    %v4401 = vlaneseq
    %v4402 = vshrl.u32 %v4401, 7
    %v4403 = vsub.s32 0, %v4402
    %v4404 = vrot.slane %v4228, %v4403
    %v4405 = vlaneseq
    %v4406 = vshrl.u32 %v4405, 7
    %v4407 = vsub.s32 0, %v4406
    %v4408 = vrot.slane %v4231, %v4407
    %v4409 = vlaneseq
    %v4410 = vshrl.u32 %v4409, 7
    %v4411 = vsub.s32 0, %v4410
    %v4412 = vrot.slane %v4234, %v4411
    %v4413 = vlaneseq
    %v4414 = vshrl.u32 %v4413, 7
    %v4415 = vsub.s32 0, %v4414
    %v4416 = vrot.slane %v4237, %v4415
    %v4417 = vlaneseq
    %v4418 = vshrl.u32 %v4417, 7
    %v4419 = vsub.s32 0, %v4418
    %v4420 = vrot.slane %v4240, %v4419
    %v4421 = vlaneseq
    %v4422 = vshrl.u32 %v4421, 7
    %v4423 = vsub.s32 0, %v4422
    %v4424 = vrot.slane %v4243, %v4423
    %v4425 = vsel %vm4309, %v4400, %v4396
    %v4426 = vsel %vm343, %v4404, %v4425
    %v4427 = vsel %vm4312, %v4408, %v4426
    %v4428 = vsel %vm345, %v4412, %v4427
    %v4429 = vsel %vm4315, %v4416, %v4428
    %v4430 = vsel %vm347, %v4420, %v4429
    %v4431 = vsel %vm4318, %v4424, %v4430
    %v4432 = vsel %vm4320, %v4431, 0
    %4434 = vmatprep.subr.mxu0 0.0
    %4435 = vmatpush1.msra.mxu0 %v4246
    %4436 = vmatprep.subr.mxu0 0.0
    %4437 = vmatpush1.msra.mxu0 %v4247
    %4438 = vmatprep.subr.mxu0 0.0
    %4439 = vmatpush1.msra.mxu0 %v4248
    %4440 = vmatprep.subr.mxu0 0.0
    %4441 = vmatpush1.msra.mxu0 %v4249
    %4442 = vmatprep.subr.mxu0 0.0
    %4443 = vmatpush1.msra.mxu0 %v4250
    %4444 = vmatprep.subr.mxu0 0.0
    %4445 = vmatpush1.msra.mxu0 %v4251
    %4446 = vmatprep.subr.mxu0 0.0
    %4447 = vmatpush1.msra.mxu0 %v4252
    %4448 = vmatprep.subr.mxu0 0.0
    %4449 = vmatpush1.msra.mxu0 %v4253
    %4450 = vmatprep.subr.mxu0 0.0
    %4451 = vmatpush1.msra.mxu0 %v4254
    %4452 = vmatprep.subr.mxu0 0.0
    %4453 = vmatpush1.msra.mxu0 %v4255
    %4454 = vmatprep.subr.mxu0 0.0
    %4455 = vmatpush1.msra.mxu0 %v4256
    %4456 = vmatprep.subr.mxu0 0.0
    %4457 = vmatpush1.msra.mxu0 0.0
    %4458 = vmatprep.subr.mxu0 0.0
    %4459 = vmatpush1.msra.mxu0 0.0
    %4460 = vmatprep.subr.mxu0 0.0
    %4461 = vmatpush1.msra.mxu0 0.0
    %4462 = vmatprep.subr.mxu0 0.0
    %4463 = vmatpush1.msra.mxu0 0.0
    %4464 = vmatprep.subr.mxu0 0.0
    %4465 = vmatpush1.msra.mxu0 0.0
    %4466 = vmatprep.subr.mxu0 0.0
    %4467 = vmatpush1.msra.mxu0 0.0
    %4468 = vmatprep.subr.mxu0 0.0
    %4469 = vmatpush1.msra.mxu0 0.0
    %4470 = vmatprep.subr.mxu0 0.0
    %4471 = vmatpush1.msra.mxu0 0.0
    %4472 = vmatprep.subr.mxu0 0.0
    %4473 = vmatpush1.msra.mxu0 0.0
    %4474 = vmatprep.subr.mxu0 0.0
    %4475 = vmatpush1.msra.mxu0 0.0
    %4476 = vmatprep.subr.mxu0 0.0
    %4477 = vmatpush1.msra.mxu0 0.0
    %4478 = vmatprep.subr.mxu0 0.0
    %4479 = vmatpush1.msra.mxu0 0.0
    %4480 = vmatprep.subr.mxu0 0.0
    %4481 = vmatpush1.msra.mxu0 0.0
    %4482 = vmatprep.subr.mxu0 0.0
    %4483 = vmatpush1.msra.mxu0 0.0
    %4484 = vmatprep.subr.mxu0 0.0
    %4485 = vmatpush1.msra.mxu0 0.0
    %4486 = vmatprep.subr.mxu0 0.0
    %4487 = vmatpush1.msra.mxu0 0.0
    %4488 = vmatprep.subr.mxu0 0.0
    %4489 = vmatpush1.msra.mxu0 0.0
    %4490 = vmatprep.subr.mxu0 0.0
    %4491 = vmatpush1.msra.mxu0 0.0
    %4492 = vmatprep.subr.mxu0 0.0
    %4493 = vmatpush1.msra.mxu0 0.0
    %4494 = vmatprep.subr.mxu0 0.0
    %4495 = vmatpush1.msra.mxu0 0.0
    %4496 = vmatprep.subr.mxu0 0.0
    %4497 = vmatpush1.msra.mxu0 0.0
    %4498 = vmatprep.mubr.f32.mxu0 0.0
    %4499 = vmatmul.mubr.f32.gmra.mrb[0].mxu0 %v4432
    %v4500 = vpop.f32.mrb[0].mxu0
    %v4501 = vadd.f32 %v4390, %v4500
    %v4502 = vpop.f32.mrb[0].mxu0
    %4503 = vdwg.mxu0
    %s4504 = scalar_lea.vmem %s5, 176
    %v4505 = vld [vmem:[%s4504] sm:$0xff]
    %v4506 = vld [vmem:[%s4504 + $0x8] sm:$0xff]
    %v4507 = vld [vmem:[%s4504 + $0x10] sm:$0xff]
    %v4508 = vld [vmem:[%s4504 + $0x18] sm:$0xff]
    %v4509 = vld [vmem:[%s4504 + $0x20] sm:$0xff]
    %v4510 = vld [vmem:[%s4504 + $0x28] sm:$0xff]
    %v4511 = vld [vmem:[%s4504 + $0x30] sm:$0xff]
    %v4512 = vld [vmem:[%s4504 + $0x38] sm:$0xff]
    %v4513 = vld [vmem:[%s4504 + $0x40] sm:$0xff]
    %v4514 = vld [vmem:[%s4504 + $0x48] sm:$0xff]
    %v4515 = vld [vmem:[%s4504 + $0x50] sm:$0xff]
    %v4516 = vlaneseq
    %v4517 = vshrl.u32 %v4516, 7
    %v4518 = vsub.s32 2, %v4517
    %v4519 = vrot.slane %v4222, %v4518
    %v4520 = vlaneseq
    %v4521 = vshrl.u32 %v4520, 7
    %v4522 = vsub.s32 2, %v4521
    %v4523 = vrot.slane %v4225, %v4522
    %v4524 = vlaneseq
    %v4525 = vshrl.u32 %v4524, 7
    %v4526 = vsub.s32 2, %v4525
    %v4527 = vrot.slane %v4228, %v4526
    %v4528 = vlaneseq
    %v4529 = vshrl.u32 %v4528, 7
    %v4530 = vsub.s32 2, %v4529
    %v4531 = vrot.slane %v4231, %v4530
    %v4532 = vlaneseq
    %v4533 = vshrl.u32 %v4532, 7
    %v4534 = vsub.s32 2, %v4533
    %v4535 = vrot.slane %v4234, %v4534
    %v4536 = vlaneseq
    %v4537 = vshrl.u32 %v4536, 7
    %v4538 = vsub.s32 2, %v4537
    %v4539 = vrot.slane %v4237, %v4538
    %v4540 = vlaneseq
    %v4541 = vshrl.u32 %v4540, 7
    %v4542 = vsub.s32 2, %v4541
    %v4543 = vrot.slane %v4240, %v4542
    %v4544 = vlaneseq
    %v4545 = vshrl.u32 %v4544, 7
    %v4546 = vsub.s32 2, %v4545
    %v4547 = vrot.slane %v4243, %v4546
    %v4548 = vsel %vm4309, %v4523, %v4519
    %v4549 = vsel %vm343, %v4527, %v4548
    %v4550 = vsel %vm4312, %v4531, %v4549
    %v4551 = vsel %vm345, %v4535, %v4550
    %v4552 = vsel %vm4315, %v4539, %v4551
    %v4553 = vsel %vm347, %v4543, %v4552
    %v4554 = vsel %vm4318, %v4547, %v4553
    %v4555 = vsel %vm4320, %v4554, 0
    %4557 = vmatprep.subr.mxu0 0.0
    %4558 = vmatpush1.msra.mxu0 %v4505
    %4559 = vmatprep.subr.mxu0 0.0
    %4560 = vmatpush1.msra.mxu0 %v4506
    %4561 = vmatprep.subr.mxu0 0.0
    %4562 = vmatpush1.msra.mxu0 %v4507
    %4563 = vmatprep.subr.mxu0 0.0
    %4564 = vmatpush1.msra.mxu0 %v4508
    %4565 = vmatprep.subr.mxu0 0.0
    %4566 = vmatpush1.msra.mxu0 %v4509
    %4567 = vmatprep.subr.mxu0 0.0
    %4568 = vmatpush1.msra.mxu0 %v4510
    %4569 = vmatprep.subr.mxu0 0.0
    %4570 = vmatpush1.msra.mxu0 %v4511
    %4571 = vmatprep.subr.mxu0 0.0
    %4572 = vmatpush1.msra.mxu0 %v4512
    %4573 = vmatprep.subr.mxu0 0.0
    %4574 = vmatpush1.msra.mxu0 %v4513
    %4575 = vmatprep.subr.mxu0 0.0
    %4576 = vmatpush1.msra.mxu0 %v4514
    %4577 = vmatprep.subr.mxu0 0.0
    %4578 = vmatpush1.msra.mxu0 %v4515
    %4579 = vmatprep.subr.mxu0 0.0
    %4580 = vmatpush1.msra.mxu0 0.0
    %4581 = vmatprep.subr.mxu0 0.0
    %4582 = vmatpush1.msra.mxu0 0.0
    %4583 = vmatprep.subr.mxu0 0.0
    %4584 = vmatpush1.msra.mxu0 0.0
    %4585 = vmatprep.subr.mxu0 0.0
    %4586 = vmatpush1.msra.mxu0 0.0
    %4587 = vmatprep.subr.mxu0 0.0
    %4588 = vmatpush1.msra.mxu0 0.0
    %4589 = vmatprep.subr.mxu0 0.0
    %4590 = vmatpush1.msra.mxu0 0.0
    %4591 = vmatprep.subr.mxu0 0.0
    %4592 = vmatpush1.msra.mxu0 0.0
    %4593 = vmatprep.subr.mxu0 0.0
    %4594 = vmatpush1.msra.mxu0 0.0
    %4595 = vmatprep.subr.mxu0 0.0
    %4596 = vmatpush1.msra.mxu0 0.0
    %4597 = vmatprep.subr.mxu0 0.0
    %4598 = vmatpush1.msra.mxu0 0.0
    %4599 = vmatprep.subr.mxu0 0.0
    %4600 = vmatpush1.msra.mxu0 0.0
    %4601 = vmatprep.subr.mxu0 0.0
    %4602 = vmatpush1.msra.mxu0 0.0
    %4603 = vmatprep.subr.mxu0 0.0
    %4604 = vmatpush1.msra.mxu0 0.0
    %4605 = vmatprep.subr.mxu0 0.0
    %4606 = vmatpush1.msra.mxu0 0.0
    %4607 = vmatprep.subr.mxu0 0.0
    %4608 = vmatpush1.msra.mxu0 0.0
    %4609 = vmatprep.subr.mxu0 0.0
    %4610 = vmatpush1.msra.mxu0 0.0
    %4611 = vmatprep.subr.mxu0 0.0
    %4612 = vmatpush1.msra.mxu0 0.0
    %4613 = vmatprep.subr.mxu0 0.0
    %4614 = vmatpush1.msra.mxu0 0.0
    %4615 = vmatprep.subr.mxu0 0.0
    %4616 = vmatpush1.msra.mxu0 0.0
    %4617 = vmatprep.subr.mxu0 0.0
    %4618 = vmatpush1.msra.mxu0 0.0
    %4619 = vmatprep.subr.mxu0 0.0
    %4620 = vmatpush1.msra.mxu0 0.0
    %4621 = vmatprep.mubr.f32.mxu0 0.0
    %4622 = vmatmul.mubr.f32.gmra.mrb[0].mxu0 %v4555
    %v4623 = vpop.f32.mrb[0].mxu0
    %v4624 = vadd.f32 0.0, %v4623
    %v4625 = vpop.f32.mrb[0].mxu0
    %4626 = vdwg.mxu0
    %v4627 = vadd.f32 %v4501, %v4624
    %s4628 = scalar_lea.vmem %s5, 264
    %v4629 = vld [vmem:[%s4628] sm:$0xff]
    %v4630 = vld [vmem:[%s4628 + $0x8] sm:$0xff]
    %v4631 = vld [vmem:[%s4628 + $0x10] sm:$0xff]
    %v4632 = vld [vmem:[%s4628 + $0x18] sm:$0xff]
    %v4633 = vld [vmem:[%s4628 + $0x20] sm:$0xff]
    %v4634 = vld [vmem:[%s4628 + $0x28] sm:$0xff]
    %v4635 = vld [vmem:[%s4628 + $0x30] sm:$0xff]
    %v4636 = vld [vmem:[%s4628 + $0x38] sm:$0xff]
    %v4637 = vld [vmem:[%s4628 + $0x40] sm:$0xff]
    %v4638 = vld [vmem:[%s4628 + $0x48] sm:$0xff]
    %v4639 = vld [vmem:[%s4628 + $0x50] sm:$0xff]
    %v4640 = vlaneseq
    %v4641 = vshrl.u32 %v4640, 7
    %v4642 = vsub.s32 3, %v4641
    %v4643 = vrot.slane %v4222, %v4642
    %v4644 = vlaneseq
    %v4645 = vshrl.u32 %v4644, 7
    %v4646 = vsub.s32 3, %v4645
    %v4647 = vrot.slane %v4225, %v4646
    %v4648 = vlaneseq
    %v4649 = vshrl.u32 %v4648, 7
    %v4650 = vsub.s32 3, %v4649
    %v4651 = vrot.slane %v4228, %v4650
    %v4652 = vlaneseq
    %v4653 = vshrl.u32 %v4652, 7
    %v4654 = vsub.s32 3, %v4653
    %v4655 = vrot.slane %v4231, %v4654
    %v4656 = vlaneseq
    %v4657 = vshrl.u32 %v4656, 7
    %v4658 = vsub.s32 3, %v4657
    %v4659 = vrot.slane %v4234, %v4658
    %v4660 = vlaneseq
    %v4661 = vshrl.u32 %v4660, 7
    %v4662 = vsub.s32 3, %v4661
    %v4663 = vrot.slane %v4237, %v4662
    %v4664 = vlaneseq
    %v4665 = vshrl.u32 %v4664, 7
    %v4666 = vsub.s32 3, %v4665
    %v4667 = vrot.slane %v4240, %v4666
    %v4668 = vlaneseq
    %v4669 = vshrl.u32 %v4668, 7
    %v4670 = vsub.s32 3, %v4669
    %v4671 = vrot.slane %v4243, %v4670
    %v4672 = vsel %vm4309, %v4647, %v4643
    %v4673 = vsel %vm343, %v4651, %v4672
    %v4674 = vsel %vm4312, %v4655, %v4673
    %v4675 = vsel %vm345, %v4659, %v4674
    %v4676 = vsel %vm4315, %v4663, %v4675
    %v4677 = vsel %vm347, %v4667, %v4676
    %v4678 = vsel %vm4318, %v4671, %v4677
    %v4679 = vsel %vm4320, %v4678, 0
    %4681 = vmatprep.subr.mxu0 0.0
    %4682 = vmatpush1.msra.mxu0 %v4629
    %4683 = vmatprep.subr.mxu0 0.0
    %4684 = vmatpush1.msra.mxu0 %v4630
    %4685 = vmatprep.subr.mxu0 0.0
    %4686 = vmatpush1.msra.mxu0 %v4631
    %4687 = vmatprep.subr.mxu0 0.0
    %4688 = vmatpush1.msra.mxu0 %v4632
    %4689 = vmatprep.subr.mxu0 0.0
    %4690 = vmatpush1.msra.mxu0 %v4633
    %4691 = vmatprep.subr.mxu0 0.0
    %4692 = vmatpush1.msra.mxu0 %v4634
    %4693 = vmatprep.subr.mxu0 0.0
    %4694 = vmatpush1.msra.mxu0 %v4635
    %4695 = vmatprep.subr.mxu0 0.0
    %4696 = vmatpush1.msra.mxu0 %v4636
    %4697 = vmatprep.subr.mxu0 0.0
    %4698 = vmatpush1.msra.mxu0 %v4637
    %4699 = vmatprep.subr.mxu0 0.0
    %4700 = vmatpush1.msra.mxu0 %v4638
    %4701 = vmatprep.subr.mxu0 0.0
    %4702 = vmatpush1.msra.mxu0 %v4639
    %4703 = vmatprep.subr.mxu0 0.0
    %4704 = vmatpush1.msra.mxu0 0.0
    %4705 = vmatprep.subr.mxu0 0.0
    %4706 = vmatpush1.msra.mxu0 0.0
    %4707 = vmatprep.subr.mxu0 0.0
    %4708 = vmatpush1.msra.mxu0 0.0
    %4709 = vmatprep.subr.mxu0 0.0
    %4710 = vmatpush1.msra.mxu0 0.0
    %4711 = vmatprep.subr.mxu0 0.0
    %4712 = vmatpush1.msra.mxu0 0.0
    %4713 = vmatprep.subr.mxu0 0.0
    %4714 = vmatpush1.msra.mxu0 0.0
    %4715 = vmatprep.subr.mxu0 0.0
    %4716 = vmatpush1.msra.mxu0 0.0
    %4717 = vmatprep.subr.mxu0 0.0
    %4718 = vmatpush1.msra.mxu0 0.0
    %4719 = vmatprep.subr.mxu0 0.0
    %4720 = vmatpush1.msra.mxu0 0.0
    %4721 = vmatprep.subr.mxu0 0.0
    %4722 = vmatpush1.msra.mxu0 0.0
    %4723 = vmatprep.subr.mxu0 0.0
    %4724 = vmatpush1.msra.mxu0 0.0
    %4725 = vmatprep.subr.mxu0 0.0
    %4726 = vmatpush1.msra.mxu0 0.0
    %4727 = vmatprep.subr.mxu0 0.0
    %4728 = vmatpush1.msra.mxu0 0.0
    %4729 = vmatprep.subr.mxu0 0.0
    %4730 = vmatpush1.msra.mxu0 0.0
    %4731 = vmatprep.subr.mxu0 0.0
    %4732 = vmatpush1.msra.mxu0 0.0
    %4733 = vmatprep.subr.mxu0 0.0
    %4734 = vmatpush1.msra.mxu0 0.0
    %4735 = vmatprep.subr.mxu0 0.0
    %4736 = vmatpush1.msra.mxu0 0.0
    %4737 = vmatprep.subr.mxu0 0.0
    %4738 = vmatpush1.msra.mxu0 0.0
    %4739 = vmatprep.subr.mxu0 0.0
    %4740 = vmatpush1.msra.mxu0 0.0
    %4741 = vmatprep.subr.mxu0 0.0
    %4742 = vmatpush1.msra.mxu0 0.0
    %4743 = vmatprep.subr.mxu0 0.0
    %4744 = vmatpush1.msra.mxu0 0.0
    %4745 = vmatprep.mubr.f32.mxu0 0.0
    %4746 = vmatmul.mubr.f32.gmra.mrb[0].mxu0 %v4679
    %v4747 = vpop.f32.mrb[0].mxu0
    %v4748 = vadd.f32 0.0, %v4747
    %v4749 = vpop.f32.mrb[0].mxu0
    %4750 = vdwg.mxu0
    %v4751 = vadd.f32 %v4627, %v4748
    %s4752 = scalar_lea.vmem %s5, 352
    %v4753 = vld [vmem:[%s4752] sm:$0xff]
    %v4754 = vld [vmem:[%s4752 + $0x8] sm:$0xff]
    %v4755 = vld [vmem:[%s4752 + $0x10] sm:$0xff]
    %v4756 = vld [vmem:[%s4752 + $0x18] sm:$0xff]
    %v4757 = vld [vmem:[%s4752 + $0x20] sm:$0xff]
    %v4758 = vld [vmem:[%s4752 + $0x28] sm:$0xff]
    %v4759 = vld [vmem:[%s4752 + $0x30] sm:$0xff]
    %v4760 = vld [vmem:[%s4752 + $0x38] sm:$0xff]
    %v4761 = vld [vmem:[%s4752 + $0x40] sm:$0xff]
    %v4762 = vld [vmem:[%s4752 + $0x48] sm:$0xff]
    %v4763 = vld [vmem:[%s4752 + $0x50] sm:$0xff]
    %v4772 = vlaneseq
    %v4773 = vshrl.u32 %v4772, 7
    %v4774 = vsub.s32 0, %v4773
    %v4775 = vrot.slane %v4223, %v4774
    %v4776 = vlaneseq
    %v4777 = vshrl.u32 %v4776, 7
    %v4778 = vsub.s32 0, %v4777
    %v4779 = vrot.slane %v4226, %v4778
    %v4780 = vlaneseq
    %v4781 = vshrl.u32 %v4780, 7
    %v4782 = vsub.s32 0, %v4781
    %v4783 = vrot.slane %v4229, %v4782
    %v4784 = vlaneseq
    %v4785 = vshrl.u32 %v4784, 7
    %v4786 = vsub.s32 0, %v4785
    %v4787 = vrot.slane %v4232, %v4786
    %v4788 = vlaneseq
    %v4789 = vshrl.u32 %v4788, 7
    %v4790 = vsub.s32 0, %v4789
    %v4791 = vrot.slane %v4235, %v4790
    %v4792 = vlaneseq
    %v4793 = vshrl.u32 %v4792, 7
    %v4794 = vsub.s32 0, %v4793
    %v4795 = vrot.slane %v4238, %v4794
    %v4796 = vlaneseq
    %v4797 = vshrl.u32 %v4796, 7
    %v4798 = vsub.s32 0, %v4797
    %v4799 = vrot.slane %v4241, %v4798
    %v4800 = vlaneseq
    %v4801 = vshrl.u32 %v4800, 7
    %v4802 = vsub.s32 0, %v4801
    %v4803 = vrot.slane %v4244, %v4802
    %v4804 = vsel %vm4309, %v4779, %v4775
    %v4805 = vsel %vm343, %v4783, %v4804
    %v4806 = vsel %vm4312, %v4787, %v4805
    %v4807 = vsel %vm345, %v4791, %v4806
    %v4808 = vsel %vm4315, %v4795, %v4807
    %v4809 = vsel %vm347, %v4799, %v4808
    %v4810 = vsel %vm4318, %v4803, %v4809
    %v4811 = vsel %vm4320, %v4810, 0
    %4813 = vmatprep.subr.mxu0 0.0
    %4814 = vmatpush1.msra.mxu0 %v4753
    %4815 = vmatprep.subr.mxu0 0.0
    %4816 = vmatpush1.msra.mxu0 %v4754
    %4817 = vmatprep.subr.mxu0 0.0
    %4818 = vmatpush1.msra.mxu0 %v4755
    %4819 = vmatprep.subr.mxu0 0.0
    %4820 = vmatpush1.msra.mxu0 %v4756
    %4821 = vmatprep.subr.mxu0 0.0
    %4822 = vmatpush1.msra.mxu0 %v4757
    %4823 = vmatprep.subr.mxu0 0.0
    %4824 = vmatpush1.msra.mxu0 %v4758
    %4825 = vmatprep.subr.mxu0 0.0
    %4826 = vmatpush1.msra.mxu0 %v4759
    %4827 = vmatprep.subr.mxu0 0.0
    %4828 = vmatpush1.msra.mxu0 %v4760
    %4829 = vmatprep.subr.mxu0 0.0
    %4830 = vmatpush1.msra.mxu0 %v4761
    %4831 = vmatprep.subr.mxu0 0.0
    %4832 = vmatpush1.msra.mxu0 %v4762
    %4833 = vmatprep.subr.mxu0 0.0
    %4834 = vmatpush1.msra.mxu0 %v4763
    %4835 = vmatprep.subr.mxu0 0.0
    %4836 = vmatpush1.msra.mxu0 0.0
    %4837 = vmatprep.subr.mxu0 0.0
    %4838 = vmatpush1.msra.mxu0 0.0
    %4839 = vmatprep.subr.mxu0 0.0
    %4840 = vmatpush1.msra.mxu0 0.0
    %4841 = vmatprep.subr.mxu0 0.0
    %4842 = vmatpush1.msra.mxu0 0.0
    %4843 = vmatprep.subr.mxu0 0.0
    %4844 = vmatpush1.msra.mxu0 0.0
    %4845 = vmatprep.subr.mxu0 0.0
    %4846 = vmatpush1.msra.mxu0 0.0
    %4847 = vmatprep.subr.mxu0 0.0
    %4848 = vmatpush1.msra.mxu0 0.0
    %4849 = vmatprep.subr.mxu0 0.0
    %4850 = vmatpush1.msra.mxu0 0.0
    %4851 = vmatprep.subr.mxu0 0.0
    %4852 = vmatpush1.msra.mxu0 0.0
    %4853 = vmatprep.subr.mxu0 0.0
    %4854 = vmatpush1.msra.mxu0 0.0
    %4855 = vmatprep.subr.mxu0 0.0
    %4856 = vmatpush1.msra.mxu0 0.0
    %4857 = vmatprep.subr.mxu0 0.0
    %4858 = vmatpush1.msra.mxu0 0.0
    %4859 = vmatprep.subr.mxu0 0.0
    %4860 = vmatpush1.msra.mxu0 0.0
    %4861 = vmatprep.subr.mxu0 0.0
    %4862 = vmatpush1.msra.mxu0 0.0
    %4863 = vmatprep.subr.mxu0 0.0
    %4864 = vmatpush1.msra.mxu0 0.0
    %4865 = vmatprep.subr.mxu0 0.0
    %4866 = vmatpush1.msra.mxu0 0.0
    %4867 = vmatprep.subr.mxu0 0.0
    %4868 = vmatpush1.msra.mxu0 0.0
    %4869 = vmatprep.subr.mxu0 0.0
    %4870 = vmatpush1.msra.mxu0 0.0
    %4871 = vmatprep.subr.mxu0 0.0
    %4872 = vmatpush1.msra.mxu0 0.0
    %4873 = vmatprep.subr.mxu0 0.0
    %4874 = vmatpush1.msra.mxu0 0.0
    %4875 = vmatprep.subr.mxu0 0.0
    %4876 = vmatpush1.msra.mxu0 0.0
    %4877 = vmatprep.mubr.f32.mxu0 0.0
    %4878 = vmatmul.mubr.f32.gmra.mrb[0].mxu0 %v4811
    %v4879 = vpop.f32.mrb[0].mxu0
    %v4880 = vadd.f32 0.0, %v4879
    %v4881 = vpop.f32.mrb[0].mxu0
    %4882 = vdwg.mxu0
    %v4883 = vadd.f32 %v4751, %v4880
    %s4884 = scalar_lea.vmem %s5, 440
    %v4885 = vld [vmem:[%s4884] sm:$0xff]
    %v4886 = vld [vmem:[%s4884 + $0x8] sm:$0xff]
    %v4887 = vld [vmem:[%s4884 + $0x10] sm:$0xff]
    %v4888 = vld [vmem:[%s4884 + $0x18] sm:$0xff]
    %v4889 = vld [vmem:[%s4884 + $0x20] sm:$0xff]
    %v4890 = vld [vmem:[%s4884 + $0x28] sm:$0xff]
    %v4891 = vld [vmem:[%s4884 + $0x30] sm:$0xff]
    %v4892 = vld [vmem:[%s4884 + $0x38] sm:$0xff]
    %v4893 = vld [vmem:[%s4884 + $0x40] sm:$0xff]
    %v4894 = vld [vmem:[%s4884 + $0x48] sm:$0xff]
    %v4895 = vld [vmem:[%s4884 + $0x50] sm:$0xff]
    %v4896 = vlaneseq
    %v4897 = vshrl.u32 %v4896, 7
    %v4898 = vsub.s32 1, %v4897
    %v4899 = vrot.slane %v4223, %v4898
    %v4900 = vlaneseq
    %v4901 = vshrl.u32 %v4900, 7
    %v4902 = vsub.s32 1, %v4901
    %v4903 = vrot.slane %v4226, %v4902
    %v4904 = vlaneseq
    %v4905 = vshrl.u32 %v4904, 7
    %v4906 = vsub.s32 1, %v4905
    %v4907 = vrot.slane %v4229, %v4906
    %v4908 = vlaneseq
    %v4909 = vshrl.u32 %v4908, 7
    %v4910 = vsub.s32 1, %v4909
    %v4911 = vrot.slane %v4232, %v4910
    %v4912 = vlaneseq
    %v4913 = vshrl.u32 %v4912, 7
    %v4914 = vsub.s32 1, %v4913
    %v4915 = vrot.slane %v4235, %v4914
    %v4916 = vlaneseq
    %v4917 = vshrl.u32 %v4916, 7
    %v4918 = vsub.s32 1, %v4917
    %v4919 = vrot.slane %v4238, %v4918
    %v4920 = vlaneseq
    %v4921 = vshrl.u32 %v4920, 7
    %v4922 = vsub.s32 1, %v4921
    %v4923 = vrot.slane %v4241, %v4922
    %v4924 = vlaneseq
    %v4925 = vshrl.u32 %v4924, 7
    %v4926 = vsub.s32 1, %v4925
    %v4927 = vrot.slane %v4244, %v4926
    %v4928 = vsel %vm4309, %v4903, %v4899
    %v4929 = vsel %vm343, %v4907, %v4928
    %v4930 = vsel %vm4312, %v4911, %v4929
    %v4931 = vsel %vm345, %v4915, %v4930
    %v4932 = vsel %vm4315, %v4919, %v4931
    %v4933 = vsel %vm347, %v4923, %v4932
    %v4934 = vsel %vm4318, %v4927, %v4933
    %v4935 = vsel %vm4320, %v4934, 0
    %4937 = vmatprep.subr.mxu0 0.0
    %4938 = vmatpush1.msra.mxu0 %v4885
    %4939 = vmatprep.subr.mxu0 0.0
    %4940 = vmatpush1.msra.mxu0 %v4886
    %4941 = vmatprep.subr.mxu0 0.0
    %4942 = vmatpush1.msra.mxu0 %v4887
    %4943 = vmatprep.subr.mxu0 0.0
    %4944 = vmatpush1.msra.mxu0 %v4888
    %4945 = vmatprep.subr.mxu0 0.0
    %4946 = vmatpush1.msra.mxu0 %v4889
    %4947 = vmatprep.subr.mxu0 0.0
    %4948 = vmatpush1.msra.mxu0 %v4890
    %4949 = vmatprep.subr.mxu0 0.0
    %4950 = vmatpush1.msra.mxu0 %v4891
    %4951 = vmatprep.subr.mxu0 0.0
    %4952 = vmatpush1.msra.mxu0 %v4892
    %4953 = vmatprep.subr.mxu0 0.0
    %4954 = vmatpush1.msra.mxu0 %v4893
    %4955 = vmatprep.subr.mxu0 0.0
    %4956 = vmatpush1.msra.mxu0 %v4894
    %4957 = vmatprep.subr.mxu0 0.0
    %4958 = vmatpush1.msra.mxu0 %v4895
    %4959 = vmatprep.subr.mxu0 0.0
    %4960 = vmatpush1.msra.mxu0 0.0
    %4961 = vmatprep.subr.mxu0 0.0
    %4962 = vmatpush1.msra.mxu0 0.0
    %4963 = vmatprep.subr.mxu0 0.0
    %4964 = vmatpush1.msra.mxu0 0.0
    %4965 = vmatprep.subr.mxu0 0.0
    %4966 = vmatpush1.msra.mxu0 0.0
    %4967 = vmatprep.subr.mxu0 0.0
    %4968 = vmatpush1.msra.mxu0 0.0
    %4969 = vmatprep.subr.mxu0 0.0
    %4970 = vmatpush1.msra.mxu0 0.0
    %4971 = vmatprep.subr.mxu0 0.0
    %4972 = vmatpush1.msra.mxu0 0.0
    %4973 = vmatprep.subr.mxu0 0.0
    %4974 = vmatpush1.msra.mxu0 0.0
    %4975 = vmatprep.subr.mxu0 0.0
    %4976 = vmatpush1.msra.mxu0 0.0
    %4977 = vmatprep.subr.mxu0 0.0
    %4978 = vmatpush1.msra.mxu0 0.0
    %4979 = vmatprep.subr.mxu0 0.0
    %4980 = vmatpush1.msra.mxu0 0.0
    %4981 = vmatprep.subr.mxu0 0.0
    %4982 = vmatpush1.msra.mxu0 0.0
    %4983 = vmatprep.subr.mxu0 0.0
    %4984 = vmatpush1.msra.mxu0 0.0
    %4985 = vmatprep.subr.mxu0 0.0
    %4986 = vmatpush1.msra.mxu0 0.0
    %4987 = vmatprep.subr.mxu0 0.0
    %4988 = vmatpush1.msra.mxu0 0.0
    %4989 = vmatprep.subr.mxu0 0.0
    %4990 = vmatpush1.msra.mxu0 0.0
    %4991 = vmatprep.subr.mxu0 0.0
    %4992 = vmatpush1.msra.mxu0 0.0
    %4993 = vmatprep.subr.mxu0 0.0
    %4994 = vmatpush1.msra.mxu0 0.0
    %4995 = vmatprep.subr.mxu0 0.0
    %4996 = vmatpush1.msra.mxu0 0.0
    %4997 = vmatprep.subr.mxu0 0.0
    %4998 = vmatpush1.msra.mxu0 0.0
    %4999 = vmatprep.subr.mxu0 0.0
    %5000 = vmatpush1.msra.mxu0 0.0
    %5001 = vmatprep.mubr.f32.mxu0 0.0
    %5002 = vmatmul.mubr.f32.gmra.mrb[0].mxu0 %v4935
    %v5003 = vpop.f32.mrb[0].mxu0
    %v5004 = vadd.f32 0.0, %v5003
    %v5005 = vpop.f32.mrb[0].mxu0
    %5006 = vdwg.mxu0
    %v5007 = vadd.f32 %v4883, %v5004
    %s5008 = scalar_lea.vmem %s5, 528
    %v5009 = vld [vmem:[%s5008] sm:$0xff]
    %v5010 = vld [vmem:[%s5008 + $0x8] sm:$0xff]
    %v5011 = vld [vmem:[%s5008 + $0x10] sm:$0xff]
    %v5012 = vld [vmem:[%s5008 + $0x18] sm:$0xff]
    %v5013 = vld [vmem:[%s5008 + $0x20] sm:$0xff]
    %v5014 = vld [vmem:[%s5008 + $0x28] sm:$0xff]
    %v5015 = vld [vmem:[%s5008 + $0x30] sm:$0xff]
    %v5016 = vld [vmem:[%s5008 + $0x38] sm:$0xff]
    %v5017 = vld [vmem:[%s5008 + $0x40] sm:$0xff]
    %v5018 = vld [vmem:[%s5008 + $0x48] sm:$0xff]
    %v5019 = vld [vmem:[%s5008 + $0x50] sm:$0xff]
    %v5020 = vlaneseq
    %v5021 = vshrl.u32 %v5020, 7
    %v5022 = vsub.s32 2, %v5021
    %v5023 = vrot.slane %v4223, %v5022
    %v5024 = vlaneseq
    %v5025 = vshrl.u32 %v5024, 7
    %v5026 = vsub.s32 2, %v5025
    %v5027 = vrot.slane %v4226, %v5026
    %v5028 = vlaneseq
    %v5029 = vshrl.u32 %v5028, 7
    %v5030 = vsub.s32 2, %v5029
    %v5031 = vrot.slane %v4229, %v5030
    %v5032 = vlaneseq
    %v5033 = vshrl.u32 %v5032, 7
    %v5034 = vsub.s32 2, %v5033
    %v5035 = vrot.slane %v4232, %v5034
    %v5036 = vlaneseq
    %v5037 = vshrl.u32 %v5036, 7
    %v5038 = vsub.s32 2, %v5037
    %v5039 = vrot.slane %v4235, %v5038
    %v5040 = vlaneseq
    %v5041 = vshrl.u32 %v5040, 7
    %v5042 = vsub.s32 2, %v5041
    %v5043 = vrot.slane %v4238, %v5042
    %v5044 = vlaneseq
    %v5045 = vshrl.u32 %v5044, 7
    %v5046 = vsub.s32 2, %v5045
    %v5047 = vrot.slane %v4241, %v5046
    %v5048 = vlaneseq
    %v5049 = vshrl.u32 %v5048, 7
    %v5050 = vsub.s32 2, %v5049
    %v5051 = vrot.slane %v4244, %v5050
    %v5052 = vsel %vm4309, %v5027, %v5023
    %v5053 = vsel %vm343, %v5031, %v5052
    %v5054 = vsel %vm4312, %v5035, %v5053
    %v5055 = vsel %vm345, %v5039, %v5054
    %v5056 = vsel %vm4315, %v5043, %v5055
    %v5057 = vsel %vm347, %v5047, %v5056
    %v5058 = vsel %vm4318, %v5051, %v5057
    %v5059 = vsel %vm4320, %v5058, 0
    %5061 = vmatprep.subr.mxu0 0.0
    %5062 = vmatpush1.msra.mxu0 %v5009
    %5063 = vmatprep.subr.mxu0 0.0
    %5064 = vmatpush1.msra.mxu0 %v5010
    %5065 = vmatprep.subr.mxu0 0.0
    %5066 = vmatpush1.msra.mxu0 %v5011
    %5067 = vmatprep.subr.mxu0 0.0
    %5068 = vmatpush1.msra.mxu0 %v5012
    %5069 = vmatprep.subr.mxu0 0.0
    %5070 = vmatpush1.msra.mxu0 %v5013
    %5071 = vmatprep.subr.mxu0 0.0
    %5072 = vmatpush1.msra.mxu0 %v5014
    %5073 = vmatprep.subr.mxu0 0.0
    %5074 = vmatpush1.msra.mxu0 %v5015
    %5075 = vmatprep.subr.mxu0 0.0
    %5076 = vmatpush1.msra.mxu0 %v5016
    %5077 = vmatprep.subr.mxu0 0.0
    %5078 = vmatpush1.msra.mxu0 %v5017
    %5079 = vmatprep.subr.mxu0 0.0
    %5080 = vmatpush1.msra.mxu0 %v5018
    %5081 = vmatprep.subr.mxu0 0.0
    %5082 = vmatpush1.msra.mxu0 %v5019
    %5083 = vmatprep.subr.mxu0 0.0
    %5084 = vmatpush1.msra.mxu0 0.0
    %5085 = vmatprep.subr.mxu0 0.0
    %5086 = vmatpush1.msra.mxu0 0.0
    %5087 = vmatprep.subr.mxu0 0.0
    %5088 = vmatpush1.msra.mxu0 0.0
    %5089 = vmatprep.subr.mxu0 0.0
    %5090 = vmatpush1.msra.mxu0 0.0
    %5091 = vmatprep.subr.mxu0 0.0
    %5092 = vmatpush1.msra.mxu0 0.0
    %5093 = vmatprep.subr.mxu0 0.0
    %5094 = vmatpush1.msra.mxu0 0.0
    %5095 = vmatprep.subr.mxu0 0.0
    %5096 = vmatpush1.msra.mxu0 0.0
    %5097 = vmatprep.subr.mxu0 0.0
    %5098 = vmatpush1.msra.mxu0 0.0
    %5099 = vmatprep.subr.mxu0 0.0
    %5100 = vmatpush1.msra.mxu0 0.0
    %5101 = vmatprep.subr.mxu0 0.0
    %5102 = vmatpush1.msra.mxu0 0.0
    %5103 = vmatprep.subr.mxu0 0.0
    %5104 = vmatpush1.msra.mxu0 0.0
    %5105 = vmatprep.subr.mxu0 0.0
    %5106 = vmatpush1.msra.mxu0 0.0
    %5107 = vmatprep.subr.mxu0 0.0
    %5108 = vmatpush1.msra.mxu0 0.0
    %5109 = vmatprep.subr.mxu0 0.0
    %5110 = vmatpush1.msra.mxu0 0.0
    %5111 = vmatprep.subr.mxu0 0.0
    %5112 = vmatpush1.msra.mxu0 0.0
    %5113 = vmatprep.subr.mxu0 0.0
    %5114 = vmatpush1.msra.mxu0 0.0
    %5115 = vmatprep.subr.mxu0 0.0
    %5116 = vmatpush1.msra.mxu0 0.0
    %5117 = vmatprep.subr.mxu0 0.0
    %5118 = vmatpush1.msra.mxu0 0.0
    %5119 = vmatprep.subr.mxu0 0.0
    %5120 = vmatpush1.msra.mxu0 0.0
    %5121 = vmatprep.subr.mxu0 0.0
    %5122 = vmatpush1.msra.mxu0 0.0
    %5123 = vmatprep.subr.mxu0 0.0
    %5124 = vmatpush1.msra.mxu0 0.0
    %5125 = vmatprep.mubr.f32.mxu0 0.0
    %5126 = vmatmul.mubr.f32.gmra.mrb[0].mxu0 %v5059
    %v5127 = vpop.f32.mrb[0].mxu0
    %v5128 = vadd.f32 0.0, %v5127
    %v5129 = vpop.f32.mrb[0].mxu0
    %5130 = vdwg.mxu0
    %v5131 = vadd.f32 %v5007, %v5128
    %s5132 = scalar_lea.vmem %s5, 616
    %v5133 = vld [vmem:[%s5132] sm:$0xff]
    %v5134 = vld [vmem:[%s5132 + $0x8] sm:$0xff]
    %v5135 = vld [vmem:[%s5132 + $0x10] sm:$0xff]
    %v5136 = vld [vmem:[%s5132 + $0x18] sm:$0xff]
    %v5137 = vld [vmem:[%s5132 + $0x20] sm:$0xff]
    %v5138 = vld [vmem:[%s5132 + $0x28] sm:$0xff]
    %v5139 = vld [vmem:[%s5132 + $0x30] sm:$0xff]
    %v5140 = vld [vmem:[%s5132 + $0x38] sm:$0xff]
    %v5141 = vld [vmem:[%s5132 + $0x40] sm:$0xff]
    %v5142 = vld [vmem:[%s5132 + $0x48] sm:$0xff]
    %v5143 = vld [vmem:[%s5132 + $0x50] sm:$0xff]
    %v5144 = vlaneseq
    %v5145 = vshrl.u32 %v5144, 7
    %v5146 = vsub.s32 3, %v5145
    %v5147 = vrot.slane %v4223, %v5146
    %v5148 = vlaneseq
    %v5149 = vshrl.u32 %v5148, 7
    %v5150 = vsub.s32 3, %v5149
    %v5151 = vrot.slane %v4226, %v5150
    %v5152 = vlaneseq
    %v5153 = vshrl.u32 %v5152, 7
    %v5154 = vsub.s32 3, %v5153
    %v5155 = vrot.slane %v4229, %v5154
    %v5156 = vlaneseq
    %v5157 = vshrl.u32 %v5156, 7
    %v5158 = vsub.s32 3, %v5157
    %v5159 = vrot.slane %v4232, %v5158
    %v5160 = vlaneseq
    %v5161 = vshrl.u32 %v5160, 7
    %v5162 = vsub.s32 3, %v5161
    %v5163 = vrot.slane %v4235, %v5162
    %v5164 = vlaneseq
    %v5165 = vshrl.u32 %v5164, 7
    %v5166 = vsub.s32 3, %v5165
    %v5167 = vrot.slane %v4238, %v5166
    %v5168 = vlaneseq
    %v5169 = vshrl.u32 %v5168, 7
    %v5170 = vsub.s32 3, %v5169
    %v5171 = vrot.slane %v4241, %v5170
    %v5172 = vlaneseq
    %v5173 = vshrl.u32 %v5172, 7
    %v5174 = vsub.s32 3, %v5173
    %v5175 = vrot.slane %v4244, %v5174
    %v5176 = vsel %vm4309, %v5151, %v5147
    %v5177 = vsel %vm343, %v5155, %v5176
    %v5178 = vsel %vm4312, %v5159, %v5177
    %v5179 = vsel %vm345, %v5163, %v5178
    %v5180 = vsel %vm4315, %v5167, %v5179
    %v5181 = vsel %vm347, %v5171, %v5180
    %v5182 = vsel %vm4318, %v5175, %v5181
    %v5183 = vsel %vm4320, %v5182, 0
    %5185 = vmatprep.subr.mxu0 0.0
    %5186 = vmatpush1.msra.mxu0 %v5133
    %5187 = vmatprep.subr.mxu0 0.0
    %5188 = vmatpush1.msra.mxu0 %v5134
    %5189 = vmatprep.subr.mxu0 0.0
    %5190 = vmatpush1.msra.mxu0 %v5135
    %5191 = vmatprep.subr.mxu0 0.0
    %5192 = vmatpush1.msra.mxu0 %v5136
    %5193 = vmatprep.subr.mxu0 0.0
    %5194 = vmatpush1.msra.mxu0 %v5137
    %5195 = vmatprep.subr.mxu0 0.0
    %5196 = vmatpush1.msra.mxu0 %v5138
    %5197 = vmatprep.subr.mxu0 0.0
    %5198 = vmatpush1.msra.mxu0 %v5139
    %5199 = vmatprep.subr.mxu0 0.0
    %5200 = vmatpush1.msra.mxu0 %v5140
    %5201 = vmatprep.subr.mxu0 0.0
    %5202 = vmatpush1.msra.mxu0 %v5141
    %5203 = vmatprep.subr.mxu0 0.0
    %5204 = vmatpush1.msra.mxu0 %v5142
    %5205 = vmatprep.subr.mxu0 0.0
    %5206 = vmatpush1.msra.mxu0 %v5143
    %5207 = vmatprep.subr.mxu0 0.0
    %5208 = vmatpush1.msra.mxu0 0.0
    %5209 = vmatprep.subr.mxu0 0.0
    %5210 = vmatpush1.msra.mxu0 0.0
    %5211 = vmatprep.subr.mxu0 0.0
    %5212 = vmatpush1.msra.mxu0 0.0
    %5213 = vmatprep.subr.mxu0 0.0
    %5214 = vmatpush1.msra.mxu0 0.0
    %5215 = vmatprep.subr.mxu0 0.0
    %5216 = vmatpush1.msra.mxu0 0.0
    %5217 = vmatprep.subr.mxu0 0.0
    %5218 = vmatpush1.msra.mxu0 0.0
    %5219 = vmatprep.subr.mxu0 0.0
    %5220 = vmatpush1.msra.mxu0 0.0
    %5221 = vmatprep.subr.mxu0 0.0
    %5222 = vmatpush1.msra.mxu0 0.0
    %5223 = vmatprep.subr.mxu0 0.0
    %5224 = vmatpush1.msra.mxu0 0.0
    %5225 = vmatprep.subr.mxu0 0.0
    %5226 = vmatpush1.msra.mxu0 0.0
    %5227 = vmatprep.subr.mxu0 0.0
    %5228 = vmatpush1.msra.mxu0 0.0
    %5229 = vmatprep.subr.mxu0 0.0
    %5230 = vmatpush1.msra.mxu0 0.0
    %5231 = vmatprep.subr.mxu0 0.0
    %5232 = vmatpush1.msra.mxu0 0.0
    %5233 = vmatprep.subr.mxu0 0.0
    %5234 = vmatpush1.msra.mxu0 0.0
    %5235 = vmatprep.subr.mxu0 0.0
    %5236 = vmatpush1.msra.mxu0 0.0
    %5237 = vmatprep.subr.mxu0 0.0
    %5238 = vmatpush1.msra.mxu0 0.0
    %5239 = vmatprep.subr.mxu0 0.0
    %5240 = vmatpush1.msra.mxu0 0.0
    %5241 = vmatprep.subr.mxu0 0.0
    %5242 = vmatpush1.msra.mxu0 0.0
    %5243 = vmatprep.subr.mxu0 0.0
    %5244 = vmatpush1.msra.mxu0 0.0
    %5245 = vmatprep.subr.mxu0 0.0
    %5246 = vmatpush1.msra.mxu0 0.0
    %5247 = vmatprep.subr.mxu0 0.0
    %5248 = vmatpush1.msra.mxu0 0.0
    %5249 = vmatprep.mubr.f32.mxu0 0.0
    %5250 = vmatmul.mubr.f32.gmra.mrb[0].mxu0 %v5183
    %v5251 = vpop.f32.mrb[0].mxu0
    %v5252 = vadd.f32 0.0, %v5251
    %v5253 = vpop.f32.mrb[0].mxu0
    %5254 = vdwg.mxu0
    %v5255 = vadd.f32 %v5131, %v5252
    %s5256 = scalar_lea.vmem %s5, 704
    %v5257 = vld [vmem:[%s5256] sm:$0xff]
    %v5258 = vld [vmem:[%s5256 + $0x8] sm:$0xff]
    %v5259 = vld [vmem:[%s5256 + $0x10] sm:$0xff]
    %v5260 = vld [vmem:[%s5256 + $0x18] sm:$0xff]
    %v5261 = vld [vmem:[%s5256 + $0x20] sm:$0xff]
    %v5262 = vld [vmem:[%s5256 + $0x28] sm:$0xff]
    %v5263 = vld [vmem:[%s5256 + $0x30] sm:$0xff]
    %v5264 = vld [vmem:[%s5256 + $0x38] sm:$0xff]
    %v5265 = vld [vmem:[%s5256 + $0x40] sm:$0xff]
    %v5266 = vld [vmem:[%s5256 + $0x48] sm:$0xff]
    %v5267 = vld [vmem:[%s5256 + $0x50] sm:$0xff]
    %v5276 = vlaneseq
    %v5277 = vshrl.u32 %v5276, 7
    %v5278 = vsub.s32 0, %v5277
    %v5279 = vrot.slane %v4224, %v5278
    %v5280 = vlaneseq
    %v5281 = vshrl.u32 %v5280, 7
    %v5282 = vsub.s32 0, %v5281
    %v5283 = vrot.slane %v4227, %v5282
    %v5284 = vlaneseq
    %v5285 = vshrl.u32 %v5284, 7
    %v5286 = vsub.s32 0, %v5285
    %v5287 = vrot.slane %v4230, %v5286
    %v5288 = vlaneseq
    %v5289 = vshrl.u32 %v5288, 7
    %v5290 = vsub.s32 0, %v5289
    %v5291 = vrot.slane %v4233, %v5290
    %v5292 = vlaneseq
    %v5293 = vshrl.u32 %v5292, 7
    %v5294 = vsub.s32 0, %v5293
    %v5295 = vrot.slane %v4236, %v5294
    %v5296 = vlaneseq
    %v5297 = vshrl.u32 %v5296, 7
    %v5298 = vsub.s32 0, %v5297
    %v5299 = vrot.slane %v4239, %v5298
    %v5300 = vlaneseq
    %v5301 = vshrl.u32 %v5300, 7
    %v5302 = vsub.s32 0, %v5301
    %v5303 = vrot.slane %v4242, %v5302
    %v5304 = vlaneseq
    %v5305 = vshrl.u32 %v5304, 7
    %v5306 = vsub.s32 0, %v5305
    %v5307 = vrot.slane %v4245, %v5306
    %v5308 = vsel %vm4309, %v5283, %v5279
    %v5309 = vsel %vm343, %v5287, %v5308
    %v5310 = vsel %vm4312, %v5291, %v5309
    %v5311 = vsel %vm345, %v5295, %v5310
    %v5312 = vsel %vm4315, %v5299, %v5311
    %v5313 = vsel %vm347, %v5303, %v5312
    %v5314 = vsel %vm4318, %v5307, %v5313
    %v5315 = vsel %vm4320, %v5314, 0
    %5317 = vmatprep.subr.mxu0 0.0
    %5318 = vmatpush1.msra.mxu0 %v5257
    %5319 = vmatprep.subr.mxu0 0.0
    %5320 = vmatpush1.msra.mxu0 %v5258
    %5321 = vmatprep.subr.mxu0 0.0
    %5322 = vmatpush1.msra.mxu0 %v5259
    %5323 = vmatprep.subr.mxu0 0.0
    %5324 = vmatpush1.msra.mxu0 %v5260
    %5325 = vmatprep.subr.mxu0 0.0
    %5326 = vmatpush1.msra.mxu0 %v5261
    %5327 = vmatprep.subr.mxu0 0.0
    %5328 = vmatpush1.msra.mxu0 %v5262
    %5329 = vmatprep.subr.mxu0 0.0
    %5330 = vmatpush1.msra.mxu0 %v5263
    %5331 = vmatprep.subr.mxu0 0.0
    %5332 = vmatpush1.msra.mxu0 %v5264
    %5333 = vmatprep.subr.mxu0 0.0
    %5334 = vmatpush1.msra.mxu0 %v5265
    %5335 = vmatprep.subr.mxu0 0.0
    %5336 = vmatpush1.msra.mxu0 %v5266
    %5337 = vmatprep.subr.mxu0 0.0
    %5338 = vmatpush1.msra.mxu0 %v5267
    %5339 = vmatprep.subr.mxu0 0.0
    %5340 = vmatpush1.msra.mxu0 0.0
    %5341 = vmatprep.subr.mxu0 0.0
    %5342 = vmatpush1.msra.mxu0 0.0
    %5343 = vmatprep.subr.mxu0 0.0
    %5344 = vmatpush1.msra.mxu0 0.0
    %5345 = vmatprep.subr.mxu0 0.0
    %5346 = vmatpush1.msra.mxu0 0.0
    %5347 = vmatprep.subr.mxu0 0.0
    %5348 = vmatpush1.msra.mxu0 0.0
    %5349 = vmatprep.subr.mxu0 0.0
    %5350 = vmatpush1.msra.mxu0 0.0
    %5351 = vmatprep.subr.mxu0 0.0
    %5352 = vmatpush1.msra.mxu0 0.0
    %5353 = vmatprep.subr.mxu0 0.0
    %5354 = vmatpush1.msra.mxu0 0.0
    %5355 = vmatprep.subr.mxu0 0.0
    %5356 = vmatpush1.msra.mxu0 0.0
    %5357 = vmatprep.subr.mxu0 0.0
    %5358 = vmatpush1.msra.mxu0 0.0
    %5359 = vmatprep.subr.mxu0 0.0
    %5360 = vmatpush1.msra.mxu0 0.0
    %5361 = vmatprep.subr.mxu0 0.0
    %5362 = vmatpush1.msra.mxu0 0.0
    %5363 = vmatprep.subr.mxu0 0.0
    %5364 = vmatpush1.msra.mxu0 0.0
    %5365 = vmatprep.subr.mxu0 0.0
    %5366 = vmatpush1.msra.mxu0 0.0
    %5367 = vmatprep.subr.mxu0 0.0
    %5368 = vmatpush1.msra.mxu0 0.0
    %5369 = vmatprep.subr.mxu0 0.0
    %5370 = vmatpush1.msra.mxu0 0.0
    %5371 = vmatprep.subr.mxu0 0.0
    %5372 = vmatpush1.msra.mxu0 0.0
    %5373 = vmatprep.subr.mxu0 0.0
    %5374 = vmatpush1.msra.mxu0 0.0
    %5375 = vmatprep.subr.mxu0 0.0
    %5376 = vmatpush1.msra.mxu0 0.0
    %5377 = vmatprep.subr.mxu0 0.0
    %5378 = vmatpush1.msra.mxu0 0.0
    %5379 = vmatprep.subr.mxu0 0.0
    %5380 = vmatpush1.msra.mxu0 0.0
    %5381 = vmatprep.mubr.f32.mxu0 0.0
    %5382 = vmatmul.mubr.f32.gmra.mrb[0].mxu0 %v5315
    %v5383 = vpop.f32.mrb[0].mxu0
    %v5384 = vadd.f32 0.0, %v5383
    %v5385 = vpop.f32.mrb[0].mxu0
    %5386 = vdwg.mxu0
    %v5387 = vadd.f32 %v5255, %v5384
    %s5388 = scalar_lea.vmem %s5, 792
    %v5389 = vld [vmem:[%s5388] sm:$0xff]
    %v5390 = vld [vmem:[%s5388 + $0x8] sm:$0xff]
    %v5391 = vld [vmem:[%s5388 + $0x10] sm:$0xff]
    %v5392 = vld [vmem:[%s5388 + $0x18] sm:$0xff]
    %v5393 = vld [vmem:[%s5388 + $0x20] sm:$0xff]
    %v5394 = vld [vmem:[%s5388 + $0x28] sm:$0xff]
    %v5395 = vld [vmem:[%s5388 + $0x30] sm:$0xff]
    %v5396 = vld [vmem:[%s5388 + $0x38] sm:$0xff]
    %v5397 = vld [vmem:[%s5388 + $0x40] sm:$0xff]
    %v5398 = vld [vmem:[%s5388 + $0x48] sm:$0xff]
    %v5399 = vld [vmem:[%s5388 + $0x50] sm:$0xff]
    %v5400 = vlaneseq
    %v5401 = vshrl.u32 %v5400, 7
    %v5402 = vsub.s32 1, %v5401
    %v5403 = vrot.slane %v4224, %v5402
    %v5404 = vlaneseq
    %v5405 = vshrl.u32 %v5404, 7
    %v5406 = vsub.s32 1, %v5405
    %v5407 = vrot.slane %v4227, %v5406
    %v5408 = vlaneseq
    %v5409 = vshrl.u32 %v5408, 7
    %v5410 = vsub.s32 1, %v5409
    %v5411 = vrot.slane %v4230, %v5410
    %v5412 = vlaneseq
    %v5413 = vshrl.u32 %v5412, 7
    %v5414 = vsub.s32 1, %v5413
    %v5415 = vrot.slane %v4233, %v5414
    %v5416 = vlaneseq
    %v5417 = vshrl.u32 %v5416, 7
    %v5418 = vsub.s32 1, %v5417
    %v5419 = vrot.slane %v4236, %v5418
    %v5420 = vlaneseq
    %v5421 = vshrl.u32 %v5420, 7
    %v5422 = vsub.s32 1, %v5421
    %v5423 = vrot.slane %v4239, %v5422
    %v5424 = vlaneseq
    %v5425 = vshrl.u32 %v5424, 7
    %v5426 = vsub.s32 1, %v5425
    %v5427 = vrot.slane %v4242, %v5426
    %v5428 = vlaneseq
    %v5429 = vshrl.u32 %v5428, 7
    %v5430 = vsub.s32 1, %v5429
    %v5431 = vrot.slane %v4245, %v5430
    %v5432 = vsel %vm4309, %v5407, %v5403
    %v5433 = vsel %vm343, %v5411, %v5432
    %v5434 = vsel %vm4312, %v5415, %v5433
    %v5435 = vsel %vm345, %v5419, %v5434
    %v5436 = vsel %vm4315, %v5423, %v5435
    %v5437 = vsel %vm347, %v5427, %v5436
    %v5438 = vsel %vm4318, %v5431, %v5437
    %v5439 = vsel %vm4320, %v5438, 0
    %5441 = vmatprep.subr.mxu0 0.0
    %5442 = vmatpush1.msra.mxu0 %v5389
    %5443 = vmatprep.subr.mxu0 0.0
    %5444 = vmatpush1.msra.mxu0 %v5390
    %5445 = vmatprep.subr.mxu0 0.0
    %5446 = vmatpush1.msra.mxu0 %v5391
    %5447 = vmatprep.subr.mxu0 0.0
    %5448 = vmatpush1.msra.mxu0 %v5392
    %5449 = vmatprep.subr.mxu0 0.0
    %5450 = vmatpush1.msra.mxu0 %v5393
    %5451 = vmatprep.subr.mxu0 0.0
    %5452 = vmatpush1.msra.mxu0 %v5394
    %5453 = vmatprep.subr.mxu0 0.0
    %5454 = vmatpush1.msra.mxu0 %v5395
    %5455 = vmatprep.subr.mxu0 0.0
    %5456 = vmatpush1.msra.mxu0 %v5396
    %5457 = vmatprep.subr.mxu0 0.0
    %5458 = vmatpush1.msra.mxu0 %v5397
    %5459 = vmatprep.subr.mxu0 0.0
    %5460 = vmatpush1.msra.mxu0 %v5398
    %5461 = vmatprep.subr.mxu0 0.0
    %5462 = vmatpush1.msra.mxu0 %v5399
    %5463 = vmatprep.subr.mxu0 0.0
    %5464 = vmatpush1.msra.mxu0 0.0
    %5465 = vmatprep.subr.mxu0 0.0
    %5466 = vmatpush1.msra.mxu0 0.0
    %5467 = vmatprep.subr.mxu0 0.0
    %5468 = vmatpush1.msra.mxu0 0.0
    %5469 = vmatprep.subr.mxu0 0.0
    %5470 = vmatpush1.msra.mxu0 0.0
    %5471 = vmatprep.subr.mxu0 0.0
    %5472 = vmatpush1.msra.mxu0 0.0
    %5473 = vmatprep.subr.mxu0 0.0
    %5474 = vmatpush1.msra.mxu0 0.0
    %5475 = vmatprep.subr.mxu0 0.0
    %5476 = vmatpush1.msra.mxu0 0.0
    %5477 = vmatprep.subr.mxu0 0.0
    %5478 = vmatpush1.msra.mxu0 0.0
    %5479 = vmatprep.subr.mxu0 0.0
    %5480 = vmatpush1.msra.mxu0 0.0
    %5481 = vmatprep.subr.mxu0 0.0
    %5482 = vmatpush1.msra.mxu0 0.0
    %5483 = vmatprep.subr.mxu0 0.0
    %5484 = vmatpush1.msra.mxu0 0.0
    %5485 = vmatprep.subr.mxu0 0.0
    %5486 = vmatpush1.msra.mxu0 0.0
    %5487 = vmatprep.subr.mxu0 0.0
    %5488 = vmatpush1.msra.mxu0 0.0
    %5489 = vmatprep.subr.mxu0 0.0
    %5490 = vmatpush1.msra.mxu0 0.0
    %5491 = vmatprep.subr.mxu0 0.0
    %5492 = vmatpush1.msra.mxu0 0.0
    %5493 = vmatprep.subr.mxu0 0.0
    %5494 = vmatpush1.msra.mxu0 0.0
    %5495 = vmatprep.subr.mxu0 0.0
    %5496 = vmatpush1.msra.mxu0 0.0
    %5497 = vmatprep.subr.mxu0 0.0
    %5498 = vmatpush1.msra.mxu0 0.0
    %5499 = vmatprep.subr.mxu0 0.0
    %5500 = vmatpush1.msra.mxu0 0.0
    %5501 = vmatprep.subr.mxu0 0.0
    %5502 = vmatpush1.msra.mxu0 0.0
    %5503 = vmatprep.subr.mxu0 0.0
    %5504 = vmatpush1.msra.mxu0 0.0
    %5505 = vmatprep.mubr.f32.mxu0 0.0
    %5506 = vmatmul.mubr.f32.gmra.mrb[0].mxu0 %v5439
    %v5507 = vpop.f32.mrb[0].mxu0
    %v5508 = vadd.f32 0.0, %v5507
    %v5509 = vpop.f32.mrb[0].mxu0
    %5510 = vdwg.mxu0
    %v5511 = vadd.f32 %v5387, %v5508
    %s5512 = scalar_lea.vmem %s5, 880
    %v5513 = vld [vmem:[%s5512] sm:$0xff]
    %v5514 = vld [vmem:[%s5512 + $0x8] sm:$0xff]
    %v5515 = vld [vmem:[%s5512 + $0x10] sm:$0xff]
    %v5516 = vld [vmem:[%s5512 + $0x18] sm:$0xff]
    %v5517 = vld [vmem:[%s5512 + $0x20] sm:$0xff]
    %v5518 = vld [vmem:[%s5512 + $0x28] sm:$0xff]
    %v5519 = vld [vmem:[%s5512 + $0x30] sm:$0xff]
    %v5520 = vld [vmem:[%s5512 + $0x38] sm:$0xff]
    %v5521 = vld [vmem:[%s5512 + $0x40] sm:$0xff]
    %v5522 = vld [vmem:[%s5512 + $0x48] sm:$0xff]
    %v5523 = vld [vmem:[%s5512 + $0x50] sm:$0xff]
    %v5524 = vlaneseq
    %v5525 = vshrl.u32 %v5524, 7
    %v5526 = vsub.s32 2, %v5525
    %v5527 = vrot.slane %v4224, %v5526
    %v5528 = vlaneseq
    %v5529 = vshrl.u32 %v5528, 7
    %v5530 = vsub.s32 2, %v5529
    %v5531 = vrot.slane %v4227, %v5530
    %v5532 = vlaneseq
    %v5533 = vshrl.u32 %v5532, 7
    %v5534 = vsub.s32 2, %v5533
    %v5535 = vrot.slane %v4230, %v5534
    %v5536 = vlaneseq
    %v5537 = vshrl.u32 %v5536, 7
    %v5538 = vsub.s32 2, %v5537
    %v5539 = vrot.slane %v4233, %v5538
    %v5540 = vlaneseq
    %v5541 = vshrl.u32 %v5540, 7
    %v5542 = vsub.s32 2, %v5541
    %v5543 = vrot.slane %v4236, %v5542
    %v5544 = vlaneseq
    %v5545 = vshrl.u32 %v5544, 7
    %v5546 = vsub.s32 2, %v5545
    %v5547 = vrot.slane %v4239, %v5546
    %v5548 = vlaneseq
    %v5549 = vshrl.u32 %v5548, 7
    %v5550 = vsub.s32 2, %v5549
    %v5551 = vrot.slane %v4242, %v5550
    %v5552 = vlaneseq
    %v5553 = vshrl.u32 %v5552, 7
    %v5554 = vsub.s32 2, %v5553
    %v5555 = vrot.slane %v4245, %v5554
    %v5556 = vsel %vm4309, %v5531, %v5527
    %v5557 = vsel %vm343, %v5535, %v5556
    %v5558 = vsel %vm4312, %v5539, %v5557
    %v5559 = vsel %vm345, %v5543, %v5558
    %v5560 = vsel %vm4315, %v5547, %v5559
    %v5561 = vsel %vm347, %v5551, %v5560
    %v5562 = vsel %vm4318, %v5555, %v5561
    %v5563 = vsel %vm4320, %v5562, 0
    %5565 = vmatprep.subr.mxu0 0.0
    %5566 = vmatpush1.msra.mxu0 %v5513
    %5567 = vmatprep.subr.mxu0 0.0
    %5568 = vmatpush1.msra.mxu0 %v5514
    %5569 = vmatprep.subr.mxu0 0.0
    %5570 = vmatpush1.msra.mxu0 %v5515
    %5571 = vmatprep.subr.mxu0 0.0
    %5572 = vmatpush1.msra.mxu0 %v5516
    %5573 = vmatprep.subr.mxu0 0.0
    %5574 = vmatpush1.msra.mxu0 %v5517
    %5575 = vmatprep.subr.mxu0 0.0
    %5576 = vmatpush1.msra.mxu0 %v5518
    %5577 = vmatprep.subr.mxu0 0.0
    %5578 = vmatpush1.msra.mxu0 %v5519
    %5579 = vmatprep.subr.mxu0 0.0
    %5580 = vmatpush1.msra.mxu0 %v5520
    %5581 = vmatprep.subr.mxu0 0.0
    %5582 = vmatpush1.msra.mxu0 %v5521
    %5583 = vmatprep.subr.mxu0 0.0
    %5584 = vmatpush1.msra.mxu0 %v5522
    %5585 = vmatprep.subr.mxu0 0.0
    %5586 = vmatpush1.msra.mxu0 %v5523
    %5587 = vmatprep.subr.mxu0 0.0
    %5588 = vmatpush1.msra.mxu0 0.0
    %5589 = vmatprep.subr.mxu0 0.0
    %5590 = vmatpush1.msra.mxu0 0.0
    %5591 = vmatprep.subr.mxu0 0.0
    %5592 = vmatpush1.msra.mxu0 0.0
    %5593 = vmatprep.subr.mxu0 0.0
    %5594 = vmatpush1.msra.mxu0 0.0
    %5595 = vmatprep.subr.mxu0 0.0
    %5596 = vmatpush1.msra.mxu0 0.0
    %5597 = vmatprep.subr.mxu0 0.0
    %5598 = vmatpush1.msra.mxu0 0.0
    %5599 = vmatprep.subr.mxu0 0.0
    %5600 = vmatpush1.msra.mxu0 0.0
    %5601 = vmatprep.subr.mxu0 0.0
    %5602 = vmatpush1.msra.mxu0 0.0
    %5603 = vmatprep.subr.mxu0 0.0
    %5604 = vmatpush1.msra.mxu0 0.0
    %5605 = vmatprep.subr.mxu0 0.0
    %5606 = vmatpush1.msra.mxu0 0.0
    %5607 = vmatprep.subr.mxu0 0.0
    %5608 = vmatpush1.msra.mxu0 0.0
    %5609 = vmatprep.subr.mxu0 0.0
    %5610 = vmatpush1.msra.mxu0 0.0
    %5611 = vmatprep.subr.mxu0 0.0
    %5612 = vmatpush1.msra.mxu0 0.0
    %5613 = vmatprep.subr.mxu0 0.0
    %5614 = vmatpush1.msra.mxu0 0.0
    %5615 = vmatprep.subr.mxu0 0.0
    %5616 = vmatpush1.msra.mxu0 0.0
    %5617 = vmatprep.subr.mxu0 0.0
    %5618 = vmatpush1.msra.mxu0 0.0
    %5619 = vmatprep.subr.mxu0 0.0
    %5620 = vmatpush1.msra.mxu0 0.0
    %5621 = vmatprep.subr.mxu0 0.0
    %5622 = vmatpush1.msra.mxu0 0.0
    %5623 = vmatprep.subr.mxu0 0.0
    %5624 = vmatpush1.msra.mxu0 0.0
    %5625 = vmatprep.subr.mxu0 0.0
    %5626 = vmatpush1.msra.mxu0 0.0
    %5627 = vmatprep.subr.mxu0 0.0
    %5628 = vmatpush1.msra.mxu0 0.0
    %5629 = vmatprep.mubr.f32.mxu0 0.0
    %5630 = vmatmul.mubr.f32.gmra.mrb[0].mxu0 %v5563
    %v5631 = vpop.f32.mrb[0].mxu0
    %v5632 = vadd.f32 0.0, %v5631
    %v5633 = vpop.f32.mrb[0].mxu0
    %5634 = vdwg.mxu0
    %v5635 = vadd.f32 %v5511, %v5632
    %v5636 = vld [vmem:[%s6] sm:$0x1]
    %v5638 = vlaneseq
    %v5639 = vshrl.u32 %v5638, 7
    %v5640 = vsub.s32 0, %v5639
    %v5641 = vrot.slane %v5636, %v5640
    %v5643 = vadd.f32 %v5635, %v5641
    %v5644 = vld [vmem:[%s7] sm:$0xff]
    %v5645 = vld [vmem:[%s7 + $0x8] sm:$0xff]
    %v5646 = vld [vmem:[%s7 + $0x10] sm:$0xff]
    %v5647 = vld [vmem:[%s7 + $0x18] sm:$0xff]
    %v5648 = vld [vmem:[%s8] sm:$0x1]
    %v5650 = vlaneseq
    %v5651 = vshrl.u32 %v5650, 7
    %v5652 = vsub.s32 0, %v5651
    %v5653 = vrot.slane %v5648, %v5652
    %vm5655 = vcmask 261120
    %v5657 = vsel %vm5655, %v5643, 0
    %5659 = vmatprep.subr.mxu0 0.0
    %5660 = vmatpush1.msra.mxu0 %v5644
    %5661 = vmatprep.subr.mxu0 0.0
    %5662 = vmatpush1.msra.mxu0 %v5645
    %5663 = vmatprep.subr.mxu0 0.0
    %5664 = vmatpush1.msra.mxu0 %v5646
    %5665 = vmatprep.subr.mxu0 0.0
    %5666 = vmatpush1.msra.mxu0 %v5647
    %5667 = vmatprep.subr.mxu0 0.0
    %5668 = vmatpush1.msra.mxu0 0.0
    %5669 = vmatprep.subr.mxu0 0.0
    %5670 = vmatpush1.msra.mxu0 0.0
    %5671 = vmatprep.subr.mxu0 0.0
    %5672 = vmatpush1.msra.mxu0 0.0
    %5673 = vmatprep.subr.mxu0 0.0
    %5674 = vmatpush1.msra.mxu0 0.0
    %5675 = vmatprep.subr.mxu0 0.0
    %5676 = vmatpush1.msra.mxu0 0.0
    %5677 = vmatprep.subr.mxu0 0.0
    %5678 = vmatpush1.msra.mxu0 0.0
    %5679 = vmatprep.subr.mxu0 0.0
    %5680 = vmatpush1.msra.mxu0 0.0
    %5681 = vmatprep.subr.mxu0 0.0
    %5682 = vmatpush1.msra.mxu0 0.0
    %5683 = vmatprep.subr.mxu0 0.0
    %5684 = vmatpush1.msra.mxu0 0.0
    %5685 = vmatprep.subr.mxu0 0.0
    %5686 = vmatpush1.msra.mxu0 0.0
    %5687 = vmatprep.subr.mxu0 0.0
    %5688 = vmatpush1.msra.mxu0 0.0
    %5689 = vmatprep.subr.mxu0 0.0
    %5690 = vmatpush1.msra.mxu0 0.0
    %5691 = vmatprep.subr.mxu0 0.0
    %5692 = vmatpush1.msra.mxu0 0.0
    %5693 = vmatprep.subr.mxu0 0.0
    %5694 = vmatpush1.msra.mxu0 0.0
    %5695 = vmatprep.subr.mxu0 0.0
    %5696 = vmatpush1.msra.mxu0 0.0
    %5697 = vmatprep.subr.mxu0 0.0
    %5698 = vmatpush1.msra.mxu0 0.0
    %5699 = vmatprep.subr.mxu0 0.0
    %5700 = vmatpush1.msra.mxu0 0.0
    %5701 = vmatprep.subr.mxu0 0.0
    %5702 = vmatpush1.msra.mxu0 0.0
    %5703 = vmatprep.subr.mxu0 0.0
    %5704 = vmatpush1.msra.mxu0 0.0
    %5705 = vmatprep.subr.mxu0 0.0
    %5706 = vmatpush1.msra.mxu0 0.0
    %5707 = vmatprep.subr.mxu0 0.0
    %5708 = vmatpush1.msra.mxu0 0.0
    %5709 = vmatprep.subr.mxu0 0.0
    %5710 = vmatpush1.msra.mxu0 0.0
    %5711 = vmatprep.subr.mxu0 0.0
    %5712 = vmatpush1.msra.mxu0 0.0
    %5713 = vmatprep.subr.mxu0 0.0
    %5714 = vmatpush1.msra.mxu0 0.0
    %5715 = vmatprep.subr.mxu0 0.0
    %5716 = vmatpush1.msra.mxu0 0.0
    %5717 = vmatprep.subr.mxu0 0.0
    %5718 = vmatpush1.msra.mxu0 0.0
    %5719 = vmatprep.subr.mxu0 0.0
    %5720 = vmatpush1.msra.mxu0 0.0
    %5721 = vmatprep.subr.mxu0 0.0
    %5722 = vmatpush1.msra.mxu0 0.0
    %5723 = vmatprep.mubr.f32.mxu0 0.0
    %5724 = vmatmul.mubr.f32.gmra.mrb[0].mxu0 %v5657
    %v5725 = vpop.f32.mrb[0].mxu0
    %v5726 = vadd.f32 %v5653, %v5725
    %v5727 = vpop.f32.mrb[0].mxu0
    %5728 = vdwg.mxu0
    %vm5729 = vcmask 80896
    %v5730 = vsel %vm5729, %v5726, -inf
    %5731 = vmax.xlane.f32.xlu0 %v5730
    %v5732 = vpop.xlane.xlu0 %5731
    %v5733 = vsub.f32 %v5726, %v5732
    %v5734 = vmul.f32 %v5733, 1.442695
    %v5735 = vpow.pop %v5734
    %v5736 = vsel %vm5729, %v5735, 0.0
    %5737 = vadd.xlane.f32.xlu0 %v5736
    %v5738 = vpop.xlane.xlu0 %5737
    %v5739 = vlog2.pop %v5738
    %v5740 = vmul.f32 %v5739, 0.6931472
    %v5741 = vsub.f32 %v5733, %v5740
    %5742 = vst.msk [vmem:[#allocation2] sm:$0xff] %vm5729, %v5741
    // Predicated region
    $region38: #{tpu_custom_call.1} parent=1 // pred_check
      _
    $region39: #{tpu_custom_call.1} parent=1 // pred_check_branch
      %5744 = sbr.rel (0) target = $region41
    $region40: #{tpu_custom_call.1} parent=1 // pred_region
      %s5746 = ssub.s32 128, 128
      %5747 = vsyncadd [#allocation3], %s5746
      %s5749 = sshll.u32 [#allocation2], 4
      %s5750 = int_to_ptr.vmem [resolvable:$true] %s5749
      %5752 = dma.vmem_to_hbm [thread:$0]  %s5750, 128, %s9, [#allocation3]
    $region41: #{tpu_custom_call.1} parent=1 // pred_fallthru
      _
    // Predicated region
    $region42: #{tpu_custom_call.1} parent=1 // pred_check
      _
    $region43: #{tpu_custom_call.1} parent=1 // pred_check_branch
      %5754 = sbr.rel (0) target = $region45
    $region44: #{tpu_custom_call.1} parent=1 // pred_region
      %5755 = dma.done [#allocation3], 128
    $region45: #{tpu_custom_call.1} parent=1 // pred_fallthru
      _
    %5756 = vsyncpa [#allocation3], 1

</llo_original>
